<compile_context>
chip_gen: v5e
topology: v5e:2x2
jax: 0.10.0
libtpu: 0.0.40
codegen_flags: <defaults>
</compile_context>

<pallas_src>
import math
import functools

import jax
import jax.numpy as jnp
from jax.experimental import pallas as pl
from jax.experimental.pallas import tpu as pltpu  # noqa: F401  (kept for TPU backend import)


# ----------------------------- Pallas kernels ------------------------------


def _conv_bn_kernel(*refs, relu, has_res, has_down, eps):
    """Fused conv-as-matmul + train-mode BN (+ residual | fused downsample conv+BN) (+ReLU).

    refs: lhs (M,K) bf16, w (K,C) bf16, gamma (1,C) f32, beta (1,C) f32,
          [res (M,C) f32],
          [d_lhs (M,Kd) bf16, d_w (Kd,C) bf16, d_gamma (1,C) f32, d_beta (1,C) f32],
          out (M,C) f32.
    """
    lhs_ref, w_ref, g_ref, b_ref = refs[:4]
    i = 4
    if has_res:
        res_ref = refs[i]
        i += 1
    if has_down:
        dl_ref, dw_ref, dg_ref, db_ref = refs[i:i + 4]
        i += 4
    o_ref = refs[i]

    def bn(y, g, b):
        # Training-mode BatchNorm2d: mean / biased variance over N*H*W (axis 0).
        mean = jnp.mean(y, axis=0, keepdims=True)
        cen = y - mean
        var = jnp.mean(cen * cen, axis=0, keepdims=True)
        return cen * jax.lax.rsqrt(var + eps) * g + b

    y = jnp.dot(lhs_ref[...], w_ref[...], preferred_element_type=jnp.float32)
    out = bn(y, g_ref[...], b_ref[...])
    if has_res:
        out = out + res_ref[...]
    if has_down:
        yd = jnp.dot(dl_ref[...], dw_ref[...], preferred_element_type=jnp.float32)
        out = out + bn(yd, dg_ref[...], db_ref[...])
    if relu:
        out = jnp.maximum(out, 0.0)
    o_ref[...] = out


def _maxpool_kernel(p_ref, o_ref):
    # p_ref: (T, M, C)   o_ref: (M, C)
    o_ref[...] = jnp.max(p_ref[...], axis=0)


# ------------------------------- JAX wrappers -------------------------------


def _im2col(x, kh, kw, stride, pad, pad_value=0.0):
    """x: (N,H,W,C) -> ((N*Ho*Wo, KH*KW*C), Ho, Wo).  K is tap-major / channel-minor,
    matching w.reshape(KH*KW*Cin, Cout)."""
    n, h, w, c = x.shape
    xp = jnp.pad(x, ((0, 0), (pad, pad), (pad, pad), (0, 0)),
                 constant_values=pad_value)
    ho = (h + 2 * pad - kh) // stride + 1
    wo = (w + 2 * pad - kw) // stride + 1
    taps = []
    for i in range(kh):
        for j in range(kw):
            sl = xp[:, i:i + stride * (ho - 1) + 1:stride,
                    j:j + stride * (wo - 1) + 1:stride, :]
            taps.append(sl.reshape(n, ho * wo, c))
    pat = jnp.stack(taps, axis=2).reshape(n * ho * wo, kh * kw * c)
    return pat, ho, wo


def conv_bn(x, w, gamma, beta, *, stride, pad, relu, residual=None, down=None,
            eps=1e-5):
    """Fused Conv2d(bias=False) + train-mode BatchNorm2d (+ residual add or fused
    1x1 downsample conv+BN) (+ ReLU).  x: (N,H,W,Cin) f32, w: (KH,KW,Cin,Cout).
    Returns (N,Ho,Wo,Cout) f32."""
    kh, kw, cin, cout = w.shape
    n = x.shape[0]
    lhs, ho, wo = _im2col(x, kh, kw, stride, pad)
    m = n * ho * wo
    # TODO(synk): im2col taps are still materialized by XLA in HBM; in-kernel tap
    # extraction would remove that traffic but is unnecessary at these toy sizes.
    args = [lhs.astype(jnp.bfloat16),
            w.reshape(kh * kw * cin, cout).astype(jnp.bfloat16),
            gamma.reshape(1, cout).astype(jnp.float32),
            beta.reshape(1, cout).astype(jnp.float32)]
    has_res = residual is not None
    has_down = down is not None
    if has_res:
        args.append(residual.reshape(m, cout).astype(jnp.float32))
    if has_down:
        dx, dw, dg, db, dstride = down
        din = dx.shape[-1]
        dsub = dx[:, ::dstride, ::dstride, :]          # 1x1/stride conv = subsample
        args += [dsub.reshape(m, din).astype(jnp.bfloat16),
                 dw.reshape(din, cout).astype(jnp.bfloat16),
                 dg.reshape(1, cout).astype(jnp.float32),
                 db.reshape(1, cout).astype(jnp.float32)]
    out = pl.pallas_call(
        functools.partial(_conv_bn_kernel, relu=relu, has_res=has_res,
                          has_down=has_down, eps=eps),
        out_shape=jax.ShapeDtypeStruct((m, cout), jnp.float32),
    )(*args)
    return out.reshape(n, ho, wo, cout)


def maxpool2d(x, *, k, stride, pad):
    n, h, w, c = x.shape
    xp = jnp.pad(x, ((0, 0), (pad, pad), (pad, pad), (0, 0)),
                 constant_values=-jnp.inf)
    ho = (h + 2 * pad - k) // stride + 1
    wo = (w + 2 * pad - k) // stride + 1
    taps = []
    for i in range(k):
        for j in range(k):
            sl = xp[:, i:i + stride * (ho - 1) + 1:stride,
                    j:j + stride * (wo - 1) + 1:stride, :]
            taps.append(sl.reshape(n * ho * wo, c))
    pat = jnp.stack(taps, axis=0)                      # (k*k, N*Ho*Wo, C)
    out = pl.pallas_call(
        _maxpool_kernel,
        out_shape=jax.ShapeDtypeStruct((n * ho * wo, c), jnp.float32),
    )(pat)
    return out.reshape(n, ho, wo, c)


# ------------------------------ model assembly ------------------------------


def basic_block(x, p, *, stride):
    # conv1 -> bn1 -> relu   (one fused pallas_call)
    h = conv_bn(x, p["conv1_w"], p["bn1_g"], p["bn1_b"],
                stride=stride, pad=1, relu=True)
    # conv2 -> bn2 -> (+ identity | + downsample-conv-bn) -> relu (one fused pallas_call)
    if "down_w" in p:
        down = (x, p["down_w"], p["down_g"], p["down_b"], stride)
        return conv_bn(h, p["conv2_w"], p["bn2_g"], p["bn2_b"],
                       stride=1, pad=1, relu=True, down=down)
    return conv_bn(h, p["conv2_w"], p["bn2_g"], p["bn2_b"],
                   stride=1, pad=1, relu=True, residual=x)


def res_encoder_forward(x_nchw, params):
    # TODO(synk): train-mode BN also updates running_mean/var (stateful); that
    # bookkeeping does not affect the forward output and is omitted here.
    x = jnp.transpose(x_nchw, (0, 2, 3, 1))                    # NCHW -> NHWC
    x = conv_bn(x, params["conv1_w"], params["bn1_g"], params["bn1_b"],
                stride=2, pad=3, relu=True)                    # 7x7/2 + bn + relu fused
    x = maxpool2d(x, k=3, stride=2, pad=1)
    for bp in params["layer1"]:
        x = basic_block(x, bp, stride=1)
    for i, bp in enumerate(params["layer2"]):
        x = basic_block(x, bp, stride=2 if i == 0 else 1)
    return jnp.transpose(x, (0, 3, 1, 2))                      # NHWC -> NCHW


# ------------------------------ parameter init ------------------------------


def _kaiming(key, kh, kw, cin, cout):
    # kaiming_normal_(mode='fan_out', nonlinearity='relu'): std = sqrt(2 / (Cout*KH*KW))
    std = math.sqrt(2.0 / (cout * kh * kw))
    return std * jax.random.normal(key, (kh, kw, cin, cout), jnp.float32)


def make_params(key, enc_layers=(2, 2)):
    keys = iter(jax.random.split(key, 64))
    params = {
        "conv1_w": _kaiming(next(keys), 7, 7, 3, 64),
        "bn1_g": jnp.ones((64,), jnp.float32),
        "bn1_b": jnp.zeros((64,), jnp.float32),
    }
    inplanes = 64

    def make_layer(planes, blocks, stride):
        nonlocal inplanes
        layer = []
        for i in range(blocks):
            s = stride if i == 0 else 1
            bp = {
                "conv1_w": _kaiming(next(keys), 3, 3, inplanes, planes),
                "bn1_g": jnp.ones((planes,), jnp.float32),
                "bn1_b": jnp.zeros((planes,), jnp.float32),
                "conv2_w": _kaiming(next(keys), 3, 3, planes, planes),
                "bn2_g": jnp.ones((planes,), jnp.float32),
                "bn2_b": jnp.zeros((planes,), jnp.float32),
            }
            if s != 1 or inplanes != planes:
                bp["down_w"] = _kaiming(next(keys), 1, 1, inplanes, planes)
                bp["down_g"] = jnp.ones((planes,), jnp.float32)
                bp["down_b"] = jnp.zeros((planes,), jnp.float32)
            inplanes = planes
            layer.append(bp)
        return layer

    params["layer1"] = make_layer(64, enc_layers[0], 1)
    params["layer2"] = make_layer(128, enc_layers[1], 2)
    return params


# ----------------------------------- main -----------------------------------


if __name__ == "__main__":
    key = jax.random.PRNGKey(0)
    pkey, xkey = jax.random.split(key)
    params = make_params(pkey, enc_layers=(2, 2))

    # Input like the PyTorch module: NCHW, 3 channels.
    x = jax.random.normal(xkey, (2, 3, 16, 16), jnp.float32)

    out = jax.jit(res_encoder_forward)(x, params)
    out = jax.block_until_ready(out)

    # 16 -> conv1/2 -> 8 -> maxpool/2 -> 4 -> layer2/2 -> 2 ; channels 128.
    assert out.shape == (2, 128, 2, 2), out.shape
    assert bool(jnp.all(jnp.isfinite(out)))
    print("KERNEL_OK")
</pallas_src>

<mosaic_0001>
module attributes {stable_mosaic.version = 11 : i64} {
  func.func @_conv_bn_kernel(%arg0: memref<128x147xbf16, #tpu.memory_space<vmem>>, %arg1: memref<147x64xbf16, #tpu.memory_space<vmem>>, %arg2: memref<1x64xf32, #tpu.memory_space<vmem>>, %arg3: memref<1x64xf32, #tpu.memory_space<vmem>>, %arg4: memref<128x64xf32, #tpu.memory_space<vmem>>) attributes {dimension_semantics = [], scalar_prefetch = 0 : i64, scratch_operands = 0 : i64, tpu.core_type = #tpu.core_type<tc>} {
    %c0 = arith.constant 0 : index
    %c0_0 = arith.constant 0 : index
    %0 = vector.load %arg0[%c0, %c0_0] : memref<128x147xbf16, #tpu.memory_space<vmem>>, vector<128x147xbf16>
    %c0_1 = arith.constant 0 : index
    %c0_2 = arith.constant 0 : index
    %1 = vector.load %arg1[%c0_1, %c0_2] : memref<147x64xbf16, #tpu.memory_space<vmem>>, vector<147x64xbf16>
    %cst = arith.constant dense<0.000000e+00> : vector<128x64xf32>
    %2 = tpu.matmul %0, %1, %cst {dimension_numbers = #tpu.dot_dimension_numbers<[1], [0], [0], [1], [0, 0, 1, 1], [], []>} : vector<128x147xbf16>, vector<147x64xbf16>, vector<128x64xf32> -> vector<128x64xf32>
    %c0_3 = arith.constant 0 : index
    %c0_4 = arith.constant 0 : index
    %3 = vector.load %arg2[%c0_3, %c0_4] : memref<1x64xf32, #tpu.memory_space<vmem>>, vector<1x64xf32>
    %c0_5 = arith.constant 0 : index
    %c0_6 = arith.constant 0 : index
    %4 = vector.load %arg3[%c0_5, %c0_6] : memref<1x64xf32, #tpu.memory_space<vmem>>, vector<1x64xf32>
    %cst_7 = arith.constant dense<0.000000e+00> : vector<64xf32>
    %5 = vector.multi_reduction <add>, %2, %cst_7 [0] : vector<128x64xf32> to vector<64xf32>
    %6 = vector.shape_cast %5 : vector<64xf32> to vector<1x64xf32>
    %cst_8 = arith.constant 1.280000e+02 : f32
    %7 = vector.broadcast %cst_8 : f32 to vector<1x64xf32>
    %8 = arith.divf %6, %7 : vector<1x64xf32>
    %9 = vector.broadcast %8 : vector<1x64xf32> to vector<128x64xf32>
    %10 = arith.subf %2, %9 : vector<128x64xf32>
    %11 = arith.mulf %10, %10 : vector<128x64xf32>
    %cst_9 = arith.constant dense<0.000000e+00> : vector<64xf32>
    %12 = vector.multi_reduction <add>, %11, %cst_9 [0] : vector<128x64xf32> to vector<64xf32>
    %13 = vector.shape_cast %12 : vector<64xf32> to vector<1x64xf32>
    %cst_10 = arith.constant 1.280000e+02 : f32
    %14 = vector.broadcast %cst_10 : f32 to vector<1x64xf32>
    %15 = arith.divf %13, %14 : vector<1x64xf32>
    %cst_11 = arith.constant 9.99999974E-6 : f32
    %16 = vector.broadcast %cst_11 : f32 to vector<1x64xf32>
    %17 = arith.addf %15, %16 : vector<1x64xf32>
    %18 = math.rsqrt %17 : vector<1x64xf32>
    %19 = vector.broadcast %18 : vector<1x64xf32> to vector<128x64xf32>
    %20 = arith.mulf %10, %19 : vector<128x64xf32>
    %21 = vector.broadcast %3 : vector<1x64xf32> to vector<128x64xf32>
    %22 = arith.mulf %20, %21 : vector<128x64xf32>
    %23 = vector.broadcast %4 : vector<1x64xf32> to vector<128x64xf32>
    %24 = arith.addf %22, %23 : vector<128x64xf32>
    %cst_12 = arith.constant 0.000000e+00 : f32
    %25 = vector.broadcast %cst_12 : f32 to vector<128x64xf32>
    %26 = arith.maximumf %24, %25 : vector<128x64xf32>
    %c0_13 = arith.constant 0 : index
    %c0_14 = arith.constant 0 : index
    %27 = vector.load %arg4[%c0_13, %c0_14] : memref<128x64xf32, #tpu.memory_space<vmem>>, vector<128x64xf32>
    tpu.vector_store %arg4[%c0_13, %c0_14], %26 {strides = array<i32>} : memref<128x64xf32, #tpu.memory_space<vmem>>, vector<128x64xf32>,
    return
  }
}

module attributes {stable_mosaic.version = 11 : i64} {
  func.func @_maxpool_kernel(%arg0: memref<9x32x64xf32, #tpu.memory_space<vmem>>, %arg1: memref<32x64xf32, #tpu.memory_space<vmem>>) attributes {dimension_semantics = [], scalar_prefetch = 0 : i64, scratch_operands = 0 : i64, tpu.core_type = #tpu.core_type<tc>} {
    %c0 = arith.constant 0 : index
    %c0_0 = arith.constant 0 : index
    %c0_1 = arith.constant 0 : index
    %0 = vector.load %arg0[%c0, %c0_0, %c0_1] : memref<9x32x64xf32, #tpu.memory_space<vmem>>, vector<9x32x64xf32>
    %cst = arith.constant dense<0xFF800000> : vector<32x64xf32>
    %1 = vector.multi_reduction <maximumf>, %0, %cst [0] : vector<9x32x64xf32> to vector<32x64xf32>
    %c0_2 = arith.constant 0 : index
    %c0_3 = arith.constant 0 : index
    %2 = vector.load %arg1[%c0_2, %c0_3] : memref<32x64xf32, #tpu.memory_space<vmem>>, vector<32x64xf32>
    tpu.vector_store %arg1[%c0_2, %c0_3], %1 {strides = array<i32>} : memref<32x64xf32, #tpu.memory_space<vmem>>, vector<32x64xf32>,
    return
  }
}

module attributes {stable_mosaic.version = 11 : i64} {
  func.func @_conv_bn_kernel(%arg0: memref<32x576xbf16, #tpu.memory_space<vmem>>, %arg1: memref<576x64xbf16, #tpu.memory_space<vmem>>, %arg2: memref<1x64xf32, #tpu.memory_space<vmem>>, %arg3: memref<1x64xf32, #tpu.memory_space<vmem>>, %arg4: memref<32x64xf32, #tpu.memory_space<vmem>>) attributes {dimension_semantics = [], scalar_prefetch = 0 : i64, scratch_operands = 0 : i64, tpu.core_type = #tpu.core_type<tc>} {
    %c0 = arith.constant 0 : index
    %c0_0 = arith.constant 0 : index
    %0 = vector.load %arg0[%c0, %c0_0] : memref<32x576xbf16, #tpu.memory_space<vmem>>, vector<32x576xbf16>
    %c0_1 = arith.constant 0 : index
    %c0_2 = arith.constant 0 : index
    %1 = vector.load %arg1[%c0_1, %c0_2] : memref<576x64xbf16, #tpu.memory_space<vmem>>, vector<576x64xbf16>
    %cst = arith.constant dense<0.000000e+00> : vector<32x64xf32>
    %2 = tpu.matmul %0, %1, %cst {dimension_numbers = #tpu.dot_dimension_numbers<[1], [0], [0], [1], [0, 0, 1, 1], [], []>} : vector<32x576xbf16>, vector<576x64xbf16>, vector<32x64xf32> -> vector<32x64xf32>
    %c0_3 = arith.constant 0 : index
    %c0_4 = arith.constant 0 : index
    %3 = vector.load %arg2[%c0_3, %c0_4] : memref<1x64xf32, #tpu.memory_space<vmem>>, vector<1x64xf32>
    %c0_5 = arith.constant 0 : index
    %c0_6 = arith.constant 0 : index
    %4 = vector.load %arg3[%c0_5, %c0_6] : memref<1x64xf32, #tpu.memory_space<vmem>>, vector<1x64xf32>
    %cst_7 = arith.constant dense<0.000000e+00> : vector<64xf32>
    %5 = vector.multi_reduction <add>, %2, %cst_7 [0] : vector<32x64xf32> to vector<64xf32>
    %6 = vector.shape_cast %5 : vector<64xf32> to vector<1x64xf32>
    %cst_8 = arith.constant 3.200000e+01 : f32
    %7 = vector.broadcast %cst_8 : f32 to vector<1x64xf32>
    %8 = arith.divf %6, %7 : vector<1x64xf32>
    %9 = vector.broadcast %8 : vector<1x64xf32> to vector<32x64xf32>
    %10 = arith.subf %2, %9 : vector<32x64xf32>
    %11 = arith.mulf %10, %10 : vector<32x64xf32>
    %cst_9 = arith.constant dense<0.000000e+00> : vector<64xf32>
    %12 = vector.multi_reduction <add>, %11, %cst_9 [0] : vector<32x64xf32> to vector<64xf32>
    %13 = vector.shape_cast %12 : vector<64xf32> to vector<1x64xf32>
    %cst_10 = arith.constant 3.200000e+01 : f32
    %14 = vector.broadcast %cst_10 : f32 to vector<1x64xf32>
    %15 = arith.divf %13, %14 : vector<1x64xf32>
    %cst_11 = arith.constant 9.99999974E-6 : f32
    %16 = vector.broadcast %cst_11 : f32 to vector<1x64xf32>
    %17 = arith.addf %15, %16 : vector<1x64xf32>
    %18 = math.rsqrt %17 : vector<1x64xf32>
    %19 = vector.broadcast %18 : vector<1x64xf32> to vector<32x64xf32>
    %20 = arith.mulf %10, %19 : vector<32x64xf32>
    %21 = vector.broadcast %3 : vector<1x64xf32> to vector<32x64xf32>
    %22 = arith.mulf %20, %21 : vector<32x64xf32>
    %23 = vector.broadcast %4 : vector<1x64xf32> to vector<32x64xf32>
    %24 = arith.addf %22, %23 : vector<32x64xf32>
    %cst_12 = arith.constant 0.000000e+00 : f32
    %25 = vector.broadcast %cst_12 : f32 to vector<32x64xf32>
    %26 = arith.maximumf %24, %25 : vector<32x64xf32>
    %c0_13 = arith.constant 0 : index
    %c0_14 = arith.constant 0 : index
    %27 = vector.load %arg4[%c0_13, %c0_14] : memref<32x64xf32, #tpu.memory_space<vmem>>, vector<32x64xf32>
    tpu.vector_store %arg4[%c0_13, %c0_14], %26 {strides = array<i32>} : memref<32x64xf32, #tpu.memory_space<vmem>>, vector<32x64xf32>,
    return
  }
}

module attributes {stable_mosaic.version = 11 : i64} {
  func.func @_conv_bn_kernel(%arg0: memref<32x576xbf16, #tpu.memory_space<vmem>>, %arg1: memref<576x64xbf16, #tpu.memory_space<vmem>>, %arg2: memref<1x64xf32, #tpu.memory_space<vmem>>, %arg3: memref<1x64xf32, #tpu.memory_space<vmem>>, %arg4: memref<32x64xf32, #tpu.memory_space<vmem>>, %arg5: memref<32x64xf32, #tpu.memory_space<vmem>>) attributes {dimension_semantics = [], scalar_prefetch = 0 : i64, scratch_operands = 0 : i64, tpu.core_type = #tpu.core_type<tc>} {
    %c0 = arith.constant 0 : index
    %c0_0 = arith.constant 0 : index
    %0 = vector.load %arg0[%c0, %c0_0] : memref<32x576xbf16, #tpu.memory_space<vmem>>, vector<32x576xbf16>
    %c0_1 = arith.constant 0 : index
    %c0_2 = arith.constant 0 : index
    %1 = vector.load %arg1[%c0_1, %c0_2] : memref<576x64xbf16, #tpu.memory_space<vmem>>, vector<576x64xbf16>
    %cst = arith.constant dense<0.000000e+00> : vector<32x64xf32>
    %2 = tpu.matmul %0, %1, %cst {dimension_numbers = #tpu.dot_dimension_numbers<[1], [0], [0], [1], [0, 0, 1, 1], [], []>} : vector<32x576xbf16>, vector<576x64xbf16>, vector<32x64xf32> -> vector<32x64xf32>
    %c0_3 = arith.constant 0 : index
    %c0_4 = arith.constant 0 : index
    %3 = vector.load %arg2[%c0_3, %c0_4] : memref<1x64xf32, #tpu.memory_space<vmem>>, vector<1x64xf32>
    %c0_5 = arith.constant 0 : index
    %c0_6 = arith.constant 0 : index
    %4 = vector.load %arg3[%c0_5, %c0_6] : memref<1x64xf32, #tpu.memory_space<vmem>>, vector<1x64xf32>
    %cst_7 = arith.constant dense<0.000000e+00> : vector<64xf32>
    %5 = vector.multi_reduction <add>, %2, %cst_7 [0] : vector<32x64xf32> to vector<64xf32>
    %6 = vector.shape_cast %5 : vector<64xf32> to vector<1x64xf32>
    %cst_8 = arith.constant 3.200000e+01 : f32
    %7 = vector.broadcast %cst_8 : f32 to vector<1x64xf32>
    %8 = arith.divf %6, %7 : vector<1x64xf32>
    %9 = vector.broadcast %8 : vector<1x64xf32> to vector<32x64xf32>
    %10 = arith.subf %2, %9 : vector<32x64xf32>
    %11 = arith.mulf %10, %10 : vector<32x64xf32>
    %cst_9 = arith.constant dense<0.000000e+00> : vector<64xf32>
    %12 = vector.multi_reduction <add>, %11, %cst_9 [0] : vector<32x64xf32> to vector<64xf32>
    %13 = vector.shape_cast %12 : vector<64xf32> to vector<1x64xf32>
    %cst_10 = arith.constant 3.200000e+01 : f32
    %14 = vector.broadcast %cst_10 : f32 to vector<1x64xf32>
    %15 = arith.divf %13, %14 : vector<1x64xf32>
    %cst_11 = arith.constant 9.99999974E-6 : f32
    %16 = vector.broadcast %cst_11 : f32 to vector<1x64xf32>
    %17 = arith.addf %15, %16 : vector<1x64xf32>
    %18 = math.rsqrt %17 : vector<1x64xf32>
    %19 = vector.broadcast %18 : vector<1x64xf32> to vector<32x64xf32>
    %20 = arith.mulf %10, %19 : vector<32x64xf32>
    %21 = vector.broadcast %3 : vector<1x64xf32> to vector<32x64xf32>
    %22 = arith.mulf %20, %21 : vector<32x64xf32>
    %23 = vector.broadcast %4 : vector<1x64xf32> to vector<32x64xf32>
    %24 = arith.addf %22, %23 : vector<32x64xf32>
    %c0_12 = arith.constant 0 : index
    %c0_13 = arith.constant 0 : index
    %25 = vector.load %arg4[%c0_12, %c0_13] : memref<32x64xf32, #tpu.memory_space<vmem>>, vector<32x64xf32>
    %26 = arith.addf %24, %25 : vector<32x64xf32>
    %cst_14 = arith.constant 0.000000e+00 : f32
    %27 = vector.broadcast %cst_14 : f32 to vector<32x64xf32>
    %28 = arith.maximumf %26, %27 : vector<32x64xf32>
    %c0_15 = arith.constant 0 : index
    %c0_16 = arith.constant 0 : index
    %29 = vector.load %arg5[%c0_15, %c0_16] : memref<32x64xf32, #tpu.memory_space<vmem>>, vector<32x64xf32>
    tpu.vector_store %arg5[%c0_15, %c0_16], %28 {strides = array<i32>} : memref<32x64xf32, #tpu.memory_space<vmem>>, vector<32x64xf32>,
    return
  }
}

module attributes {stable_mosaic.version = 11 : i64} {
  func.func @_conv_bn_kernel(%arg0: memref<8x576xbf16, #tpu.memory_space<vmem>>, %arg1: memref<576x128xbf16, #tpu.memory_space<vmem>>, %arg2: memref<1x128xf32, #tpu.memory_space<vmem>>, %arg3: memref<1x128xf32, #tpu.memory_space<vmem>>, %arg4: memref<8x128xf32, #tpu.memory_space<vmem>>) attributes {dimension_semantics = [], scalar_prefetch = 0 : i64, scratch_operands = 0 : i64, tpu.core_type = #tpu.core_type<tc>} {
    %c0 = arith.constant 0 : index
    %c0_0 = arith.constant 0 : index
    %0 = vector.load %arg0[%c0, %c0_0] : memref<8x576xbf16, #tpu.memory_space<vmem>>, vector<8x576xbf16>
    %c0_1 = arith.constant 0 : index
    %c0_2 = arith.constant 0 : index
    %1 = vector.load %arg1[%c0_1, %c0_2] : memref<576x128xbf16, #tpu.memory_space<vmem>>, vector<576x128xbf16>
    %cst = arith.constant dense<0.000000e+00> : vector<8x128xf32>
    %2 = tpu.matmul %0, %1, %cst {dimension_numbers = #tpu.dot_dimension_numbers<[1], [0], [0], [1], [0, 0, 1, 1], [], []>} : vector<8x576xbf16>, vector<576x128xbf16>, vector<8x128xf32> -> vector<8x128xf32>
    %c0_3 = arith.constant 0 : index
    %c0_4 = arith.constant 0 : index
    %3 = vector.load %arg2[%c0_3, %c0_4] : memref<1x128xf32, #tpu.memory_space<vmem>>, vector<1x128xf32>
    %c0_5 = arith.constant 0 : index
    %c0_6 = arith.constant 0 : index
    %4 = vector.load %arg3[%c0_5, %c0_6] : memref<1x128xf32, #tpu.memory_space<vmem>>, vector<1x128xf32>
    %cst_7 = arith.constant dense<0.000000e+00> : vector<128xf32>
    %5 = vector.multi_reduction <add>, %2, %cst_7 [0] : vector<8x128xf32> to vector<128xf32>
    %6 = vector.shape_cast %5 : vector<128xf32> to vector<1x128xf32>
    %cst_8 = arith.constant 8.000000e+00 : f32
    %7 = vector.broadcast %cst_8 : f32 to vector<1x128xf32>
    %8 = arith.divf %6, %7 : vector<1x128xf32>
    %9 = vector.broadcast %8 : vector<1x128xf32> to vector<8x128xf32>
    %10 = arith.subf %2, %9 : vector<8x128xf32>
    %11 = arith.mulf %10, %10 : vector<8x128xf32>
    %cst_9 = arith.constant dense<0.000000e+00> : vector<128xf32>
    %12 = vector.multi_reduction <add>, %11, %cst_9 [0] : vector<8x128xf32> to vector<128xf32>
    %13 = vector.shape_cast %12 : vector<128xf32> to vector<1x128xf32>
    %cst_10 = arith.constant 8.000000e+00 : f32
    %14 = vector.broadcast %cst_10 : f32 to vector<1x128xf32>
    %15 = arith.divf %13, %14 : vector<1x128xf32>
    %cst_11 = arith.constant 9.99999974E-6 : f32
    %16 = vector.broadcast %cst_11 : f32 to vector<1x128xf32>
    %17 = arith.addf %15, %16 : vector<1x128xf32>
    %18 = math.rsqrt %17 : vector<1x128xf32>
    %19 = vector.broadcast %18 : vector<1x128xf32> to vector<8x128xf32>
    %20 = arith.mulf %10, %19 : vector<8x128xf32>
    %21 = vector.broadcast %3 : vector<1x128xf32> to vector<8x128xf32>
    %22 = arith.mulf %20, %21 : vector<8x128xf32>
    %23 = vector.broadcast %4 : vector<1x128xf32> to vector<8x128xf32>
    %24 = arith.addf %22, %23 : vector<8x128xf32>
    %cst_12 = arith.constant 0.000000e+00 : f32
    %25 = vector.broadcast %cst_12 : f32 to vector<8x128xf32>
    %26 = arith.maximumf %24, %25 : vector<8x128xf32>
    %c0_13 = arith.constant 0 : index
    %c0_14 = arith.constant 0 : index
    %27 = vector.load %arg4[%c0_13, %c0_14] : memref<8x128xf32, #tpu.memory_space<vmem>>, vector<8x128xf32>
    tpu.vector_store %arg4[%c0_13, %c0_14], %26 {strides = array<i32>} : memref<8x128xf32, #tpu.memory_space<vmem>>, vector<8x128xf32>,
    return
  }
}

module attributes {stable_mosaic.version = 11 : i64} {
  func.func @_conv_bn_kernel(%arg0: memref<8x1152xbf16, #tpu.memory_space<vmem>>, %arg1: memref<1152x128xbf16, #tpu.memory_space<vmem>>, %arg2: memref<1x128xf32, #tpu.memory_space<vmem>>, %arg3: memref<1x128xf32, #tpu.memory_space<vmem>>, %arg4: memref<8x128xf32, #tpu.memory_space<vmem>>) attributes {dimension_semantics = [], scalar_prefetch = 0 : i64, scratch_operands = 0 : i64, tpu.core_type = #tpu.core_type<tc>} {
    %c0 = arith.constant 0 : index
    %c0_0 = arith.constant 0 : index
    %0 = vector.load %arg0[%c0, %c0_0] : memref<8x1152xbf16, #tpu.memory_space<vmem>>, vector<8x1152xbf16>
    %c0_1 = arith.constant 0 : index
    %c0_2 = arith.constant 0 : index
    %1 = vector.load %arg1[%c0_1, %c0_2] : memref<1152x128xbf16, #tpu.memory_space<vmem>>, vector<1152x128xbf16>
    %cst = arith.constant dense<0.000000e+00> : vector<8x128xf32>
    %2 = tpu.matmul %0, %1, %cst {dimension_numbers = #tpu.dot_dimension_numbers<[1], [0], [0], [1], [0, 0, 1, 1], [], []>} : vector<8x1152xbf16>, vector<1152x128xbf16>, vector<8x128xf32> -> vector<8x128xf32>
    %c0_3 = arith.constant 0 : index
    %c0_4 = arith.constant 0 : index
    %3 = vector.load %arg2[%c0_3, %c0_4] : memref<1x128xf32, #tpu.memory_space<vmem>>, vector<1x128xf32>
    %c0_5 = arith.constant 0 : index
    %c0_6 = arith.constant 0 : index
    %4 = vector.load %arg3[%c0_5, %c0_6] : memref<1x128xf32, #tpu.memory_space<vmem>>, vector<1x128xf32>
    %cst_7 = arith.constant dense<0.000000e+00> : vector<128xf32>
    %5 = vector.multi_reduction <add>, %2, %cst_7 [0] : vector<8x128xf32> to vector<128xf32>
    %6 = vector.shape_cast %5 : vector<128xf32> to vector<1x128xf32>
    %cst_8 = arith.constant 8.000000e+00 : f32
    %7 = vector.broadcast %cst_8 : f32 to vector<1x128xf32>
    %8 = arith.divf %6, %7 : vector<1x128xf32>
    %9 = vector.broadcast %8 : vector<1x128xf32> to vector<8x128xf32>
    %10 = arith.subf %2, %9 : vector<8x128xf32>
    %11 = arith.mulf %10, %10 : vector<8x128xf32>
    %cst_9 = arith.constant dense<0.000000e+00> : vector<128xf32>
    %12 = vector.multi_reduction <add>, %11, %cst_9 [0] : vector<8x128xf32> to vector<128xf32>
    %13 = vector.shape_cast %12 : vector<128xf32> to vector<1x128xf32>
    %cst_10 = arith.constant 8.000000e+00 : f32
    %14 = vector.broadcast %cst_10 : f32 to vector<1x128xf32>
    %15 = arith.divf %13, %14 : vector<1x128xf32>
    %cst_11 = arith.constant 9.99999974E-6 : f32
    %16 = vector.broadcast %cst_11 : f32 to vector<1x128xf32>
    %17 = arith.addf %15, %16 : vector<1x128xf32>
    %18 = math.rsqrt %17 : vector<1x128xf32>
    %19 = vector.broadcast %18 : vector<1x128xf32> to vector<8x128xf32>
    %20 = arith.mulf %10, %19 : vector<8x128xf32>
    %21 = vector.broadcast %3 : vector<1x128xf32> to vector<8x128xf32>
    %22 = arith.mulf %20, %21 : vector<8x128xf32>
    %23 = vector.broadcast %4 : vector<1x128xf32> to vector<8x128xf32>
    %24 = arith.addf %22, %23 : vector<8x128xf32>
    %cst_12 = arith.constant 0.000000e+00 : f32
    %25 = vector.broadcast %cst_12 : f32 to vector<8x128xf32>
    %26 = arith.maximumf %24, %25 : vector<8x128xf32>
    %c0_13 = arith.constant 0 : index
    %c0_14 = arith.constant 0 : index
    %27 = vector.load %arg4[%c0_13, %c0_14] : memref<8x128xf32, #tpu.memory_space<vmem>>, vector<8x128xf32>
    tpu.vector_store %arg4[%c0_13, %c0_14], %26 {strides = array<i32>} : memref<8x128xf32, #tpu.memory_space<vmem>>, vector<8x128xf32>,
    return
  }
}

module attributes {stable_mosaic.version = 11 : i64} {
  func.func @_conv_bn_kernel(%arg0: memref<8x1152xbf16, #tpu.memory_space<vmem>>, %arg1: memref<1152x128xbf16, #tpu.memory_space<vmem>>, %arg2: memref<1x128xf32, #tpu.memory_space<vmem>>, %arg3: memref<1x128xf32, #tpu.memory_space<vmem>>, %arg4: memref<8x64xbf16, #tpu.memory_space<vmem>>, %arg5: memref<64x128xbf16, #tpu.memory_space<vmem>>, %arg6: memref<1x128xf32, #tpu.memory_space<vmem>>, %arg7: memref<1x128xf32, #tpu.memory_space<vmem>>, %arg8: memref<8x128xf32, #tpu.memory_space<vmem>>) attributes {dimension_semantics = [], scalar_prefetch = 0 : i64, scratch_operands = 0 : i64, tpu.core_type = #tpu.core_type<tc>} {
    %c0 = arith.constant 0 : index
    %c0_0 = arith.constant 0 : index
    %0 = vector.load %arg0[%c0, %c0_0] : memref<8x1152xbf16, #tpu.memory_space<vmem>>, vector<8x1152xbf16>
    %c0_1 = arith.constant 0 : index
    %c0_2 = arith.constant 0 : index
    %1 = vector.load %arg1[%c0_1, %c0_2] : memref<1152x128xbf16, #tpu.memory_space<vmem>>, vector<1152x128xbf16>
    %cst = arith.constant dense<0.000000e+00> : vector<8x128xf32>
    %2 = tpu.matmul %0, %1, %cst {dimension_numbers = #tpu.dot_dimension_numbers<[1], [0], [0], [1], [0, 0, 1, 1], [], []>} : vector<8x1152xbf16>, vector<1152x128xbf16>, vector<8x128xf32> -> vector<8x128xf32>
    %c0_3 = arith.constant 0 : index
    %c0_4 = arith.constant 0 : index
    %3 = vector.load %arg2[%c0_3, %c0_4] : memref<1x128xf32, #tpu.memory_space<vmem>>, vector<1x128xf32>
    %c0_5 = arith.constant 0 : index
    %c0_6 = arith.constant 0 : index
    %4 = vector.load %arg3[%c0_5, %c0_6] : memref<1x128xf32, #tpu.memory_space<vmem>>, vector<1x128xf32>
    %cst_7 = arith.constant dense<0.000000e+00> : vector<128xf32>
    %5 = vector.multi_reduction <add>, %2, %cst_7 [0] : vector<8x128xf32> to vector<128xf32>
    %6 = vector.shape_cast %5 : vector<128xf32> to vector<1x128xf32>
    %cst_8 = arith.constant 8.000000e+00 : f32
    %7 = vector.broadcast %cst_8 : f32 to vector<1x128xf32>
    %8 = arith.divf %6, %7 : vector<1x128xf32>
    %9 = vector.broadcast %8 : vector<1x128xf32> to vector<8x128xf32>
    %10 = arith.subf %2, %9 : vector<8x128xf32>
    %11 = arith.mulf %10, %10 : vector<8x128xf32>
    %cst_9 = arith.constant dense<0.000000e+00> : vector<128xf32>
    %12 = vector.multi_reduction <add>, %11, %cst_9 [0] : vector<8x128xf32> to vector<128xf32>
    %13 = vector.shape_cast %12 : vector<128xf32> to vector<1x128xf32>
    %cst_10 = arith.constant 8.000000e+00 : f32
    %14 = vector.broadcast %cst_10 : f32 to vector<1x128xf32>
    %15 = arith.divf %13, %14 : vector<1x128xf32>
    %cst_11 = arith.constant 9.99999974E-6 : f32
    %16 = vector.broadcast %cst_11 : f32 to vector<1x128xf32>
    %17 = arith.addf %15, %16 : vector<1x128xf32>
    %18 = math.rsqrt %17 : vector<1x128xf32>
    %19 = vector.broadcast %18 : vector<1x128xf32> to vector<8x128xf32>
    %20 = arith.mulf %10, %19 : vector<8x128xf32>
    %21 = vector.broadcast %3 : vector<1x128xf32> to vector<8x128xf32>
    %22 = arith.mulf %20, %21 : vector<8x128xf32>
    %23 = vector.broadcast %4 : vector<1x128xf32> to vector<8x128xf32>
    %24 = arith.addf %22, %23 : vector<8x128xf32>
    %c0_12 = arith.constant 0 : index
    %c0_13 = arith.constant 0 : index
    %25 = vector.load %arg4[%c0_12, %c0_13] : memref<8x64xbf16, #tpu.memory_space<vmem>>, vector<8x64xbf16>
    %c0_14 = arith.constant 0 : index
    %c0_15 = arith.constant 0 : index
    %26 = vector.load %arg5[%c0_14, %c0_15] : memref<64x128xbf16, #tpu.memory_space<vmem>>, vector<64x128xbf16>
    %cst_16 = arith.constant dense<0.000000e+00> : vector<8x128xf32>
    %27 = tpu.matmul %25, %26, %cst_16 {dimension_numbers = #tpu.dot_dimension_numbers<[1], [0], [0], [1], [0, 0, 1, 1], [], []>} : vector<8x64xbf16>, vector<64x128xbf16>, vector<8x128xf32> -> vector<8x128xf32>
    %c0_17 = arith.constant 0 : index
    %c0_18 = arith.constant 0 : index
    %28 = vector.load %arg6[%c0_17, %c0_18] : memref<1x128xf32, #tpu.memory_space<vmem>>, vector<1x128xf32>
    %c0_19 = arith.constant 0 : index
    %c0_20 = arith.constant 0 : index
    %29 = vector.load %arg7[%c0_19, %c0_20] : memref<1x128xf32, #tpu.memory_space<vmem>>, vector<1x128xf32>
    %cst_21 = arith.constant dense<0.000000e+00> : vector<128xf32>
    %30 = vector.multi_reduction <add>, %27, %cst_21 [0] : vector<8x128xf32> to vector<128xf32>
    %31 = vector.shape_cast %30 : vector<128xf32> to vector<1x128xf32>
    %cst_22 = arith.constant 8.000000e+00 : f32
    %32 = vector.broadcast %cst_22 : f32 to vector<1x128xf32>
    %33 = arith.divf %31, %32 : vector<1x128xf32>
    %34 = vector.broadcast %33 : vector<1x128xf32> to vector<8x128xf32>
    %35 = arith.subf %27, %34 : vector<8x128xf32>
    %36 = arith.mulf %35, %35 : vector<8x128xf32>
    %cst_23 = arith.constant dense<0.000000e+00> : vector<128xf32>
    %37 = vector.multi_reduction <add>, %36, %cst_23 [0] : vector<8x128xf32> to vector<128xf32>
    %38 = vector.shape_cast %37 : vector<128xf32> to vector<1x128xf32>
    %cst_24 = arith.constant 8.000000e+00 : f32
    %39 = vector.broadcast %cst_24 : f32 to vector<1x128xf32>
    %40 = arith.divf %38, %39 : vector<1x128xf32>
    %cst_25 = arith.constant 9.99999974E-6 : f32
    %41 = vector.broadcast %cst_25 : f32 to vector<1x128xf32>
    %42 = arith.addf %40, %41 : vector<1x128xf32>
    %43 = math.rsqrt %42 : vector<1x128xf32>
    %44 = vector.broadcast %43 : vector<1x128xf32> to vector<8x128xf32>
    %45 = arith.mulf %35, %44 : vector<8x128xf32>
    %46 = vector.broadcast %28 : vector<1x128xf32> to vector<8x128xf32>
    %47 = arith.mulf %45, %46 : vector<8x128xf32>
    %48 = vector.broadcast %29 : vector<1x128xf32> to vector<8x128xf32>
    %49 = arith.addf %47, %48 : vector<8x128xf32>
    %50 = arith.addf %24, %49 : vector<8x128xf32>
    %cst_26 = arith.constant 0.000000e+00 : f32
    %51 = vector.broadcast %cst_26 : f32 to vector<8x128xf32>
    %52 = arith.maximumf %50, %51 : vector<8x128xf32>
    %c0_27 = arith.constant 0 : index
    %c0_28 = arith.constant 0 : index
    %53 = vector.load %arg8[%c0_27, %c0_28] : memref<8x128xf32, #tpu.memory_space<vmem>>, vector<8x128xf32>
    tpu.vector_store %arg8[%c0_27, %c0_28], %52 {strides = array<i32>} : memref<8x128xf32, #tpu.memory_space<vmem>>, vector<8x128xf32>,
    return
  }
}

module attributes {stable_mosaic.version = 11 : i64} {
  func.func @_conv_bn_kernel(%arg0: memref<8x1152xbf16, #tpu.memory_space<vmem>>, %arg1: memref<1152x128xbf16, #tpu.memory_space<vmem>>, %arg2: memref<1x128xf32, #tpu.memory_space<vmem>>, %arg3: memref<1x128xf32, #tpu.memory_space<vmem>>, %arg4: memref<8x128xf32, #tpu.memory_space<vmem>>, %arg5: memref<8x128xf32, #tpu.memory_space<vmem>>) attributes {dimension_semantics = [], scalar_prefetch = 0 : i64, scratch_operands = 0 : i64, tpu.core_type = #tpu.core_type<tc>} {
    %c0 = arith.constant 0 : index
    %c0_0 = arith.constant 0 : index
    %0 = vector.load %arg0[%c0, %c0_0] : memref<8x1152xbf16, #tpu.memory_space<vmem>>, vector<8x1152xbf16>
    %c0_1 = arith.constant 0 : index
    %c0_2 = arith.constant 0 : index
    %1 = vector.load %arg1[%c0_1, %c0_2] : memref<1152x128xbf16, #tpu.memory_space<vmem>>, vector<1152x128xbf16>
    %cst = arith.constant dense<0.000000e+00> : vector<8x128xf32>
    %2 = tpu.matmul %0, %1, %cst {dimension_numbers = #tpu.dot_dimension_numbers<[1], [0], [0], [1], [0, 0, 1, 1], [], []>} : vector<8x1152xbf16>, vector<1152x128xbf16>, vector<8x128xf32> -> vector<8x128xf32>
    %c0_3 = arith.constant 0 : index
    %c0_4 = arith.constant 0 : index
    %3 = vector.load %arg2[%c0_3, %c0_4] : memref<1x128xf32, #tpu.memory_space<vmem>>, vector<1x128xf32>
    %c0_5 = arith.constant 0 : index
    %c0_6 = arith.constant 0 : index
    %4 = vector.load %arg3[%c0_5, %c0_6] : memref<1x128xf32, #tpu.memory_space<vmem>>, vector<1x128xf32>
    %cst_7 = arith.constant dense<0.000000e+00> : vector<128xf32>
    %5 = vector.multi_reduction <add>, %2, %cst_7 [0] : vector<8x128xf32> to vector<128xf32>
    %6 = vector.shape_cast %5 : vector<128xf32> to vector<1x128xf32>
    %cst_8 = arith.constant 8.000000e+00 : f32
    %7 = vector.broadcast %cst_8 : f32 to vector<1x128xf32>
    %8 = arith.divf %6, %7 : vector<1x128xf32>
    %9 = vector.broadcast %8 : vector<1x128xf32> to vector<8x128xf32>
    %10 = arith.subf %2, %9 : vector<8x128xf32>
    %11 = arith.mulf %10, %10 : vector<8x128xf32>
    %cst_9 = arith.constant dense<0.000000e+00> : vector<128xf32>
    %12 = vector.multi_reduction <add>, %11, %cst_9 [0] : vector<8x128xf32> to vector<128xf32>
    %13 = vector.shape_cast %12 : vector<128xf32> to vector<1x128xf32>
    %cst_10 = arith.constant 8.000000e+00 : f32
    %14 = vector.broadcast %cst_10 : f32 to vector<1x128xf32>
    %15 = arith.divf %13, %14 : vector<1x128xf32>
    %cst_11 = arith.constant 9.99999974E-6 : f32
    %16 = vector.broadcast %cst_11 : f32 to vector<1x128xf32>
    %17 = arith.addf %15, %16 : vector<1x128xf32>
    %18 = math.rsqrt %17 : vector<1x128xf32>
    %19 = vector.broadcast %18 : vector<1x128xf32> to vector<8x128xf32>
    %20 = arith.mulf %10, %19 : vector<8x128xf32>
    %21 = vector.broadcast %3 : vector<1x128xf32> to vector<8x128xf32>
    %22 = arith.mulf %20, %21 : vector<8x128xf32>
    %23 = vector.broadcast %4 : vector<1x128xf32> to vector<8x128xf32>
    %24 = arith.addf %22, %23 : vector<8x128xf32>
    %c0_12 = arith.constant 0 : index
    %c0_13 = arith.constant 0 : index
    %25 = vector.load %arg4[%c0_12, %c0_13] : memref<8x128xf32, #tpu.memory_space<vmem>>, vector<8x128xf32>
    %26 = arith.addf %24, %25 : vector<8x128xf32>
    %cst_14 = arith.constant 0.000000e+00 : f32
    %27 = vector.broadcast %cst_14 : f32 to vector<8x128xf32>
    %28 = arith.maximumf %26, %27 : vector<8x128xf32>
    %c0_15 = arith.constant 0 : index
    %c0_16 = arith.constant 0 : index
    %29 = vector.load %arg5[%c0_15, %c0_16] : memref<8x128xf32, #tpu.memory_space<vmem>>, vector<8x128xf32>
    tpu.vector_store %arg5[%c0_15, %c0_16], %28 {strides = array<i32>} : memref<8x128xf32, #tpu.memory_space<vmem>>, vector<8x128xf32>,
    return
  }
}

</mosaic_0001>

<llo_original>
// kernel: res_encoder_forward.10
$region0: #{res_encoder_forward.10}
  #allocation0 [shape = 'u32[]', space=smem, size = 0x4, offset = 0x4, fixed_abs, tag = 'smem constant byte address 0x4 - core index']
  #allocation1 [shape = 'u32[72,128]{1,0:T(1,128)}', space=vmem, size = 0x9000, scoped, tag = 'internal scratch']
  %s0 = inlined_call_operand.vmem [shape: bf16[128,147], index: 0, kind: input, shape index: {}]
  %s1 = inlined_call_operand.vmem [shape: bf16[147,64], index: 1, kind: input, shape index: {}]
  %s2 = inlined_call_operand.vmem [shape: f32[1,64], index: 2, kind: input, shape index: {}]
  %s3 = inlined_call_operand.vmem [shape: f32[1,64], index: 3, kind: input, shape index: {}]
  %s4 = inlined_call_operand.vmem [shape: f32[128,64], index: 4, kind: output, shape index: {}]
  %s5 = sld [smem:[#allocation0]]
  $region26: #{res_encoder_forward.10} parent=0
    _
  %s7 = ssub.s32 1, %s5
  %s8 = scalar_select 0, %s7, %s5
  // Predicated region
  $region2: #{res_encoder_forward.10} parent=0 // pred_check
    _
  $region3: #{res_encoder_forward.10} parent=0 // pred_check_branch
    %10 = sbr.rel (0) target = $region5
  $region4: #{res_encoder_forward.10} parent=0 // pred_region
    _
  $region5: #{res_encoder_forward.10} parent=0 // pred_fallthru
    _
  // Predicated region
  $region6: #{res_encoder_forward.10} parent=0 // pred_check
    _
  $region7: #{res_encoder_forward.10} parent=0 // pred_check_branch
    %12 = sbr.rel (0) target = $region9
  $region8: #{res_encoder_forward.10} parent=0 // pred_region
    _
  $region9: #{res_encoder_forward.10} parent=0 // pred_fallthru
    _
  // Predicated region
  $region10: #{res_encoder_forward.10} parent=0 // pred_check
    _
  $region11: #{res_encoder_forward.10} parent=0 // pred_check_branch
    %14 = sbr.rel (0) target = $region13
  $region12: #{res_encoder_forward.10} parent=0 // pred_region
    _
  $region13: #{res_encoder_forward.10} parent=0 // pred_fallthru
    _
  // Predicated region
  $region14: #{res_encoder_forward.10} parent=0 // pred_check
    _
  $region15: #{res_encoder_forward.10} parent=0 // pred_check_branch
    %16 = sbr.rel (0) target = $region17
  $region16: #{res_encoder_forward.10} parent=0 // pred_region
    _
  $region17: #{res_encoder_forward.10} parent=0 // pred_fallthru
    _
  %v18 = vld [vmem:[%s0] sm:$0xff]
  %v19 = vld [vmem:[%s0 + $0x8] sm:$0xff]
  %v20 = vld [vmem:[%s0 + $0x10] sm:$0xff]
  %v21 = vld [vmem:[%s0 + $0x18] sm:$0xff]
  %v22 = vld [vmem:[%s0 + $0x20] sm:$0xff]
  %v23 = vld [vmem:[%s0 + $0x28] sm:$0xff]
  %v24 = vld [vmem:[%s0 + $0x30] sm:$0xff]
  %v25 = vld [vmem:[%s0 + $0x38] sm:$0xff]
  %v26 = vld [vmem:[%s0 + $0x40] sm:$0xff]
  %v27 = vld [vmem:[%s0 + $0x48] sm:$0xff]
  %v28 = vld [vmem:[%s0 + $0x50] sm:$0xff]
  %v29 = vld [vmem:[%s0 + $0x58] sm:$0xff]
  %v30 = vld [vmem:[%s0 + $0x60] sm:$0xff]
  %v31 = vld [vmem:[%s0 + $0x68] sm:$0xff]
  %v32 = vld [vmem:[%s0 + $0x70] sm:$0xff]
  %v33 = vld [vmem:[%s0 + $0x78] sm:$0xff]
  %v34 = vld [vmem:[%s1] sm:$0xf]
  %v35 = vld [vmem:[%s1 + $0x4] sm:$0xf]
  %v36 = vld [vmem:[%s1 + $0x8] sm:$0xf]
  %v37 = vld [vmem:[%s1 + $0xc] sm:$0xf]
  %v38 = vld [vmem:[%s1 + $0x10] sm:$0xf]
  %v39 = vld [vmem:[%s1 + $0x14] sm:$0xf]
  %v40 = vld [vmem:[%s1 + $0x18] sm:$0xf]
  %v41 = vld [vmem:[%s1 + $0x1c] sm:$0xf]
  %v42 = vld [vmem:[%s1 + $0x20] sm:$0xf]
  %v43 = vld [vmem:[%s1 + $0x24] sm:$0xf]
  %v44 = vld [vmem:[%s1 + $0x28] sm:$0xf]
  %v45 = vld [vmem:[%s1 + $0x2c] sm:$0xf]
  %v46 = vld [vmem:[%s1 + $0x30] sm:$0xf]
  %v47 = vld [vmem:[%s1 + $0x34] sm:$0xf]
  %v48 = vld [vmem:[%s1 + $0x38] sm:$0xf]
  %v49 = vld [vmem:[%s1 + $0x3c] sm:$0xf]
  %v50 = vld [vmem:[%s1 + $0x40] sm:$0xf]
  %v51 = vld [vmem:[%s1 + $0x44] sm:$0xf]
  %v52 = vld [vmem:[%s1 + $0x48] sm:$0x3]
  %v69 = vunpack.c.l.b16 %v18
  %v70 = vunpack.c.h.b16 %v18
  %v71 = vunpack.c.l.b16 %v19
  %v72 = vunpack.c.h.b16 %v19
  %v73 = vunpack.c.l.b16 %v20
  %v74 = vunpack.c.h.b16 %v20
  %v75 = vunpack.c.l.b16 %v21
  %v76 = vunpack.c.h.b16 %v21
  %v77 = vunpack.c.l.b16 %v22
  %v78 = vunpack.c.h.b16 %v22
  %v79 = vunpack.c.l.b16 %v23
  %v80 = vunpack.c.h.b16 %v23
  %v81 = vunpack.c.l.b16 %v24
  %v82 = vunpack.c.h.b16 %v24
  %v83 = vunpack.c.l.b16 %v25
  %v84 = vunpack.c.h.b16 %v25
  %v85 = vunpack.c.l.b16 %v26
  %v86 = vunpack.c.h.b16 %v26
  %v87 = vunpack.c.l.b16 %v27
  %v88 = vunpack.c.h.b16 %v27
  %v89 = vunpack.c.l.b16 %v28
  %v90 = vunpack.c.h.b16 %v28
  %v91 = vunpack.c.l.b16 %v29
  %v92 = vunpack.c.h.b16 %v29
  %v93 = vunpack.c.l.b16 %v30
  %v94 = vunpack.c.h.b16 %v30
  %v95 = vunpack.c.l.b16 %v31
  %v96 = vunpack.c.h.b16 %v31
  %v97 = vunpack.c.l.b16 %v32
  %v98 = vunpack.c.h.b16 %v32
  %v99 = vunpack.c.l.b16 %v33
  %v100 = vunpack.c.h.b16 %v33
  %v101 = vpack.c.b16 %v71, %v69
  %v102 = vpack.c.b16 %v72, %v70
  %v103 = vpack.c.b16 %v75, %v73
  %v104 = vpack.c.b16 %v76, %v74
  %v105 = vpack.c.b16 %v79, %v77
  %v106 = vpack.c.b16 %v80, %v78
  %v107 = vpack.c.b16 %v83, %v81
  %v108 = vpack.c.b16 %v84, %v82
  %v109 = vpack.c.b16 %v87, %v85
  %v110 = vpack.c.b16 %v88, %v86
  %v111 = vpack.c.b16 %v91, %v89
  %v112 = vpack.c.b16 %v92, %v90
  %v113 = vpack.c.b16 %v95, %v93
  %v114 = vpack.c.b16 %v96, %v94
  %v115 = vpack.c.b16 %v99, %v97
  %v116 = vpack.c.b16 %v100, %v98
  %v144 = vunpack.c.l.b16 %v34
  %v145 = vunpack.c.l.b16 %v35
  %v146 = vunpack.c.l.b16 %v36
  %v147 = vunpack.c.l.b16 %v37
  %v148 = vunpack.c.l.b16 %v38
  %v149 = vunpack.c.l.b16 %v39
  %v150 = vunpack.c.l.b16 %v40
  %v151 = vunpack.c.l.b16 %v41
  %v152 = vunpack.c.l.b16 %v42
  %v153 = vunpack.c.l.b16 %v43
  %v154 = vunpack.c.l.b16 %v44
  %v155 = vunpack.c.l.b16 %v45
  %v156 = vunpack.c.l.b16 %v46
  %v157 = vunpack.c.l.b16 %v47
  %v158 = vunpack.c.l.b16 %v48
  %v159 = vunpack.c.l.b16 %v49
  %v160 = vunpack.c.l.b16 %v50
  %v161 = vunpack.c.l.b16 %v51
  %v162 = vunpack.c.l.b16 %v52
  %v163 = vpack.c.b16 %v145, %v144
  %v164 = vpack.c.b16 %v147, %v146
  %v165 = vpack.c.b16 %v149, %v148
  %v166 = vpack.c.b16 %v151, %v150
  %v167 = vpack.c.b16 %v153, %v152
  %v168 = vpack.c.b16 %v155, %v154
  %v169 = vpack.c.b16 %v157, %v156
  %v170 = vpack.c.b16 %v159, %v158
  %v171 = vpack.c.b16 %v161, %v160
  %v172 = vpack.c.b16 %v162, %v162
  %vm182 = vcmask 154624
  %v184 = vsel %vm182, %v102, 0
  %v187 = vsel %vm182, %v104, 0
  %v190 = vsel %vm182, %v106, 0
  %v193 = vsel %vm182, %v108, 0
  %v196 = vsel %vm182, %v110, 0
  %v199 = vsel %vm182, %v112, 0
  %v202 = vsel %vm182, %v114, 0
  %v205 = vsel %vm182, %v116, 0
  %vm207 = vcmask 1040384
  %vm208 = vcmask 1041408
  %v209 = vsel %vm207, 4294967295, 65535
  %v210 = vsel %vm208, %v209, 0
  %v212 = vand.u32 %v172, %v210
  %214 = vmatpush.bf16.msra.mxu0 %v170
  %215 = vmatpush.bf16.msra.mxu0 %v169
  %216 = vmatpush.bf16.msra.mxu0 %v168
  %217 = vmatpush.bf16.msra.mxu0 %v167
  %218 = vmatpush.bf16.msra.mxu0 %v166
  %219 = vmatpush.bf16.msra.mxu0 %v165
  %220 = vmatpush.bf16.msra.mxu0 %v164
  %221 = vmatpush.bf16.msra.mxu0 %v163
  %222 = vmatmul.bf16.gmra.mxu0 %v101
  %v223 = vpop.f32.mrf.mxu0
  %v224 = vadd.f32 0.0, %v223
  %v225 = vpop.f32.mrf.mxu0
  %v226 = vadd.f32 0.0, %v225
  %227 = vmatmul.bf16.gmra.mxu0 %v103
  %v228 = vpop.f32.mrf.mxu0
  %v229 = vadd.f32 0.0, %v228
  %v230 = vpop.f32.mrf.mxu0
  %v231 = vadd.f32 0.0, %v230
  %232 = vmatmul.bf16.gmra.mxu0 %v105
  %v233 = vpop.f32.mrf.mxu0
  %v234 = vadd.f32 0.0, %v233
  %v235 = vpop.f32.mrf.mxu0
  %v236 = vadd.f32 0.0, %v235
  %237 = vmatmul.bf16.gmra.mxu0 %v107
  %v238 = vpop.f32.mrf.mxu0
  %v239 = vadd.f32 0.0, %v238
  %v240 = vpop.f32.mrf.mxu0
  %v241 = vadd.f32 0.0, %v240
  %242 = vmatmul.bf16.gmra.mxu0 %v109
  %v243 = vpop.f32.mrf.mxu0
  %v244 = vadd.f32 0.0, %v243
  %v245 = vpop.f32.mrf.mxu0
  %v246 = vadd.f32 0.0, %v245
  %247 = vmatmul.bf16.gmra.mxu0 %v111
  %v248 = vpop.f32.mrf.mxu0
  %v249 = vadd.f32 0.0, %v248
  %v250 = vpop.f32.mrf.mxu0
  %v251 = vadd.f32 0.0, %v250
  %252 = vmatmul.bf16.gmra.mxu0 %v113
  %v253 = vpop.f32.mrf.mxu0
  %v254 = vadd.f32 0.0, %v253
  %v255 = vpop.f32.mrf.mxu0
  %v256 = vadd.f32 0.0, %v255
  %257 = vmatmul.bf16.gmra.mxu0 %v115
  %v258 = vpop.f32.mrf.mxu0
  %v259 = vadd.f32 0.0, %v258
  %v260 = vpop.f32.mrf.mxu0
  %v261 = vadd.f32 0.0, %v260
  %262 = vdwg.mxu0
  %263 = vmatpush.bf16.msra.mxu0 0
  %264 = vmatpush.bf16.msra.mxu0 0
  %265 = vmatpush.bf16.msra.mxu0 0
  %266 = vmatpush.bf16.msra.mxu0 0
  %267 = vmatpush.bf16.msra.mxu0 0
  %268 = vmatpush.bf16.msra.mxu0 0
  %269 = vmatpush.bf16.msra.mxu0 %v212
  %270 = vmatpush.bf16.msra.mxu0 %v171
  %271 = vmatmul.bf16.gmra.mxu0 %v184
  %v272 = vpop.f32.mrf.mxu0
  %v273 = vadd.f32 %v224, %v272
  %v274 = vpop.f32.mrf.mxu0
  %v275 = vadd.f32 %v226, %v274
  %276 = vmatmul.bf16.gmra.mxu0 %v187
  %v277 = vpop.f32.mrf.mxu0
  %v278 = vadd.f32 %v229, %v277
  %v279 = vpop.f32.mrf.mxu0
  %v280 = vadd.f32 %v231, %v279
  %281 = vmatmul.bf16.gmra.mxu0 %v190
  %v282 = vpop.f32.mrf.mxu0
  %v283 = vadd.f32 %v234, %v282
  %v284 = vpop.f32.mrf.mxu0
  %v285 = vadd.f32 %v236, %v284
  %286 = vmatmul.bf16.gmra.mxu0 %v193
  %v287 = vpop.f32.mrf.mxu0
  %v288 = vadd.f32 %v239, %v287
  %v289 = vpop.f32.mrf.mxu0
  %v290 = vadd.f32 %v241, %v289
  %291 = vmatmul.bf16.gmra.mxu0 %v196
  %v292 = vpop.f32.mrf.mxu0
  %v293 = vadd.f32 %v244, %v292
  %v294 = vpop.f32.mrf.mxu0
  %v295 = vadd.f32 %v246, %v294
  %296 = vmatmul.bf16.gmra.mxu0 %v199
  %v297 = vpop.f32.mrf.mxu0
  %v298 = vadd.f32 %v249, %v297
  %v299 = vpop.f32.mrf.mxu0
  %v300 = vadd.f32 %v251, %v299
  %301 = vmatmul.bf16.gmra.mxu0 %v202
  %v302 = vpop.f32.mrf.mxu0
  %v303 = vadd.f32 %v254, %v302
  %v304 = vpop.f32.mrf.mxu0
  %v305 = vadd.f32 %v256, %v304
  %306 = vmatmul.bf16.gmra.mxu0 %v205
  %v307 = vpop.f32.mrf.mxu0
  %v308 = vadd.f32 %v259, %v307
  %v309 = vpop.f32.mrf.mxu0
  %v310 = vadd.f32 %v261, %v309
  %311 = vdwg.mxu0
  %v312 = vld [vmem:[%s2] sm:$0x1]
  %v313 = vld [vmem:[%s3] sm:$0x1]
  %vm314 = vcmask 523264
  %v315 = vsel %vm314, %v273, 0.0
  %v316 = vsel %vm314, %v275, 0.0
  %v317 = vadd.f32 %v315, %v316
  %v318 = vsel %vm314, %v278, 0.0
  %v319 = vadd.f32 %v317, %v318
  %v320 = vsel %vm314, %v280, 0.0
  %v321 = vadd.f32 %v319, %v320
  %v322 = vsel %vm314, %v283, 0.0
  %v323 = vadd.f32 %v321, %v322
  %v324 = vsel %vm314, %v285, 0.0
  %v325 = vadd.f32 %v323, %v324
  %v326 = vsel %vm314, %v288, 0.0
  %v327 = vadd.f32 %v325, %v326
  %v328 = vsel %vm314, %v290, 0.0
  %v329 = vadd.f32 %v327, %v328
  %v330 = vsel %vm314, %v293, 0.0
  %v331 = vadd.f32 %v329, %v330
  %v332 = vsel %vm314, %v295, 0.0
  %v333 = vadd.f32 %v331, %v332
  %v334 = vsel %vm314, %v298, 0.0
  %v335 = vadd.f32 %v333, %v334
  %v336 = vsel %vm314, %v300, 0.0
  %v337 = vadd.f32 %v335, %v336
  %v338 = vsel %vm314, %v303, 0.0
  %v339 = vadd.f32 %v337, %v338
  %v340 = vsel %vm314, %v305, 0.0
  %v341 = vadd.f32 %v339, %v340
  %v342 = vsel %vm314, %v308, 0.0
  %v343 = vadd.f32 %v341, %v342
  %v344 = vsel %vm314, %v310, 0.0
  %v345 = vadd.f32 %v343, %v344
  %v346 = vrot.slane %v345, 4
  %v347 = vadd.f32 %v345, %v346
  %v348 = vrot.slane %v347, 2
  %v349 = vadd.f32 %v347, %v348
  %v350 = vrot.slane %v349, 1
  %v351 = vadd.f32 %v349, %v350
  %v352 = vrcp.pop 128.0
  %v353 = vmul.f32 128.0, %v352
  %v354 = vsub.f32 1.0, %v353
  %v355 = vmul.f32 %v352, %v354
  %v356 = vadd.f32 %v352, %v355
  %vm357 = vweird.f32 %v352
  %v358 = vsel %vm357, %v352, %v356
  %v359 = vmul.f32 %v351, %v358
  %v360 = vsub.f32 %v273, %v359
  %v361 = vsub.f32 %v275, %v359
  %v362 = vsub.f32 %v278, %v359
  %v363 = vsub.f32 %v280, %v359
  %v364 = vsub.f32 %v283, %v359
  %v365 = vsub.f32 %v285, %v359
  %v366 = vsub.f32 %v288, %v359
  %v367 = vsub.f32 %v290, %v359
  %v368 = vsub.f32 %v293, %v359
  %v369 = vsub.f32 %v295, %v359
  %v370 = vsub.f32 %v298, %v359
  %v371 = vsub.f32 %v300, %v359
  %v372 = vsub.f32 %v303, %v359
  %v373 = vsub.f32 %v305, %v359
  %v374 = vsub.f32 %v308, %v359
  %v375 = vsub.f32 %v310, %v359
  %v376 = vmul.f32 %v360, %v360
  %v377 = vmul.f32 %v361, %v361
  %v378 = vmul.f32 %v362, %v362
  %v379 = vmul.f32 %v363, %v363
  %v380 = vmul.f32 %v364, %v364
  %v381 = vmul.f32 %v365, %v365
  %v382 = vmul.f32 %v366, %v366
  %v383 = vmul.f32 %v367, %v367
  %v384 = vmul.f32 %v368, %v368
  %v385 = vmul.f32 %v369, %v369
  %v386 = vmul.f32 %v370, %v370
  %v387 = vmul.f32 %v371, %v371
  %v388 = vmul.f32 %v372, %v372
  %v389 = vmul.f32 %v373, %v373
  %v390 = vmul.f32 %v374, %v374
  %v391 = vmul.f32 %v375, %v375
  %v392 = vsel %vm314, %v376, 0.0
  %v393 = vsel %vm314, %v377, 0.0
  %v394 = vadd.f32 %v392, %v393
  %v395 = vsel %vm314, %v378, 0.0
  %v396 = vadd.f32 %v394, %v395
  %v397 = vsel %vm314, %v379, 0.0
  %v398 = vadd.f32 %v396, %v397
  %v399 = vsel %vm314, %v380, 0.0
  %v400 = vadd.f32 %v398, %v399
  %v401 = vsel %vm314, %v381, 0.0
  %v402 = vadd.f32 %v400, %v401
  %v403 = vsel %vm314, %v382, 0.0
  %v404 = vadd.f32 %v402, %v403
  %v405 = vsel %vm314, %v383, 0.0
  %v406 = vadd.f32 %v404, %v405
  %v407 = vsel %vm314, %v384, 0.0
  %v408 = vadd.f32 %v406, %v407
  %v409 = vsel %vm314, %v385, 0.0
  %v410 = vadd.f32 %v408, %v409
  %v411 = vsel %vm314, %v386, 0.0
  %v412 = vadd.f32 %v410, %v411
  %v413 = vsel %vm314, %v387, 0.0
  %v414 = vadd.f32 %v412, %v413
  %v415 = vsel %vm314, %v388, 0.0
  %v416 = vadd.f32 %v414, %v415
  %v417 = vsel %vm314, %v389, 0.0
  %v418 = vadd.f32 %v416, %v417
  %v419 = vsel %vm314, %v390, 0.0
  %v420 = vadd.f32 %v418, %v419
  %v421 = vsel %vm314, %v391, 0.0
  %v422 = vadd.f32 %v420, %v421
  %v423 = vrot.slane %v422, 4
  %v424 = vadd.f32 %v422, %v423
  %v425 = vrot.slane %v424, 2
  %v426 = vadd.f32 %v424, %v425
  %v427 = vrot.slane %v426, 1
  %v428 = vadd.f32 %v426, %v427
  %v429 = vmul.f32 %v428, %v358
  %v430 = vadd.f32 %v429, 1e-05
  %v431 = vrsqrt.pop %v430
  %v432 = vmul.f32 %v431, %v430
  %v433 = vmul.f32 %v432, %v431
  %v434 = vmul.f32 0.5, %v433
  %v435 = vsub.f32 1.5, %v434
  %v436 = vmul.f32 %v431, %v435
  %vm437 = vweird.f32 %v430
  %vm438 = vweird.f32 %v431
  %vm439 = vmor %vm437, %vm438
  %v440 = vsel %vm439, %v431, %v436
  %v441 = vmul.f32 %v360, %v440
  %v442 = vmul.f32 %v361, %v440
  %v443 = vmul.f32 %v362, %v440
  %v444 = vmul.f32 %v363, %v440
  %v445 = vmul.f32 %v364, %v440
  %v446 = vmul.f32 %v365, %v440
  %v447 = vmul.f32 %v366, %v440
  %v448 = vmul.f32 %v367, %v440
  %v449 = vmul.f32 %v368, %v440
  %v450 = vmul.f32 %v369, %v440
  %v451 = vmul.f32 %v370, %v440
  %v452 = vmul.f32 %v371, %v440
  %v453 = vmul.f32 %v372, %v440
  %v454 = vmul.f32 %v373, %v440
  %v455 = vmul.f32 %v374, %v440
  %v456 = vmul.f32 %v375, %v440
  %v458 = vperm.slane %v312, 0
  %v460 = vmul.f32 %v441, %v458
  %v461 = vmul.f32 %v442, %v458
  %v462 = vmul.f32 %v443, %v458
  %v463 = vmul.f32 %v444, %v458
  %v464 = vmul.f32 %v445, %v458
  %v465 = vmul.f32 %v446, %v458
  %v466 = vmul.f32 %v447, %v458
  %v467 = vmul.f32 %v448, %v458
  %v468 = vmul.f32 %v449, %v458
  %v469 = vmul.f32 %v450, %v458
  %v470 = vmul.f32 %v451, %v458
  %v471 = vmul.f32 %v452, %v458
  %v472 = vmul.f32 %v453, %v458
  %v473 = vmul.f32 %v454, %v458
  %v474 = vmul.f32 %v455, %v458
  %v475 = vmul.f32 %v456, %v458
  %v477 = vperm.slane %v313, 0
  %v479 = vadd.f32 %v460, %v477
  %v480 = vadd.f32 %v461, %v477
  %v481 = vadd.f32 %v462, %v477
  %v482 = vadd.f32 %v463, %v477
  %v483 = vadd.f32 %v464, %v477
  %v484 = vadd.f32 %v465, %v477
  %v485 = vadd.f32 %v466, %v477
  %v486 = vadd.f32 %v467, %v477
  %v487 = vadd.f32 %v468, %v477
  %v488 = vadd.f32 %v469, %v477
  %v489 = vadd.f32 %v470, %v477
  %v490 = vadd.f32 %v471, %v477
  %v491 = vadd.f32 %v472, %v477
  %v492 = vadd.f32 %v473, %v477
  %v493 = vadd.f32 %v474, %v477
  %v494 = vadd.f32 %v475, %v477
  %v495 = vmax.f32 %v479, 0.0
  %v496 = vmax.f32 %v480, 0.0
  %v497 = vmax.f32 %v481, 0.0
  %v498 = vmax.f32 %v482, 0.0
  %v499 = vmax.f32 %v483, 0.0
  %v500 = vmax.f32 %v484, 0.0
  %v501 = vmax.f32 %v485, 0.0
  %v502 = vmax.f32 %v486, 0.0
  %v503 = vmax.f32 %v487, 0.0
  %v504 = vmax.f32 %v488, 0.0
  %v505 = vmax.f32 %v489, 0.0
  %v506 = vmax.f32 %v490, 0.0
  %v507 = vmax.f32 %v491, 0.0
  %v508 = vmax.f32 %v492, 0.0
  %v509 = vmax.f32 %v493, 0.0
  %v510 = vmax.f32 %v494, 0.0
  %511 = vst.msk [vmem:[%s4] sm:$0xff] %vm314, %v495
  %512 = vst.msk [vmem:[%s4 + $0x8] sm:$0xff] %vm314, %v496
  %513 = vst.msk [vmem:[%s4 + $0x10] sm:$0xff] %vm314, %v497
  %514 = vst.msk [vmem:[%s4 + $0x18] sm:$0xff] %vm314, %v498
  %515 = vst.msk [vmem:[%s4 + $0x20] sm:$0xff] %vm314, %v499
  %516 = vst.msk [vmem:[%s4 + $0x28] sm:$0xff] %vm314, %v500
  %517 = vst.msk [vmem:[%s4 + $0x30] sm:$0xff] %vm314, %v501
  %518 = vst.msk [vmem:[%s4 + $0x38] sm:$0xff] %vm314, %v502
  %519 = vst.msk [vmem:[%s4 + $0x40] sm:$0xff] %vm314, %v503
  %520 = vst.msk [vmem:[%s4 + $0x48] sm:$0xff] %vm314, %v504
  %521 = vst.msk [vmem:[%s4 + $0x50] sm:$0xff] %vm314, %v505
  %522 = vst.msk [vmem:[%s4 + $0x58] sm:$0xff] %vm314, %v506
  %523 = vst.msk [vmem:[%s4 + $0x60] sm:$0xff] %vm314, %v507
  %524 = vst.msk [vmem:[%s4 + $0x68] sm:$0xff] %vm314, %v508
  %525 = vst.msk [vmem:[%s4 + $0x70] sm:$0xff] %vm314, %v509
  %526 = vst.msk [vmem:[%s4 + $0x78] sm:$0xff] %vm314, %v510
  // Predicated region
  $region18: #{res_encoder_forward.10} parent=0 // pred_check
    _
  $region19: #{res_encoder_forward.10} parent=0 // pred_check_branch
    %528 = sbr.rel (0) target = $region21
  $region20: #{res_encoder_forward.10} parent=0 // pred_region
    _
  $region21: #{res_encoder_forward.10} parent=0 // pred_fallthru
    _
  // Predicated region
  $region22: #{res_encoder_forward.10} parent=0 // pred_check
    _
  $region23: #{res_encoder_forward.10} parent=0 // pred_check_branch
    %530 = sbr.rel (0) target = $region25
  $region24: #{res_encoder_forward.10} parent=0 // pred_region
    _
  $region25: #{res_encoder_forward.10} parent=0 // pred_fallthru
    _

// kernel: res_encoder_forward.11
$region0: #{res_encoder_forward.11}
  #allocation0 [shape = 'u32[]', space=smem, size = 0x4, offset = 0x4, fixed_abs, tag = 'smem constant byte address 0x4 - core index']
  #allocation1 [shape = 'u32[72,128]{1,0:T(1,128)}', space=vmem, size = 0x9000, scoped, tag = 'internal scratch']
  %s0 = inlined_call_operand.vmem [shape: f32[9,32,64], index: 0, kind: input, shape index: {}]
  %s1 = inlined_call_operand.vmem [shape: f32[32,64], index: 1, kind: output, shape index: {}]
  %s2 = sld [smem:[#allocation0]]
  $region14: #{res_encoder_forward.11} parent=0
    _
  %s4 = ssub.s32 1, %s2
  %s5 = scalar_select 0, %s4, %s2
  // Predicated region
  $region2: #{res_encoder_forward.11} parent=0 // pred_check
    _
  $region3: #{res_encoder_forward.11} parent=0 // pred_check_branch
    %7 = sbr.rel (0) target = $region5
  $region4: #{res_encoder_forward.11} parent=0 // pred_region
    _
  $region5: #{res_encoder_forward.11} parent=0 // pred_fallthru
    _
  %v8 = vld [vmem:[%s0] sm:$0xff]
  %v9 = vld [vmem:[%s0 + $0x8] sm:$0xff]
  %v10 = vld [vmem:[%s0 + $0x10] sm:$0xff]
  %v11 = vld [vmem:[%s0 + $0x18] sm:$0xff]
  %v12 = vld [vmem:[%s0 + $0x20] sm:$0xff]
  %v13 = vld [vmem:[%s0 + $0x28] sm:$0xff]
  %v14 = vld [vmem:[%s0 + $0x30] sm:$0xff]
  %v15 = vld [vmem:[%s0 + $0x38] sm:$0xff]
  %v16 = vld [vmem:[%s0 + $0x40] sm:$0xff]
  %v17 = vld [vmem:[%s0 + $0x48] sm:$0xff]
  %v18 = vld [vmem:[%s0 + $0x50] sm:$0xff]
  %v19 = vld [vmem:[%s0 + $0x58] sm:$0xff]
  %v20 = vld [vmem:[%s0 + $0x60] sm:$0xff]
  %v21 = vld [vmem:[%s0 + $0x68] sm:$0xff]
  %v22 = vld [vmem:[%s0 + $0x70] sm:$0xff]
  %v23 = vld [vmem:[%s0 + $0x78] sm:$0xff]
  %v24 = vld [vmem:[%s0 + $0x80] sm:$0xff]
  %v25 = vld [vmem:[%s0 + $0x88] sm:$0xff]
  %v26 = vld [vmem:[%s0 + $0x90] sm:$0xff]
  %v27 = vld [vmem:[%s0 + $0x98] sm:$0xff]
  %v28 = vld [vmem:[%s0 + $0xa0] sm:$0xff]
  %v29 = vld [vmem:[%s0 + $0xa8] sm:$0xff]
  %v30 = vld [vmem:[%s0 + $0xb0] sm:$0xff]
  %v31 = vld [vmem:[%s0 + $0xb8] sm:$0xff]
  %v32 = vld [vmem:[%s0 + $0xc0] sm:$0xff]
  %v33 = vld [vmem:[%s0 + $0xc8] sm:$0xff]
  %v34 = vld [vmem:[%s0 + $0xd0] sm:$0xff]
  %v35 = vld [vmem:[%s0 + $0xd8] sm:$0xff]
  %v36 = vld [vmem:[%s0 + $0xe0] sm:$0xff]
  %v37 = vld [vmem:[%s0 + $0xe8] sm:$0xff]
  %v38 = vld [vmem:[%s0 + $0xf0] sm:$0xff]
  %v39 = vld [vmem:[%s0 + $0xf8] sm:$0xff]
  %v40 = vld [vmem:[%s0 + $0x100] sm:$0xff]
  %v41 = vld [vmem:[%s0 + $0x108] sm:$0xff]
  %v42 = vld [vmem:[%s0 + $0x110] sm:$0xff]
  %v43 = vld [vmem:[%s0 + $0x118] sm:$0xff]
  %vm44 = vcmask 523264
  %v45 = vsel %vm44, %v8, -inf
  %v46 = vsel %vm44, %v12, -inf
  %v47 = vmax.f32 %v45, %v46
  %v48 = vsel %vm44, %v16, -inf
  %v49 = vmax.f32 %v47, %v48
  %v50 = vsel %vm44, %v20, -inf
  %v51 = vmax.f32 %v49, %v50
  %v52 = vsel %vm44, %v24, -inf
  %v53 = vmax.f32 %v51, %v52
  %v54 = vsel %vm44, %v28, -inf
  %v55 = vmax.f32 %v53, %v54
  %v56 = vsel %vm44, %v32, -inf
  %v57 = vmax.f32 %v55, %v56
  %v58 = vsel %vm44, %v36, -inf
  %v59 = vmax.f32 %v57, %v58
  %v60 = vsel %vm44, %v40, -inf
  %v61 = vmax.f32 %v59, %v60
  %v62 = vsel %vm44, %v9, -inf
  %v63 = vsel %vm44, %v13, -inf
  %v64 = vmax.f32 %v62, %v63
  %v65 = vsel %vm44, %v17, -inf
  %v66 = vmax.f32 %v64, %v65
  %v67 = vsel %vm44, %v21, -inf
  %v68 = vmax.f32 %v66, %v67
  %v69 = vsel %vm44, %v25, -inf
  %v70 = vmax.f32 %v68, %v69
  %v71 = vsel %vm44, %v29, -inf
  %v72 = vmax.f32 %v70, %v71
  %v73 = vsel %vm44, %v33, -inf
  %v74 = vmax.f32 %v72, %v73
  %v75 = vsel %vm44, %v37, -inf
  %v76 = vmax.f32 %v74, %v75
  %v77 = vsel %vm44, %v41, -inf
  %v78 = vmax.f32 %v76, %v77
  %v79 = vsel %vm44, %v10, -inf
  %v80 = vsel %vm44, %v14, -inf
  %v81 = vmax.f32 %v79, %v80
  %v82 = vsel %vm44, %v18, -inf
  %v83 = vmax.f32 %v81, %v82
  %v84 = vsel %vm44, %v22, -inf
  %v85 = vmax.f32 %v83, %v84
  %v86 = vsel %vm44, %v26, -inf
  %v87 = vmax.f32 %v85, %v86
  %v88 = vsel %vm44, %v30, -inf
  %v89 = vmax.f32 %v87, %v88
  %v90 = vsel %vm44, %v34, -inf
  %v91 = vmax.f32 %v89, %v90
  %v92 = vsel %vm44, %v38, -inf
  %v93 = vmax.f32 %v91, %v92
  %v94 = vsel %vm44, %v42, -inf
  %v95 = vmax.f32 %v93, %v94
  %v96 = vsel %vm44, %v11, -inf
  %v97 = vsel %vm44, %v15, -inf
  %v98 = vmax.f32 %v96, %v97
  %v99 = vsel %vm44, %v19, -inf
  %v100 = vmax.f32 %v98, %v99
  %v101 = vsel %vm44, %v23, -inf
  %v102 = vmax.f32 %v100, %v101
  %v103 = vsel %vm44, %v27, -inf
  %v104 = vmax.f32 %v102, %v103
  %v105 = vsel %vm44, %v31, -inf
  %v106 = vmax.f32 %v104, %v105
  %v107 = vsel %vm44, %v35, -inf
  %v108 = vmax.f32 %v106, %v107
  %v109 = vsel %vm44, %v39, -inf
  %v110 = vmax.f32 %v108, %v109
  %v111 = vsel %vm44, %v43, -inf
  %v112 = vmax.f32 %v110, %v111
  %113 = vst.msk [vmem:[%s1] sm:$0xff] %vm44, %v61
  %114 = vst.msk [vmem:[%s1 + $0x8] sm:$0xff] %vm44, %v78
  %115 = vst.msk [vmem:[%s1 + $0x10] sm:$0xff] %vm44, %v95
  %116 = vst.msk [vmem:[%s1 + $0x18] sm:$0xff] %vm44, %v112
  // Predicated region
  $region6: #{res_encoder_forward.11} parent=0 // pred_check
    _
  $region7: #{res_encoder_forward.11} parent=0 // pred_check_branch
    %118 = sbr.rel (0) target = $region9
  $region8: #{res_encoder_forward.11} parent=0 // pred_region
    _
  $region9: #{res_encoder_forward.11} parent=0 // pred_fallthru
    _
  // Predicated region
  $region10: #{res_encoder_forward.11} parent=0 // pred_check
    _
  $region11: #{res_encoder_forward.11} parent=0 // pred_check_branch
    %120 = sbr.rel (0) target = $region13
  $region12: #{res_encoder_forward.11} parent=0 // pred_region
    _
  $region13: #{res_encoder_forward.11} parent=0 // pred_fallthru
    _

// kernel: res_encoder_forward.12
$region0: #{res_encoder_forward.12}
  #allocation0 [shape = 'u32[]', space=smem, size = 0x4, offset = 0x4, fixed_abs, tag = 'smem constant byte address 0x4 - core index']
  #allocation1 [shape = 'u32[72,128]{1,0:T(1,128)}', space=vmem, size = 0x9000, scoped, tag = 'internal scratch']
  %s0 = inlined_call_operand.vmem [shape: bf16[32,576], index: 0, kind: input, shape index: {}]
  %s1 = inlined_call_operand.vmem [shape: bf16[576,64], index: 1, kind: input, shape index: {}]
  %s2 = inlined_call_operand.vmem [shape: f32[1,64], index: 2, kind: input, shape index: {}]
  %s3 = inlined_call_operand.vmem [shape: f32[1,64], index: 3, kind: input, shape index: {}]
  %s4 = inlined_call_operand.vmem [shape: f32[32,64], index: 4, kind: output, shape index: {}]
  %s5 = sld [smem:[#allocation0]]
  $region26: #{res_encoder_forward.12} parent=0
    _
  %s7 = ssub.s32 1, %s5
  %s8 = scalar_select 0, %s7, %s5
  // Predicated region
  $region2: #{res_encoder_forward.12} parent=0 // pred_check
    _
  $region3: #{res_encoder_forward.12} parent=0 // pred_check_branch
    %10 = sbr.rel (0) target = $region5
  $region4: #{res_encoder_forward.12} parent=0 // pred_region
    _
  $region5: #{res_encoder_forward.12} parent=0 // pred_fallthru
    _
  // Predicated region
  $region6: #{res_encoder_forward.12} parent=0 // pred_check
    _
  $region7: #{res_encoder_forward.12} parent=0 // pred_check_branch
    %12 = sbr.rel (0) target = $region9
  $region8: #{res_encoder_forward.12} parent=0 // pred_region
    _
  $region9: #{res_encoder_forward.12} parent=0 // pred_fallthru
    _
  // Predicated region
  $region10: #{res_encoder_forward.12} parent=0 // pred_check
    _
  $region11: #{res_encoder_forward.12} parent=0 // pred_check_branch
    %14 = sbr.rel (0) target = $region13
  $region12: #{res_encoder_forward.12} parent=0 // pred_region
    _
  $region13: #{res_encoder_forward.12} parent=0 // pred_fallthru
    _
  // Predicated region
  $region14: #{res_encoder_forward.12} parent=0 // pred_check
    _
  $region15: #{res_encoder_forward.12} parent=0 // pred_check_branch
    %16 = sbr.rel (0) target = $region17
  $region16: #{res_encoder_forward.12} parent=0 // pred_region
    _
  $region17: #{res_encoder_forward.12} parent=0 // pred_fallthru
    _
  %v18 = vld [vmem:[%s0] sm:$0xff]
  %v19 = vld [vmem:[%s0 + $0x8] sm:$0xff]
  %v20 = vld [vmem:[%s0 + $0x10] sm:$0xf]
  %v21 = vld [vmem:[%s0 + $0x14] sm:$0xff]
  %v22 = vld [vmem:[%s0 + $0x1c] sm:$0xff]
  %v23 = vld [vmem:[%s0 + $0x24] sm:$0xf]
  %v24 = vld [vmem:[%s0 + $0x28] sm:$0xff]
  %v25 = vld [vmem:[%s0 + $0x30] sm:$0xff]
  %v26 = vld [vmem:[%s0 + $0x38] sm:$0xf]
  %v27 = vld [vmem:[%s0 + $0x3c] sm:$0xff]
  %v28 = vld [vmem:[%s0 + $0x44] sm:$0xff]
  %v29 = vld [vmem:[%s0 + $0x4c] sm:$0xf]
  %v30 = vld [vmem:[%s1] sm:$0xf]
  %v31 = vld [vmem:[%s1 + $0x4] sm:$0xf]
  %v32 = vld [vmem:[%s1 + $0x8] sm:$0xf]
  %v33 = vld [vmem:[%s1 + $0xc] sm:$0xf]
  %v34 = vld [vmem:[%s1 + $0x10] sm:$0xf]
  %v35 = vld [vmem:[%s1 + $0x14] sm:$0xf]
  %v36 = vld [vmem:[%s1 + $0x18] sm:$0xf]
  %v37 = vld [vmem:[%s1 + $0x1c] sm:$0xf]
  %v38 = vld [vmem:[%s1 + $0x20] sm:$0xf]
  %v39 = vld [vmem:[%s1 + $0x24] sm:$0xf]
  %v40 = vld [vmem:[%s1 + $0x28] sm:$0xf]
  %v41 = vld [vmem:[%s1 + $0x2c] sm:$0xf]
  %v42 = vld [vmem:[%s1 + $0x30] sm:$0xf]
  %v43 = vld [vmem:[%s1 + $0x34] sm:$0xf]
  %v44 = vld [vmem:[%s1 + $0x38] sm:$0xf]
  %v45 = vld [vmem:[%s1 + $0x3c] sm:$0xf]
  %v46 = vld [vmem:[%s1 + $0x40] sm:$0xf]
  %v47 = vld [vmem:[%s1 + $0x44] sm:$0xf]
  %v48 = vld [vmem:[%s1 + $0x48] sm:$0xf]
  %v49 = vld [vmem:[%s1 + $0x4c] sm:$0xf]
  %v50 = vld [vmem:[%s1 + $0x50] sm:$0xf]
  %v51 = vld [vmem:[%s1 + $0x54] sm:$0xf]
  %v52 = vld [vmem:[%s1 + $0x58] sm:$0xf]
  %v53 = vld [vmem:[%s1 + $0x5c] sm:$0xf]
  %v54 = vld [vmem:[%s1 + $0x60] sm:$0xf]
  %v55 = vld [vmem:[%s1 + $0x64] sm:$0xf]
  %v56 = vld [vmem:[%s1 + $0x68] sm:$0xf]
  %v57 = vld [vmem:[%s1 + $0x6c] sm:$0xf]
  %v58 = vld [vmem:[%s1 + $0x70] sm:$0xf]
  %v59 = vld [vmem:[%s1 + $0x74] sm:$0xf]
  %v60 = vld [vmem:[%s1 + $0x78] sm:$0xf]
  %v61 = vld [vmem:[%s1 + $0x7c] sm:$0xf]
  %v62 = vld [vmem:[%s1 + $0x80] sm:$0xf]
  %v63 = vld [vmem:[%s1 + $0x84] sm:$0xf]
  %v64 = vld [vmem:[%s1 + $0x88] sm:$0xf]
  %v65 = vld [vmem:[%s1 + $0x8c] sm:$0xf]
  %v66 = vld [vmem:[%s1 + $0x90] sm:$0xf]
  %v67 = vld [vmem:[%s1 + $0x94] sm:$0xf]
  %v68 = vld [vmem:[%s1 + $0x98] sm:$0xf]
  %v69 = vld [vmem:[%s1 + $0x9c] sm:$0xf]
  %v70 = vld [vmem:[%s1 + $0xa0] sm:$0xf]
  %v71 = vld [vmem:[%s1 + $0xa4] sm:$0xf]
  %v72 = vld [vmem:[%s1 + $0xa8] sm:$0xf]
  %v73 = vld [vmem:[%s1 + $0xac] sm:$0xf]
  %v74 = vld [vmem:[%s1 + $0xb0] sm:$0xf]
  %v75 = vld [vmem:[%s1 + $0xb4] sm:$0xf]
  %v76 = vld [vmem:[%s1 + $0xb8] sm:$0xf]
  %v77 = vld [vmem:[%s1 + $0xbc] sm:$0xf]
  %v78 = vld [vmem:[%s1 + $0xc0] sm:$0xf]
  %v79 = vld [vmem:[%s1 + $0xc4] sm:$0xf]
  %v80 = vld [vmem:[%s1 + $0xc8] sm:$0xf]
  %v81 = vld [vmem:[%s1 + $0xcc] sm:$0xf]
  %v82 = vld [vmem:[%s1 + $0xd0] sm:$0xf]
  %v83 = vld [vmem:[%s1 + $0xd4] sm:$0xf]
  %v84 = vld [vmem:[%s1 + $0xd8] sm:$0xf]
  %v85 = vld [vmem:[%s1 + $0xdc] sm:$0xf]
  %v86 = vld [vmem:[%s1 + $0xe0] sm:$0xf]
  %v87 = vld [vmem:[%s1 + $0xe4] sm:$0xf]
  %v88 = vld [vmem:[%s1 + $0xe8] sm:$0xf]
  %v89 = vld [vmem:[%s1 + $0xec] sm:$0xf]
  %v90 = vld [vmem:[%s1 + $0xf0] sm:$0xf]
  %v91 = vld [vmem:[%s1 + $0xf4] sm:$0xf]
  %v92 = vld [vmem:[%s1 + $0xf8] sm:$0xf]
  %v93 = vld [vmem:[%s1 + $0xfc] sm:$0xf]
  %v94 = vld [vmem:[%s1 + $0x100] sm:$0xf]
  %v95 = vld [vmem:[%s1 + $0x104] sm:$0xf]
  %v96 = vld [vmem:[%s1 + $0x108] sm:$0xf]
  %v97 = vld [vmem:[%s1 + $0x10c] sm:$0xf]
  %v98 = vld [vmem:[%s1 + $0x110] sm:$0xf]
  %v99 = vld [vmem:[%s1 + $0x114] sm:$0xf]
  %v100 = vld [vmem:[%s1 + $0x118] sm:$0xf]
  %v101 = vld [vmem:[%s1 + $0x11c] sm:$0xf]
  %v114 = vunpack.c.l.b16 %v18
  %v115 = vunpack.c.h.b16 %v18
  %v116 = vunpack.c.l.b16 %v19
  %v117 = vunpack.c.h.b16 %v19
  %v118 = vunpack.c.l.b16 %v20
  %v119 = vunpack.c.l.b16 %v21
  %v120 = vunpack.c.h.b16 %v21
  %v121 = vunpack.c.l.b16 %v22
  %v122 = vunpack.c.h.b16 %v22
  %v123 = vunpack.c.l.b16 %v23
  %v124 = vunpack.c.l.b16 %v24
  %v125 = vunpack.c.h.b16 %v24
  %v126 = vunpack.c.l.b16 %v25
  %v127 = vunpack.c.h.b16 %v25
  %v128 = vunpack.c.l.b16 %v26
  %v129 = vunpack.c.l.b16 %v27
  %v130 = vunpack.c.h.b16 %v27
  %v131 = vunpack.c.l.b16 %v28
  %v132 = vunpack.c.h.b16 %v28
  %v133 = vunpack.c.l.b16 %v29
  %v134 = vpack.c.b16 %v119, %v114
  %v135 = vpack.c.b16 %v120, %v115
  %v136 = vpack.c.b16 %v121, %v116
  %v137 = vpack.c.b16 %v122, %v117
  %v138 = vpack.c.b16 %v123, %v118
  %v139 = vpack.c.b16 %v129, %v124
  %v140 = vpack.c.b16 %v130, %v125
  %v141 = vpack.c.b16 %v131, %v126
  %v142 = vpack.c.b16 %v132, %v127
  %v143 = vpack.c.b16 %v133, %v128
  %v224 = vunpack.c.l.b16 %v30
  %v225 = vunpack.c.l.b16 %v31
  %v226 = vunpack.c.l.b16 %v32
  %v227 = vunpack.c.l.b16 %v33
  %v228 = vunpack.c.l.b16 %v34
  %v229 = vunpack.c.l.b16 %v35
  %v230 = vunpack.c.l.b16 %v36
  %v231 = vunpack.c.l.b16 %v37
  %v232 = vunpack.c.l.b16 %v38
  %v233 = vunpack.c.l.b16 %v39
  %v234 = vunpack.c.l.b16 %v40
  %v235 = vunpack.c.l.b16 %v41
  %v236 = vunpack.c.l.b16 %v42
  %v237 = vunpack.c.l.b16 %v43
  %v238 = vunpack.c.l.b16 %v44
  %v239 = vunpack.c.l.b16 %v45
  %v240 = vunpack.c.l.b16 %v46
  %v241 = vunpack.c.l.b16 %v47
  %v242 = vunpack.c.l.b16 %v48
  %v243 = vunpack.c.l.b16 %v49
  %v244 = vunpack.c.l.b16 %v50
  %v245 = vunpack.c.l.b16 %v51
  %v246 = vunpack.c.l.b16 %v52
  %v247 = vunpack.c.l.b16 %v53
  %v248 = vunpack.c.l.b16 %v54
  %v249 = vunpack.c.l.b16 %v55
  %v250 = vunpack.c.l.b16 %v56
  %v251 = vunpack.c.l.b16 %v57
  %v252 = vunpack.c.l.b16 %v58
  %v253 = vunpack.c.l.b16 %v59
  %v254 = vunpack.c.l.b16 %v60
  %v255 = vunpack.c.l.b16 %v61
  %v256 = vunpack.c.l.b16 %v62
  %v257 = vunpack.c.l.b16 %v63
  %v258 = vunpack.c.l.b16 %v64
  %v259 = vunpack.c.l.b16 %v65
  %v260 = vunpack.c.l.b16 %v66
  %v261 = vunpack.c.l.b16 %v67
  %v262 = vunpack.c.l.b16 %v68
  %v263 = vunpack.c.l.b16 %v69
  %v264 = vunpack.c.l.b16 %v70
  %v265 = vunpack.c.l.b16 %v71
  %v266 = vunpack.c.l.b16 %v72
  %v267 = vunpack.c.l.b16 %v73
  %v268 = vunpack.c.l.b16 %v74
  %v269 = vunpack.c.l.b16 %v75
  %v270 = vunpack.c.l.b16 %v76
  %v271 = vunpack.c.l.b16 %v77
  %v272 = vunpack.c.l.b16 %v78
  %v273 = vunpack.c.l.b16 %v79
  %v274 = vunpack.c.l.b16 %v80
  %v275 = vunpack.c.l.b16 %v81
  %v276 = vunpack.c.l.b16 %v82
  %v277 = vunpack.c.l.b16 %v83
  %v278 = vunpack.c.l.b16 %v84
  %v279 = vunpack.c.l.b16 %v85
  %v280 = vunpack.c.l.b16 %v86
  %v281 = vunpack.c.l.b16 %v87
  %v282 = vunpack.c.l.b16 %v88
  %v283 = vunpack.c.l.b16 %v89
  %v284 = vunpack.c.l.b16 %v90
  %v285 = vunpack.c.l.b16 %v91
  %v286 = vunpack.c.l.b16 %v92
  %v287 = vunpack.c.l.b16 %v93
  %v288 = vunpack.c.l.b16 %v94
  %v289 = vunpack.c.l.b16 %v95
  %v290 = vunpack.c.l.b16 %v96
  %v291 = vunpack.c.l.b16 %v97
  %v292 = vunpack.c.l.b16 %v98
  %v293 = vunpack.c.l.b16 %v99
  %v294 = vunpack.c.l.b16 %v100
  %v295 = vunpack.c.l.b16 %v101
  %v296 = vpack.c.b16 %v225, %v224
  %v297 = vpack.c.b16 %v227, %v226
  %v298 = vpack.c.b16 %v229, %v228
  %v299 = vpack.c.b16 %v231, %v230
  %v300 = vpack.c.b16 %v233, %v232
  %v301 = vpack.c.b16 %v235, %v234
  %v302 = vpack.c.b16 %v237, %v236
  %v303 = vpack.c.b16 %v239, %v238
  %v304 = vpack.c.b16 %v241, %v240
  %v305 = vpack.c.b16 %v243, %v242
  %v306 = vpack.c.b16 %v245, %v244
  %v307 = vpack.c.b16 %v247, %v246
  %v308 = vpack.c.b16 %v249, %v248
  %v309 = vpack.c.b16 %v251, %v250
  %v310 = vpack.c.b16 %v253, %v252
  %v311 = vpack.c.b16 %v255, %v254
  %v312 = vpack.c.b16 %v257, %v256
  %v313 = vpack.c.b16 %v259, %v258
  %v314 = vpack.c.b16 %v261, %v260
  %v315 = vpack.c.b16 %v263, %v262
  %v316 = vpack.c.b16 %v265, %v264
  %v317 = vpack.c.b16 %v267, %v266
  %v318 = vpack.c.b16 %v269, %v268
  %v319 = vpack.c.b16 %v271, %v270
  %v320 = vpack.c.b16 %v273, %v272
  %v321 = vpack.c.b16 %v275, %v274
  %v322 = vpack.c.b16 %v277, %v276
  %v323 = vpack.c.b16 %v279, %v278
  %v324 = vpack.c.b16 %v281, %v280
  %v325 = vpack.c.b16 %v283, %v282
  %v326 = vpack.c.b16 %v285, %v284
  %v327 = vpack.c.b16 %v287, %v286
  %v328 = vpack.c.b16 %v289, %v288
  %v329 = vpack.c.b16 %v291, %v290
  %v330 = vpack.c.b16 %v293, %v292
  %v331 = vpack.c.b16 %v295, %v294
  %vm368 = vcmask 523264
  %v370 = vsel %vm368, %v138, 0
  %v373 = vsel %vm368, %v143, 0
  %375 = vmatpush.bf16.msra.mxu0 %v303
  %376 = vmatpush.bf16.msra.mxu0 %v302
  %377 = vmatpush.bf16.msra.mxu0 %v301
  %378 = vmatpush.bf16.msra.mxu0 %v300
  %379 = vmatpush.bf16.msra.mxu0 %v299
  %380 = vmatpush.bf16.msra.mxu0 %v298
  %381 = vmatpush.bf16.msra.mxu0 %v297
  %382 = vmatpush.bf16.msra.mxu0 %v296
  %383 = vmatmul.bf16.gmra.mxu0 %v134
  %v384 = vpop.f32.mrf.mxu0
  %v385 = vadd.f32 0.0, %v384
  %v386 = vpop.f32.mrf.mxu0
  %v387 = vadd.f32 0.0, %v386
  %388 = vmatmul.bf16.gmra.mxu0 %v139
  %v389 = vpop.f32.mrf.mxu0
  %v390 = vadd.f32 0.0, %v389
  %v391 = vpop.f32.mrf.mxu0
  %v392 = vadd.f32 0.0, %v391
  %393 = vdwg.mxu0
  %394 = vmatpush.bf16.msra.mxu0 %v311
  %395 = vmatpush.bf16.msra.mxu0 %v310
  %396 = vmatpush.bf16.msra.mxu0 %v309
  %397 = vmatpush.bf16.msra.mxu0 %v308
  %398 = vmatpush.bf16.msra.mxu0 %v307
  %399 = vmatpush.bf16.msra.mxu0 %v306
  %400 = vmatpush.bf16.msra.mxu0 %v305
  %401 = vmatpush.bf16.msra.mxu0 %v304
  %402 = vmatmul.bf16.gmra.mxu0 %v135
  %v403 = vpop.f32.mrf.mxu0
  %v404 = vadd.f32 %v385, %v403
  %v405 = vpop.f32.mrf.mxu0
  %v406 = vadd.f32 %v387, %v405
  %407 = vmatmul.bf16.gmra.mxu0 %v140
  %v408 = vpop.f32.mrf.mxu0
  %v409 = vadd.f32 %v390, %v408
  %v410 = vpop.f32.mrf.mxu0
  %v411 = vadd.f32 %v392, %v410
  %412 = vdwg.mxu0
  %413 = vmatpush.bf16.msra.mxu0 %v319
  %414 = vmatpush.bf16.msra.mxu0 %v318
  %415 = vmatpush.bf16.msra.mxu0 %v317
  %416 = vmatpush.bf16.msra.mxu0 %v316
  %417 = vmatpush.bf16.msra.mxu0 %v315
  %418 = vmatpush.bf16.msra.mxu0 %v314
  %419 = vmatpush.bf16.msra.mxu0 %v313
  %420 = vmatpush.bf16.msra.mxu0 %v312
  %421 = vmatmul.bf16.gmra.mxu0 %v136
  %v422 = vpop.f32.mrf.mxu0
  %v423 = vadd.f32 %v404, %v422
  %v424 = vpop.f32.mrf.mxu0
  %v425 = vadd.f32 %v406, %v424
  %426 = vmatmul.bf16.gmra.mxu0 %v141
  %v427 = vpop.f32.mrf.mxu0
  %v428 = vadd.f32 %v409, %v427
  %v429 = vpop.f32.mrf.mxu0
  %v430 = vadd.f32 %v411, %v429
  %431 = vdwg.mxu0
  %432 = vmatpush.bf16.msra.mxu0 %v327
  %433 = vmatpush.bf16.msra.mxu0 %v326
  %434 = vmatpush.bf16.msra.mxu0 %v325
  %435 = vmatpush.bf16.msra.mxu0 %v324
  %436 = vmatpush.bf16.msra.mxu0 %v323
  %437 = vmatpush.bf16.msra.mxu0 %v322
  %438 = vmatpush.bf16.msra.mxu0 %v321
  %439 = vmatpush.bf16.msra.mxu0 %v320
  %440 = vmatmul.bf16.gmra.mxu0 %v137
  %v441 = vpop.f32.mrf.mxu0
  %v442 = vadd.f32 %v423, %v441
  %v443 = vpop.f32.mrf.mxu0
  %v444 = vadd.f32 %v425, %v443
  %445 = vmatmul.bf16.gmra.mxu0 %v142
  %v446 = vpop.f32.mrf.mxu0
  %v447 = vadd.f32 %v428, %v446
  %v448 = vpop.f32.mrf.mxu0
  %v449 = vadd.f32 %v430, %v448
  %450 = vdwg.mxu0
  %451 = vmatpush.bf16.msra.mxu0 0
  %452 = vmatpush.bf16.msra.mxu0 0
  %453 = vmatpush.bf16.msra.mxu0 0
  %454 = vmatpush.bf16.msra.mxu0 0
  %455 = vmatpush.bf16.msra.mxu0 %v331
  %456 = vmatpush.bf16.msra.mxu0 %v330
  %457 = vmatpush.bf16.msra.mxu0 %v329
  %458 = vmatpush.bf16.msra.mxu0 %v328
  %459 = vmatmul.bf16.gmra.mxu0 %v370
  %v460 = vpop.f32.mrf.mxu0
  %v461 = vadd.f32 %v442, %v460
  %v462 = vpop.f32.mrf.mxu0
  %v463 = vadd.f32 %v444, %v462
  %464 = vmatmul.bf16.gmra.mxu0 %v373
  %v465 = vpop.f32.mrf.mxu0
  %v466 = vadd.f32 %v447, %v465
  %v467 = vpop.f32.mrf.mxu0
  %v468 = vadd.f32 %v449, %v467
  %469 = vdwg.mxu0
  %v470 = vld [vmem:[%s2] sm:$0x1]
  %v471 = vld [vmem:[%s3] sm:$0x1]
  %v472 = vsel %vm368, %v461, 0.0
  %v473 = vsel %vm368, %v463, 0.0
  %v474 = vadd.f32 %v472, %v473
  %v475 = vsel %vm368, %v466, 0.0
  %v476 = vadd.f32 %v474, %v475
  %v477 = vsel %vm368, %v468, 0.0
  %v478 = vadd.f32 %v476, %v477
  %v479 = vrot.slane %v478, 4
  %v480 = vadd.f32 %v478, %v479
  %v481 = vrot.slane %v480, 2
  %v482 = vadd.f32 %v480, %v481
  %v483 = vrot.slane %v482, 1
  %v484 = vadd.f32 %v482, %v483
  %v485 = vrcp.pop 32.0
  %v486 = vmul.f32 32.0, %v485
  %v487 = vsub.f32 1.0, %v486
  %v488 = vmul.f32 %v485, %v487
  %v489 = vadd.f32 %v485, %v488
  %vm490 = vweird.f32 %v485
  %v491 = vsel %vm490, %v485, %v489
  %v492 = vmul.f32 %v484, %v491
  %v493 = vsub.f32 %v461, %v492
  %v494 = vsub.f32 %v463, %v492
  %v495 = vsub.f32 %v466, %v492
  %v496 = vsub.f32 %v468, %v492
  %v497 = vmul.f32 %v493, %v493
  %v498 = vmul.f32 %v494, %v494
  %v499 = vmul.f32 %v495, %v495
  %v500 = vmul.f32 %v496, %v496
  %v501 = vsel %vm368, %v497, 0.0
  %v502 = vsel %vm368, %v498, 0.0
  %v503 = vadd.f32 %v501, %v502
  %v504 = vsel %vm368, %v499, 0.0
  %v505 = vadd.f32 %v503, %v504
  %v506 = vsel %vm368, %v500, 0.0
  %v507 = vadd.f32 %v505, %v506
  %v508 = vrot.slane %v507, 4
  %v509 = vadd.f32 %v507, %v508
  %v510 = vrot.slane %v509, 2
  %v511 = vadd.f32 %v509, %v510
  %v512 = vrot.slane %v511, 1
  %v513 = vadd.f32 %v511, %v512
  %v514 = vmul.f32 %v513, %v491
  %v515 = vadd.f32 %v514, 1e-05
  %v516 = vrsqrt.pop %v515
  %v517 = vmul.f32 %v516, %v515
  %v518 = vmul.f32 %v517, %v516
  %v519 = vmul.f32 0.5, %v518
  %v520 = vsub.f32 1.5, %v519
  %v521 = vmul.f32 %v516, %v520
  %vm522 = vweird.f32 %v515
  %vm523 = vweird.f32 %v516
  %vm524 = vmor %vm522, %vm523
  %v525 = vsel %vm524, %v516, %v521
  %v526 = vmul.f32 %v493, %v525
  %v527 = vmul.f32 %v494, %v525
  %v528 = vmul.f32 %v495, %v525
  %v529 = vmul.f32 %v496, %v525
  %v531 = vperm.slane %v470, 0
  %v533 = vmul.f32 %v526, %v531
  %v534 = vmul.f32 %v527, %v531
  %v535 = vmul.f32 %v528, %v531
  %v536 = vmul.f32 %v529, %v531
  %v538 = vperm.slane %v471, 0
  %v540 = vadd.f32 %v533, %v538
  %v541 = vadd.f32 %v534, %v538
  %v542 = vadd.f32 %v535, %v538
  %v543 = vadd.f32 %v536, %v538
  %v544 = vmax.f32 %v540, 0.0
  %v545 = vmax.f32 %v541, 0.0
  %v546 = vmax.f32 %v542, 0.0
  %v547 = vmax.f32 %v543, 0.0
  %548 = vst.msk [vmem:[%s4] sm:$0xff] %vm368, %v544
  %549 = vst.msk [vmem:[%s4 + $0x8] sm:$0xff] %vm368, %v545
  %550 = vst.msk [vmem:[%s4 + $0x10] sm:$0xff] %vm368, %v546
  %551 = vst.msk [vmem:[%s4 + $0x18] sm:$0xff] %vm368, %v547
  // Predicated region
  $region18: #{res_encoder_forward.12} parent=0 // pred_check
    _
  $region19: #{res_encoder_forward.12} parent=0 // pred_check_branch
    %553 = sbr.rel (0) target = $region21
  $region20: #{res_encoder_forward.12} parent=0 // pred_region
    _
  $region21: #{res_encoder_forward.12} parent=0 // pred_fallthru
    _
  // Predicated region
  $region22: #{res_encoder_forward.12} parent=0 // pred_check
    _
  $region23: #{res_encoder_forward.12} parent=0 // pred_check_branch
    %555 = sbr.rel (0) target = $region25
  $region24: #{res_encoder_forward.12} parent=0 // pred_region
    _
  $region25: #{res_encoder_forward.12} parent=0 // pred_fallthru
    _

// kernel: res_encoder_forward.13
$region0: #{res_encoder_forward.13}
  #allocation0 [shape = 'u32[]', space=smem, size = 0x4, offset = 0x4, fixed_abs, tag = 'smem constant byte address 0x4 - core index']
  #allocation1 [shape = 'u32[72,128]{1,0:T(1,128)}', space=vmem, size = 0x9000, scoped, tag = 'internal scratch']
  %s0 = inlined_call_operand.vmem [shape: bf16[32,576], index: 0, kind: input, shape index: {}]
  %s1 = inlined_call_operand.vmem [shape: bf16[576,64], index: 1, kind: input, shape index: {}]
  %s2 = inlined_call_operand.vmem [shape: f32[1,64], index: 2, kind: input, shape index: {}]
  %s3 = inlined_call_operand.vmem [shape: f32[1,64], index: 3, kind: input, shape index: {}]
  %s4 = inlined_call_operand.vmem [shape: f32[32,64], index: 4, kind: input, shape index: {}]
  %s5 = inlined_call_operand.vmem [shape: f32[32,64], index: 5, kind: output, shape index: {}]
  %s6 = sld [smem:[#allocation0]]
  $region30: #{res_encoder_forward.13} parent=0
    _
  %s8 = ssub.s32 1, %s6
  %s9 = scalar_select 0, %s8, %s6
  // Predicated region
  $region2: #{res_encoder_forward.13} parent=0 // pred_check
    _
  $region3: #{res_encoder_forward.13} parent=0 // pred_check_branch
    %11 = sbr.rel (0) target = $region5
  $region4: #{res_encoder_forward.13} parent=0 // pred_region
    _
  $region5: #{res_encoder_forward.13} parent=0 // pred_fallthru
    _
  // Predicated region
  $region6: #{res_encoder_forward.13} parent=0 // pred_check
    _
  $region7: #{res_encoder_forward.13} parent=0 // pred_check_branch
    %13 = sbr.rel (0) target = $region9
  $region8: #{res_encoder_forward.13} parent=0 // pred_region
    _
  $region9: #{res_encoder_forward.13} parent=0 // pred_fallthru
    _
  // Predicated region
  $region10: #{res_encoder_forward.13} parent=0 // pred_check
    _
  $region11: #{res_encoder_forward.13} parent=0 // pred_check_branch
    %15 = sbr.rel (0) target = $region13
  $region12: #{res_encoder_forward.13} parent=0 // pred_region
    _
  $region13: #{res_encoder_forward.13} parent=0 // pred_fallthru
    _
  // Predicated region
  $region14: #{res_encoder_forward.13} parent=0 // pred_check
    _
  $region15: #{res_encoder_forward.13} parent=0 // pred_check_branch
    %17 = sbr.rel (0) target = $region17
  $region16: #{res_encoder_forward.13} parent=0 // pred_region
    _
  $region17: #{res_encoder_forward.13} parent=0 // pred_fallthru
    _
  // Predicated region
  $region18: #{res_encoder_forward.13} parent=0 // pred_check
    _
  $region19: #{res_encoder_forward.13} parent=0 // pred_check_branch
    %19 = sbr.rel (0) target = $region21
  $region20: #{res_encoder_forward.13} parent=0 // pred_region
    _
  $region21: #{res_encoder_forward.13} parent=0 // pred_fallthru
    _
  %v21 = vld [vmem:[%s0] sm:$0xff]
  %v22 = vld [vmem:[%s0 + $0x8] sm:$0xff]
  %v23 = vld [vmem:[%s0 + $0x10] sm:$0xf]
  %v24 = vld [vmem:[%s0 + $0x14] sm:$0xff]
  %v25 = vld [vmem:[%s0 + $0x1c] sm:$0xff]
  %v26 = vld [vmem:[%s0 + $0x24] sm:$0xf]
  %v27 = vld [vmem:[%s0 + $0x28] sm:$0xff]
  %v28 = vld [vmem:[%s0 + $0x30] sm:$0xff]
  %v29 = vld [vmem:[%s0 + $0x38] sm:$0xf]
  %v30 = vld [vmem:[%s0 + $0x3c] sm:$0xff]
  %v31 = vld [vmem:[%s0 + $0x44] sm:$0xff]
  %v32 = vld [vmem:[%s0 + $0x4c] sm:$0xf]
  %v33 = vld [vmem:[%s1] sm:$0xf]
  %v34 = vld [vmem:[%s1 + $0x4] sm:$0xf]
  %v35 = vld [vmem:[%s1 + $0x8] sm:$0xf]
  %v36 = vld [vmem:[%s1 + $0xc] sm:$0xf]
  %v37 = vld [vmem:[%s1 + $0x10] sm:$0xf]
  %v38 = vld [vmem:[%s1 + $0x14] sm:$0xf]
  %v39 = vld [vmem:[%s1 + $0x18] sm:$0xf]
  %v40 = vld [vmem:[%s1 + $0x1c] sm:$0xf]
  %v41 = vld [vmem:[%s1 + $0x20] sm:$0xf]
  %v42 = vld [vmem:[%s1 + $0x24] sm:$0xf]
  %v43 = vld [vmem:[%s1 + $0x28] sm:$0xf]
  %v44 = vld [vmem:[%s1 + $0x2c] sm:$0xf]
  %v45 = vld [vmem:[%s1 + $0x30] sm:$0xf]
  %v46 = vld [vmem:[%s1 + $0x34] sm:$0xf]
  %v47 = vld [vmem:[%s1 + $0x38] sm:$0xf]
  %v48 = vld [vmem:[%s1 + $0x3c] sm:$0xf]
  %v49 = vld [vmem:[%s1 + $0x40] sm:$0xf]
  %v50 = vld [vmem:[%s1 + $0x44] sm:$0xf]
  %v51 = vld [vmem:[%s1 + $0x48] sm:$0xf]
  %v52 = vld [vmem:[%s1 + $0x4c] sm:$0xf]
  %v53 = vld [vmem:[%s1 + $0x50] sm:$0xf]
  %v54 = vld [vmem:[%s1 + $0x54] sm:$0xf]
  %v55 = vld [vmem:[%s1 + $0x58] sm:$0xf]
  %v56 = vld [vmem:[%s1 + $0x5c] sm:$0xf]
  %v57 = vld [vmem:[%s1 + $0x60] sm:$0xf]
  %v58 = vld [vmem:[%s1 + $0x64] sm:$0xf]
  %v59 = vld [vmem:[%s1 + $0x68] sm:$0xf]
  %v60 = vld [vmem:[%s1 + $0x6c] sm:$0xf]
  %v61 = vld [vmem:[%s1 + $0x70] sm:$0xf]
  %v62 = vld [vmem:[%s1 + $0x74] sm:$0xf]
  %v63 = vld [vmem:[%s1 + $0x78] sm:$0xf]
  %v64 = vld [vmem:[%s1 + $0x7c] sm:$0xf]
  %v65 = vld [vmem:[%s1 + $0x80] sm:$0xf]
  %v66 = vld [vmem:[%s1 + $0x84] sm:$0xf]
  %v67 = vld [vmem:[%s1 + $0x88] sm:$0xf]
  %v68 = vld [vmem:[%s1 + $0x8c] sm:$0xf]
  %v69 = vld [vmem:[%s1 + $0x90] sm:$0xf]
  %v70 = vld [vmem:[%s1 + $0x94] sm:$0xf]
  %v71 = vld [vmem:[%s1 + $0x98] sm:$0xf]
  %v72 = vld [vmem:[%s1 + $0x9c] sm:$0xf]
  %v73 = vld [vmem:[%s1 + $0xa0] sm:$0xf]
  %v74 = vld [vmem:[%s1 + $0xa4] sm:$0xf]
  %v75 = vld [vmem:[%s1 + $0xa8] sm:$0xf]
  %v76 = vld [vmem:[%s1 + $0xac] sm:$0xf]
  %v77 = vld [vmem:[%s1 + $0xb0] sm:$0xf]
  %v78 = vld [vmem:[%s1 + $0xb4] sm:$0xf]
  %v79 = vld [vmem:[%s1 + $0xb8] sm:$0xf]
  %v80 = vld [vmem:[%s1 + $0xbc] sm:$0xf]
  %v81 = vld [vmem:[%s1 + $0xc0] sm:$0xf]
  %v82 = vld [vmem:[%s1 + $0xc4] sm:$0xf]
  %v83 = vld [vmem:[%s1 + $0xc8] sm:$0xf]
  %v84 = vld [vmem:[%s1 + $0xcc] sm:$0xf]
  %v85 = vld [vmem:[%s1 + $0xd0] sm:$0xf]
  %v86 = vld [vmem:[%s1 + $0xd4] sm:$0xf]
  %v87 = vld [vmem:[%s1 + $0xd8] sm:$0xf]
  %v88 = vld [vmem:[%s1 + $0xdc] sm:$0xf]
  %v89 = vld [vmem:[%s1 + $0xe0] sm:$0xf]
  %v90 = vld [vmem:[%s1 + $0xe4] sm:$0xf]
  %v91 = vld [vmem:[%s1 + $0xe8] sm:$0xf]
  %v92 = vld [vmem:[%s1 + $0xec] sm:$0xf]
  %v93 = vld [vmem:[%s1 + $0xf0] sm:$0xf]
  %v94 = vld [vmem:[%s1 + $0xf4] sm:$0xf]
  %v95 = vld [vmem:[%s1 + $0xf8] sm:$0xf]
  %v96 = vld [vmem:[%s1 + $0xfc] sm:$0xf]
  %v97 = vld [vmem:[%s1 + $0x100] sm:$0xf]
  %v98 = vld [vmem:[%s1 + $0x104] sm:$0xf]
  %v99 = vld [vmem:[%s1 + $0x108] sm:$0xf]
  %v100 = vld [vmem:[%s1 + $0x10c] sm:$0xf]
  %v101 = vld [vmem:[%s1 + $0x110] sm:$0xf]
  %v102 = vld [vmem:[%s1 + $0x114] sm:$0xf]
  %v103 = vld [vmem:[%s1 + $0x118] sm:$0xf]
  %v104 = vld [vmem:[%s1 + $0x11c] sm:$0xf]
  %v117 = vunpack.c.l.b16 %v21
  %v118 = vunpack.c.h.b16 %v21
  %v119 = vunpack.c.l.b16 %v22
  %v120 = vunpack.c.h.b16 %v22
  %v121 = vunpack.c.l.b16 %v23
  %v122 = vunpack.c.l.b16 %v24
  %v123 = vunpack.c.h.b16 %v24
  %v124 = vunpack.c.l.b16 %v25
  %v125 = vunpack.c.h.b16 %v25
  %v126 = vunpack.c.l.b16 %v26
  %v127 = vunpack.c.l.b16 %v27
  %v128 = vunpack.c.h.b16 %v27
  %v129 = vunpack.c.l.b16 %v28
  %v130 = vunpack.c.h.b16 %v28
  %v131 = vunpack.c.l.b16 %v29
  %v132 = vunpack.c.l.b16 %v30
  %v133 = vunpack.c.h.b16 %v30
  %v134 = vunpack.c.l.b16 %v31
  %v135 = vunpack.c.h.b16 %v31
  %v136 = vunpack.c.l.b16 %v32
  %v137 = vpack.c.b16 %v122, %v117
  %v138 = vpack.c.b16 %v123, %v118
  %v139 = vpack.c.b16 %v124, %v119
  %v140 = vpack.c.b16 %v125, %v120
  %v141 = vpack.c.b16 %v126, %v121
  %v142 = vpack.c.b16 %v132, %v127
  %v143 = vpack.c.b16 %v133, %v128
  %v144 = vpack.c.b16 %v134, %v129
  %v145 = vpack.c.b16 %v135, %v130
  %v146 = vpack.c.b16 %v136, %v131
  %v227 = vunpack.c.l.b16 %v33
  %v228 = vunpack.c.l.b16 %v34
  %v229 = vunpack.c.l.b16 %v35
  %v230 = vunpack.c.l.b16 %v36
  %v231 = vunpack.c.l.b16 %v37
  %v232 = vunpack.c.l.b16 %v38
  %v233 = vunpack.c.l.b16 %v39
  %v234 = vunpack.c.l.b16 %v40
  %v235 = vunpack.c.l.b16 %v41
  %v236 = vunpack.c.l.b16 %v42
  %v237 = vunpack.c.l.b16 %v43
  %v238 = vunpack.c.l.b16 %v44
  %v239 = vunpack.c.l.b16 %v45
  %v240 = vunpack.c.l.b16 %v46
  %v241 = vunpack.c.l.b16 %v47
  %v242 = vunpack.c.l.b16 %v48
  %v243 = vunpack.c.l.b16 %v49
  %v244 = vunpack.c.l.b16 %v50
  %v245 = vunpack.c.l.b16 %v51
  %v246 = vunpack.c.l.b16 %v52
  %v247 = vunpack.c.l.b16 %v53
  %v248 = vunpack.c.l.b16 %v54
  %v249 = vunpack.c.l.b16 %v55
  %v250 = vunpack.c.l.b16 %v56
  %v251 = vunpack.c.l.b16 %v57
  %v252 = vunpack.c.l.b16 %v58
  %v253 = vunpack.c.l.b16 %v59
  %v254 = vunpack.c.l.b16 %v60
  %v255 = vunpack.c.l.b16 %v61
  %v256 = vunpack.c.l.b16 %v62
  %v257 = vunpack.c.l.b16 %v63
  %v258 = vunpack.c.l.b16 %v64
  %v259 = vunpack.c.l.b16 %v65
  %v260 = vunpack.c.l.b16 %v66
  %v261 = vunpack.c.l.b16 %v67
  %v262 = vunpack.c.l.b16 %v68
  %v263 = vunpack.c.l.b16 %v69
  %v264 = vunpack.c.l.b16 %v70
  %v265 = vunpack.c.l.b16 %v71
  %v266 = vunpack.c.l.b16 %v72
  %v267 = vunpack.c.l.b16 %v73
  %v268 = vunpack.c.l.b16 %v74
  %v269 = vunpack.c.l.b16 %v75
  %v270 = vunpack.c.l.b16 %v76
  %v271 = vunpack.c.l.b16 %v77
  %v272 = vunpack.c.l.b16 %v78
  %v273 = vunpack.c.l.b16 %v79
  %v274 = vunpack.c.l.b16 %v80
  %v275 = vunpack.c.l.b16 %v81
  %v276 = vunpack.c.l.b16 %v82
  %v277 = vunpack.c.l.b16 %v83
  %v278 = vunpack.c.l.b16 %v84
  %v279 = vunpack.c.l.b16 %v85
  %v280 = vunpack.c.l.b16 %v86
  %v281 = vunpack.c.l.b16 %v87
  %v282 = vunpack.c.l.b16 %v88
  %v283 = vunpack.c.l.b16 %v89
  %v284 = vunpack.c.l.b16 %v90
  %v285 = vunpack.c.l.b16 %v91
  %v286 = vunpack.c.l.b16 %v92
  %v287 = vunpack.c.l.b16 %v93
  %v288 = vunpack.c.l.b16 %v94
  %v289 = vunpack.c.l.b16 %v95
  %v290 = vunpack.c.l.b16 %v96
  %v291 = vunpack.c.l.b16 %v97
  %v292 = vunpack.c.l.b16 %v98
  %v293 = vunpack.c.l.b16 %v99
  %v294 = vunpack.c.l.b16 %v100
  %v295 = vunpack.c.l.b16 %v101
  %v296 = vunpack.c.l.b16 %v102
  %v297 = vunpack.c.l.b16 %v103
  %v298 = vunpack.c.l.b16 %v104
  %v299 = vpack.c.b16 %v228, %v227
  %v300 = vpack.c.b16 %v230, %v229
  %v301 = vpack.c.b16 %v232, %v231
  %v302 = vpack.c.b16 %v234, %v233
  %v303 = vpack.c.b16 %v236, %v235
  %v304 = vpack.c.b16 %v238, %v237
  %v305 = vpack.c.b16 %v240, %v239
  %v306 = vpack.c.b16 %v242, %v241
  %v307 = vpack.c.b16 %v244, %v243
  %v308 = vpack.c.b16 %v246, %v245
  %v309 = vpack.c.b16 %v248, %v247
  %v310 = vpack.c.b16 %v250, %v249
  %v311 = vpack.c.b16 %v252, %v251
  %v312 = vpack.c.b16 %v254, %v253
  %v313 = vpack.c.b16 %v256, %v255
  %v314 = vpack.c.b16 %v258, %v257
  %v315 = vpack.c.b16 %v260, %v259
  %v316 = vpack.c.b16 %v262, %v261
  %v317 = vpack.c.b16 %v264, %v263
  %v318 = vpack.c.b16 %v266, %v265
  %v319 = vpack.c.b16 %v268, %v267
  %v320 = vpack.c.b16 %v270, %v269
  %v321 = vpack.c.b16 %v272, %v271
  %v322 = vpack.c.b16 %v274, %v273
  %v323 = vpack.c.b16 %v276, %v275
  %v324 = vpack.c.b16 %v278, %v277
  %v325 = vpack.c.b16 %v280, %v279
  %v326 = vpack.c.b16 %v282, %v281
  %v327 = vpack.c.b16 %v284, %v283
  %v328 = vpack.c.b16 %v286, %v285
  %v329 = vpack.c.b16 %v288, %v287
  %v330 = vpack.c.b16 %v290, %v289
  %v331 = vpack.c.b16 %v292, %v291
  %v332 = vpack.c.b16 %v294, %v293
  %v333 = vpack.c.b16 %v296, %v295
  %v334 = vpack.c.b16 %v298, %v297
  %vm371 = vcmask 523264
  %v373 = vsel %vm371, %v141, 0
  %v376 = vsel %vm371, %v146, 0
  %378 = vmatpush.bf16.msra.mxu0 %v306
  %379 = vmatpush.bf16.msra.mxu0 %v305
  %380 = vmatpush.bf16.msra.mxu0 %v304
  %381 = vmatpush.bf16.msra.mxu0 %v303
  %382 = vmatpush.bf16.msra.mxu0 %v302
  %383 = vmatpush.bf16.msra.mxu0 %v301
  %384 = vmatpush.bf16.msra.mxu0 %v300
  %385 = vmatpush.bf16.msra.mxu0 %v299
  %386 = vmatmul.bf16.gmra.mxu0 %v137
  %v387 = vpop.f32.mrf.mxu0
  %v388 = vadd.f32 0.0, %v387
  %v389 = vpop.f32.mrf.mxu0
  %v390 = vadd.f32 0.0, %v389
  %391 = vmatmul.bf16.gmra.mxu0 %v142
  %v392 = vpop.f32.mrf.mxu0
  %v393 = vadd.f32 0.0, %v392
  %v394 = vpop.f32.mrf.mxu0
  %v395 = vadd.f32 0.0, %v394
  %396 = vdwg.mxu0
  %397 = vmatpush.bf16.msra.mxu0 %v314
  %398 = vmatpush.bf16.msra.mxu0 %v313
  %399 = vmatpush.bf16.msra.mxu0 %v312
  %400 = vmatpush.bf16.msra.mxu0 %v311
  %401 = vmatpush.bf16.msra.mxu0 %v310
  %402 = vmatpush.bf16.msra.mxu0 %v309
  %403 = vmatpush.bf16.msra.mxu0 %v308
  %404 = vmatpush.bf16.msra.mxu0 %v307
  %405 = vmatmul.bf16.gmra.mxu0 %v138
  %v406 = vpop.f32.mrf.mxu0
  %v407 = vadd.f32 %v388, %v406
  %v408 = vpop.f32.mrf.mxu0
  %v409 = vadd.f32 %v390, %v408
  %410 = vmatmul.bf16.gmra.mxu0 %v143
  %v411 = vpop.f32.mrf.mxu0
  %v412 = vadd.f32 %v393, %v411
  %v413 = vpop.f32.mrf.mxu0
  %v414 = vadd.f32 %v395, %v413
  %415 = vdwg.mxu0
  %416 = vmatpush.bf16.msra.mxu0 %v322
  %417 = vmatpush.bf16.msra.mxu0 %v321
  %418 = vmatpush.bf16.msra.mxu0 %v320
  %419 = vmatpush.bf16.msra.mxu0 %v319
  %420 = vmatpush.bf16.msra.mxu0 %v318
  %421 = vmatpush.bf16.msra.mxu0 %v317
  %422 = vmatpush.bf16.msra.mxu0 %v316
  %423 = vmatpush.bf16.msra.mxu0 %v315
  %424 = vmatmul.bf16.gmra.mxu0 %v139
  %v425 = vpop.f32.mrf.mxu0
  %v426 = vadd.f32 %v407, %v425
  %v427 = vpop.f32.mrf.mxu0
  %v428 = vadd.f32 %v409, %v427
  %429 = vmatmul.bf16.gmra.mxu0 %v144
  %v430 = vpop.f32.mrf.mxu0
  %v431 = vadd.f32 %v412, %v430
  %v432 = vpop.f32.mrf.mxu0
  %v433 = vadd.f32 %v414, %v432
  %434 = vdwg.mxu0
  %435 = vmatpush.bf16.msra.mxu0 %v330
  %436 = vmatpush.bf16.msra.mxu0 %v329
  %437 = vmatpush.bf16.msra.mxu0 %v328
  %438 = vmatpush.bf16.msra.mxu0 %v327
  %439 = vmatpush.bf16.msra.mxu0 %v326
  %440 = vmatpush.bf16.msra.mxu0 %v325
  %441 = vmatpush.bf16.msra.mxu0 %v324
  %442 = vmatpush.bf16.msra.mxu0 %v323
  %443 = vmatmul.bf16.gmra.mxu0 %v140
  %v444 = vpop.f32.mrf.mxu0
  %v445 = vadd.f32 %v426, %v444
  %v446 = vpop.f32.mrf.mxu0
  %v447 = vadd.f32 %v428, %v446
  %448 = vmatmul.bf16.gmra.mxu0 %v145
  %v449 = vpop.f32.mrf.mxu0
  %v450 = vadd.f32 %v431, %v449
  %v451 = vpop.f32.mrf.mxu0
  %v452 = vadd.f32 %v433, %v451
  %453 = vdwg.mxu0
  %454 = vmatpush.bf16.msra.mxu0 0
  %455 = vmatpush.bf16.msra.mxu0 0
  %456 = vmatpush.bf16.msra.mxu0 0
  %457 = vmatpush.bf16.msra.mxu0 0
  %458 = vmatpush.bf16.msra.mxu0 %v334
  %459 = vmatpush.bf16.msra.mxu0 %v333
  %460 = vmatpush.bf16.msra.mxu0 %v332
  %461 = vmatpush.bf16.msra.mxu0 %v331
  %462 = vmatmul.bf16.gmra.mxu0 %v373
  %v463 = vpop.f32.mrf.mxu0
  %v464 = vadd.f32 %v445, %v463
  %v465 = vpop.f32.mrf.mxu0
  %v466 = vadd.f32 %v447, %v465
  %467 = vmatmul.bf16.gmra.mxu0 %v376
  %v468 = vpop.f32.mrf.mxu0
  %v469 = vadd.f32 %v450, %v468
  %v470 = vpop.f32.mrf.mxu0
  %v471 = vadd.f32 %v452, %v470
  %472 = vdwg.mxu0
  %v473 = vld [vmem:[%s2] sm:$0x1]
  %v474 = vld [vmem:[%s3] sm:$0x1]
  %v475 = vsel %vm371, %v464, 0.0
  %v476 = vsel %vm371, %v466, 0.0
  %v477 = vadd.f32 %v475, %v476
  %v478 = vsel %vm371, %v469, 0.0
  %v479 = vadd.f32 %v477, %v478
  %v480 = vsel %vm371, %v471, 0.0
  %v481 = vadd.f32 %v479, %v480
  %v482 = vrot.slane %v481, 4
  %v483 = vadd.f32 %v481, %v482
  %v484 = vrot.slane %v483, 2
  %v485 = vadd.f32 %v483, %v484
  %v486 = vrot.slane %v485, 1
  %v487 = vadd.f32 %v485, %v486
  %v488 = vrcp.pop 32.0
  %v489 = vmul.f32 32.0, %v488
  %v490 = vsub.f32 1.0, %v489
  %v491 = vmul.f32 %v488, %v490
  %v492 = vadd.f32 %v488, %v491
  %vm493 = vweird.f32 %v488
  %v494 = vsel %vm493, %v488, %v492
  %v495 = vmul.f32 %v487, %v494
  %v496 = vsub.f32 %v464, %v495
  %v497 = vsub.f32 %v466, %v495
  %v498 = vsub.f32 %v469, %v495
  %v499 = vsub.f32 %v471, %v495
  %v500 = vmul.f32 %v496, %v496
  %v501 = vmul.f32 %v497, %v497
  %v502 = vmul.f32 %v498, %v498
  %v503 = vmul.f32 %v499, %v499
  %v504 = vsel %vm371, %v500, 0.0
  %v505 = vsel %vm371, %v501, 0.0
  %v506 = vadd.f32 %v504, %v505
  %v507 = vsel %vm371, %v502, 0.0
  %v508 = vadd.f32 %v506, %v507
  %v509 = vsel %vm371, %v503, 0.0
  %v510 = vadd.f32 %v508, %v509
  %v511 = vrot.slane %v510, 4
  %v512 = vadd.f32 %v510, %v511
  %v513 = vrot.slane %v512, 2
  %v514 = vadd.f32 %v512, %v513
  %v515 = vrot.slane %v514, 1
  %v516 = vadd.f32 %v514, %v515
  %v517 = vmul.f32 %v516, %v494
  %v518 = vadd.f32 %v517, 1e-05
  %v519 = vrsqrt.pop %v518
  %v520 = vmul.f32 %v519, %v518
  %v521 = vmul.f32 %v520, %v519
  %v522 = vmul.f32 0.5, %v521
  %v523 = vsub.f32 1.5, %v522
  %v524 = vmul.f32 %v519, %v523
  %vm525 = vweird.f32 %v518
  %vm526 = vweird.f32 %v519
  %vm527 = vmor %vm525, %vm526
  %v528 = vsel %vm527, %v519, %v524
  %v529 = vmul.f32 %v496, %v528
  %v530 = vmul.f32 %v497, %v528
  %v531 = vmul.f32 %v498, %v528
  %v532 = vmul.f32 %v499, %v528
  %v534 = vperm.slane %v473, 0
  %v536 = vmul.f32 %v529, %v534
  %v537 = vmul.f32 %v530, %v534
  %v538 = vmul.f32 %v531, %v534
  %v539 = vmul.f32 %v532, %v534
  %v541 = vperm.slane %v474, 0
  %v543 = vadd.f32 %v536, %v541
  %v544 = vadd.f32 %v537, %v541
  %v545 = vadd.f32 %v538, %v541
  %v546 = vadd.f32 %v539, %v541
  %v547 = vld [vmem:[%s4] sm:$0xff]
  %v548 = vld [vmem:[%s4 + $0x8] sm:$0xff]
  %v549 = vld [vmem:[%s4 + $0x10] sm:$0xff]
  %v550 = vld [vmem:[%s4 + $0x18] sm:$0xff]
  %v551 = vadd.f32 %v543, %v547
  %v552 = vadd.f32 %v544, %v548
  %v553 = vadd.f32 %v545, %v549
  %v554 = vadd.f32 %v546, %v550
  %v555 = vmax.f32 %v551, 0.0
  %v556 = vmax.f32 %v552, 0.0
  %v557 = vmax.f32 %v553, 0.0
  %v558 = vmax.f32 %v554, 0.0
  %559 = vst.msk [vmem:[%s5] sm:$0xff] %vm371, %v555
  %560 = vst.msk [vmem:[%s5 + $0x8] sm:$0xff] %vm371, %v556
  %561 = vst.msk [vmem:[%s5 + $0x10] sm:$0xff] %vm371, %v557
  %562 = vst.msk [vmem:[%s5 + $0x18] sm:$0xff] %vm371, %v558
  // Predicated region
  $region22: #{res_encoder_forward.13} parent=0 // pred_check
    _
  $region23: #{res_encoder_forward.13} parent=0 // pred_check_branch
    %564 = sbr.rel (0) target = $region25
  $region24: #{res_encoder_forward.13} parent=0 // pred_region
    _
  $region25: #{res_encoder_forward.13} parent=0 // pred_fallthru
    _
  // Predicated region
  $region26: #{res_encoder_forward.13} parent=0 // pred_check
    _
  $region27: #{res_encoder_forward.13} parent=0 // pred_check_branch
    %566 = sbr.rel (0) target = $region29
  $region28: #{res_encoder_forward.13} parent=0 // pred_region
    _
  $region29: #{res_encoder_forward.13} parent=0 // pred_fallthru
    _

// kernel: res_encoder_forward.16
$region0: #{res_encoder_forward.16}
  #allocation0 [shape = 'u32[]', space=smem, size = 0x4, offset = 0x4, fixed_abs, tag = 'smem constant byte address 0x4 - core index']
  #allocation1 [shape = 'u32[72,128]{1,0:T(1,128)}', space=vmem, size = 0x9000, scoped, tag = 'internal scratch']
  %s0 = inlined_call_operand.vmem [shape: bf16[8,576], index: 0, kind: input, shape index: {}]
  %s1 = inlined_call_operand.vmem [shape: bf16[576,128], index: 1, kind: input, shape index: {}]
  %s2 = inlined_call_operand.vmem [shape: f32[1,128], index: 2, kind: input, shape index: {}]
  %s3 = inlined_call_operand.vmem [shape: f32[1,128], index: 3, kind: input, shape index: {}]
  %s4 = inlined_call_operand.vmem [shape: f32[8,128], index: 4, kind: output, shape index: {}]
  %s5 = sld [smem:[#allocation0]]
  $region26: #{res_encoder_forward.16} parent=0
    _
  %s7 = ssub.s32 1, %s5
  %s8 = scalar_select 0, %s7, %s5
  // Predicated region
  $region2: #{res_encoder_forward.16} parent=0 // pred_check
    _
  $region3: #{res_encoder_forward.16} parent=0 // pred_check_branch
    %10 = sbr.rel (0) target = $region5
  $region4: #{res_encoder_forward.16} parent=0 // pred_region
    _
  $region5: #{res_encoder_forward.16} parent=0 // pred_fallthru
    _
  // Predicated region
  $region6: #{res_encoder_forward.16} parent=0 // pred_check
    _
  $region7: #{res_encoder_forward.16} parent=0 // pred_check_branch
    %12 = sbr.rel (0) target = $region9
  $region8: #{res_encoder_forward.16} parent=0 // pred_region
    _
  $region9: #{res_encoder_forward.16} parent=0 // pred_fallthru
    _
  // Predicated region
  $region10: #{res_encoder_forward.16} parent=0 // pred_check
    _
  $region11: #{res_encoder_forward.16} parent=0 // pred_check_branch
    %14 = sbr.rel (0) target = $region13
  $region12: #{res_encoder_forward.16} parent=0 // pred_region
    _
  $region13: #{res_encoder_forward.16} parent=0 // pred_fallthru
    _
  // Predicated region
  $region14: #{res_encoder_forward.16} parent=0 // pred_check
    _
  $region15: #{res_encoder_forward.16} parent=0 // pred_check_branch
    %16 = sbr.rel (0) target = $region17
  $region16: #{res_encoder_forward.16} parent=0 // pred_region
    _
  $region17: #{res_encoder_forward.16} parent=0 // pred_fallthru
    _
  %v18 = vld [vmem:[%s0] sm:$0xff]
  %v19 = vld [vmem:[%s0 + $0x8] sm:$0xff]
  %v20 = vld [vmem:[%s0 + $0x10] sm:$0xf]
  %v21 = vld [vmem:[%s1] sm:$0xf]
  %v22 = vld [vmem:[%s1 + $0x4] sm:$0xf]
  %v23 = vld [vmem:[%s1 + $0x8] sm:$0xf]
  %v24 = vld [vmem:[%s1 + $0xc] sm:$0xf]
  %v25 = vld [vmem:[%s1 + $0x10] sm:$0xf]
  %v26 = vld [vmem:[%s1 + $0x14] sm:$0xf]
  %v27 = vld [vmem:[%s1 + $0x18] sm:$0xf]
  %v28 = vld [vmem:[%s1 + $0x1c] sm:$0xf]
  %v29 = vld [vmem:[%s1 + $0x20] sm:$0xf]
  %v30 = vld [vmem:[%s1 + $0x24] sm:$0xf]
  %v31 = vld [vmem:[%s1 + $0x28] sm:$0xf]
  %v32 = vld [vmem:[%s1 + $0x2c] sm:$0xf]
  %v33 = vld [vmem:[%s1 + $0x30] sm:$0xf]
  %v34 = vld [vmem:[%s1 + $0x34] sm:$0xf]
  %v35 = vld [vmem:[%s1 + $0x38] sm:$0xf]
  %v36 = vld [vmem:[%s1 + $0x3c] sm:$0xf]
  %v37 = vld [vmem:[%s1 + $0x40] sm:$0xf]
  %v38 = vld [vmem:[%s1 + $0x44] sm:$0xf]
  %v39 = vld [vmem:[%s1 + $0x48] sm:$0xf]
  %v40 = vld [vmem:[%s1 + $0x4c] sm:$0xf]
  %v41 = vld [vmem:[%s1 + $0x50] sm:$0xf]
  %v42 = vld [vmem:[%s1 + $0x54] sm:$0xf]
  %v43 = vld [vmem:[%s1 + $0x58] sm:$0xf]
  %v44 = vld [vmem:[%s1 + $0x5c] sm:$0xf]
  %v45 = vld [vmem:[%s1 + $0x60] sm:$0xf]
  %v46 = vld [vmem:[%s1 + $0x64] sm:$0xf]
  %v47 = vld [vmem:[%s1 + $0x68] sm:$0xf]
  %v48 = vld [vmem:[%s1 + $0x6c] sm:$0xf]
  %v49 = vld [vmem:[%s1 + $0x70] sm:$0xf]
  %v50 = vld [vmem:[%s1 + $0x74] sm:$0xf]
  %v51 = vld [vmem:[%s1 + $0x78] sm:$0xf]
  %v52 = vld [vmem:[%s1 + $0x7c] sm:$0xf]
  %v53 = vld [vmem:[%s1 + $0x80] sm:$0xf]
  %v54 = vld [vmem:[%s1 + $0x84] sm:$0xf]
  %v55 = vld [vmem:[%s1 + $0x88] sm:$0xf]
  %v56 = vld [vmem:[%s1 + $0x8c] sm:$0xf]
  %v57 = vld [vmem:[%s1 + $0x90] sm:$0xf]
  %v58 = vld [vmem:[%s1 + $0x94] sm:$0xf]
  %v59 = vld [vmem:[%s1 + $0x98] sm:$0xf]
  %v60 = vld [vmem:[%s1 + $0x9c] sm:$0xf]
  %v61 = vld [vmem:[%s1 + $0xa0] sm:$0xf]
  %v62 = vld [vmem:[%s1 + $0xa4] sm:$0xf]
  %v63 = vld [vmem:[%s1 + $0xa8] sm:$0xf]
  %v64 = vld [vmem:[%s1 + $0xac] sm:$0xf]
  %v65 = vld [vmem:[%s1 + $0xb0] sm:$0xf]
  %v66 = vld [vmem:[%s1 + $0xb4] sm:$0xf]
  %v67 = vld [vmem:[%s1 + $0xb8] sm:$0xf]
  %v68 = vld [vmem:[%s1 + $0xbc] sm:$0xf]
  %v69 = vld [vmem:[%s1 + $0xc0] sm:$0xf]
  %v70 = vld [vmem:[%s1 + $0xc4] sm:$0xf]
  %v71 = vld [vmem:[%s1 + $0xc8] sm:$0xf]
  %v72 = vld [vmem:[%s1 + $0xcc] sm:$0xf]
  %v73 = vld [vmem:[%s1 + $0xd0] sm:$0xf]
  %v74 = vld [vmem:[%s1 + $0xd4] sm:$0xf]
  %v75 = vld [vmem:[%s1 + $0xd8] sm:$0xf]
  %v76 = vld [vmem:[%s1 + $0xdc] sm:$0xf]
  %v77 = vld [vmem:[%s1 + $0xe0] sm:$0xf]
  %v78 = vld [vmem:[%s1 + $0xe4] sm:$0xf]
  %v79 = vld [vmem:[%s1 + $0xe8] sm:$0xf]
  %v80 = vld [vmem:[%s1 + $0xec] sm:$0xf]
  %v81 = vld [vmem:[%s1 + $0xf0] sm:$0xf]
  %v82 = vld [vmem:[%s1 + $0xf4] sm:$0xf]
  %v83 = vld [vmem:[%s1 + $0xf8] sm:$0xf]
  %v84 = vld [vmem:[%s1 + $0xfc] sm:$0xf]
  %v85 = vld [vmem:[%s1 + $0x100] sm:$0xf]
  %v86 = vld [vmem:[%s1 + $0x104] sm:$0xf]
  %v87 = vld [vmem:[%s1 + $0x108] sm:$0xf]
  %v88 = vld [vmem:[%s1 + $0x10c] sm:$0xf]
  %v89 = vld [vmem:[%s1 + $0x110] sm:$0xf]
  %v90 = vld [vmem:[%s1 + $0x114] sm:$0xf]
  %v91 = vld [vmem:[%s1 + $0x118] sm:$0xf]
  %v92 = vld [vmem:[%s1 + $0x11c] sm:$0xf]
  %v96 = vunpack.c.l.b16 %v18
  %v97 = vunpack.c.h.b16 %v18
  %v98 = vunpack.c.l.b16 %v19
  %v99 = vunpack.c.h.b16 %v19
  %v100 = vunpack.c.l.b16 %v20
  %v101 = vpack.c.b16 %v96, %v96
  %v102 = vpack.c.b16 %v97, %v97
  %v103 = vpack.c.b16 %v98, %v98
  %v104 = vpack.c.b16 %v99, %v99
  %v105 = vpack.c.b16 %v100, %v100
  %v182 = vunpack.c.l.b16 %v21
  %v183 = vunpack.c.l.b16 %v22
  %v184 = vunpack.c.l.b16 %v23
  %v185 = vunpack.c.l.b16 %v24
  %v186 = vunpack.c.l.b16 %v25
  %v187 = vunpack.c.l.b16 %v26
  %v188 = vunpack.c.l.b16 %v27
  %v189 = vunpack.c.l.b16 %v28
  %v190 = vunpack.c.l.b16 %v29
  %v191 = vunpack.c.l.b16 %v30
  %v192 = vunpack.c.l.b16 %v31
  %v193 = vunpack.c.l.b16 %v32
  %v194 = vunpack.c.l.b16 %v33
  %v195 = vunpack.c.l.b16 %v34
  %v196 = vunpack.c.l.b16 %v35
  %v197 = vunpack.c.l.b16 %v36
  %v198 = vunpack.c.l.b16 %v37
  %v199 = vunpack.c.l.b16 %v38
  %v200 = vunpack.c.l.b16 %v39
  %v201 = vunpack.c.l.b16 %v40
  %v202 = vunpack.c.l.b16 %v41
  %v203 = vunpack.c.l.b16 %v42
  %v204 = vunpack.c.l.b16 %v43
  %v205 = vunpack.c.l.b16 %v44
  %v206 = vunpack.c.l.b16 %v45
  %v207 = vunpack.c.l.b16 %v46
  %v208 = vunpack.c.l.b16 %v47
  %v209 = vunpack.c.l.b16 %v48
  %v210 = vunpack.c.l.b16 %v49
  %v211 = vunpack.c.l.b16 %v50
  %v212 = vunpack.c.l.b16 %v51
  %v213 = vunpack.c.l.b16 %v52
  %v214 = vunpack.c.l.b16 %v53
  %v215 = vunpack.c.l.b16 %v54
  %v216 = vunpack.c.l.b16 %v55
  %v217 = vunpack.c.l.b16 %v56
  %v218 = vunpack.c.l.b16 %v57
  %v219 = vunpack.c.l.b16 %v58
  %v220 = vunpack.c.l.b16 %v59
  %v221 = vunpack.c.l.b16 %v60
  %v222 = vunpack.c.l.b16 %v61
  %v223 = vunpack.c.l.b16 %v62
  %v224 = vunpack.c.l.b16 %v63
  %v225 = vunpack.c.l.b16 %v64
  %v226 = vunpack.c.l.b16 %v65
  %v227 = vunpack.c.l.b16 %v66
  %v228 = vunpack.c.l.b16 %v67
  %v229 = vunpack.c.l.b16 %v68
  %v230 = vunpack.c.l.b16 %v69
  %v231 = vunpack.c.l.b16 %v70
  %v232 = vunpack.c.l.b16 %v71
  %v233 = vunpack.c.l.b16 %v72
  %v234 = vunpack.c.l.b16 %v73
  %v235 = vunpack.c.l.b16 %v74
  %v236 = vunpack.c.l.b16 %v75
  %v237 = vunpack.c.l.b16 %v76
  %v238 = vunpack.c.l.b16 %v77
  %v239 = vunpack.c.l.b16 %v78
  %v240 = vunpack.c.l.b16 %v79
  %v241 = vunpack.c.l.b16 %v80
  %v242 = vunpack.c.l.b16 %v81
  %v243 = vunpack.c.l.b16 %v82
  %v244 = vunpack.c.l.b16 %v83
  %v245 = vunpack.c.l.b16 %v84
  %v246 = vunpack.c.l.b16 %v85
  %v247 = vunpack.c.l.b16 %v86
  %v248 = vunpack.c.l.b16 %v87
  %v249 = vunpack.c.l.b16 %v88
  %v250 = vunpack.c.l.b16 %v89
  %v251 = vunpack.c.l.b16 %v90
  %v252 = vunpack.c.l.b16 %v91
  %v253 = vunpack.c.l.b16 %v92
  %v254 = vpack.c.b16 %v183, %v182
  %v255 = vpack.c.b16 %v185, %v184
  %v256 = vpack.c.b16 %v187, %v186
  %v257 = vpack.c.b16 %v189, %v188
  %v258 = vpack.c.b16 %v191, %v190
  %v259 = vpack.c.b16 %v193, %v192
  %v260 = vpack.c.b16 %v195, %v194
  %v261 = vpack.c.b16 %v197, %v196
  %v262 = vpack.c.b16 %v199, %v198
  %v263 = vpack.c.b16 %v201, %v200
  %v264 = vpack.c.b16 %v203, %v202
  %v265 = vpack.c.b16 %v205, %v204
  %v266 = vpack.c.b16 %v207, %v206
  %v267 = vpack.c.b16 %v209, %v208
  %v268 = vpack.c.b16 %v211, %v210
  %v269 = vpack.c.b16 %v213, %v212
  %v270 = vpack.c.b16 %v215, %v214
  %v271 = vpack.c.b16 %v217, %v216
  %v272 = vpack.c.b16 %v219, %v218
  %v273 = vpack.c.b16 %v221, %v220
  %v274 = vpack.c.b16 %v223, %v222
  %v275 = vpack.c.b16 %v225, %v224
  %v276 = vpack.c.b16 %v227, %v226
  %v277 = vpack.c.b16 %v229, %v228
  %v278 = vpack.c.b16 %v231, %v230
  %v279 = vpack.c.b16 %v233, %v232
  %v280 = vpack.c.b16 %v235, %v234
  %v281 = vpack.c.b16 %v237, %v236
  %v282 = vpack.c.b16 %v239, %v238
  %v283 = vpack.c.b16 %v241, %v240
  %v284 = vpack.c.b16 %v243, %v242
  %v285 = vpack.c.b16 %v245, %v244
  %v286 = vpack.c.b16 %v247, %v246
  %v287 = vpack.c.b16 %v249, %v248
  %v288 = vpack.c.b16 %v251, %v250
  %v289 = vpack.c.b16 %v253, %v252
  %vm326 = vcmask 523264
  %v328 = vsel %vm326, %v105, 0
  %330 = vmatpush.bf16.msra.mxu0 %v261
  %331 = vmatpush.bf16.msra.mxu0 %v260
  %332 = vmatpush.bf16.msra.mxu0 %v259
  %333 = vmatpush.bf16.msra.mxu0 %v258
  %334 = vmatpush.bf16.msra.mxu0 %v257
  %335 = vmatpush.bf16.msra.mxu0 %v256
  %336 = vmatpush.bf16.msra.mxu0 %v255
  %337 = vmatpush.bf16.msra.mxu0 %v254
  %338 = vmatmul.bf16.gmra.mxu0 %v101
  %v339 = vpop.f32.mrf.mxu0
  %v340 = vadd.f32 0.0, %v339
  %v341 = vpop.f32.mrf.mxu0
  %342 = vdwg.mxu0
  %343 = vmatpush.bf16.msra.mxu0 %v269
  %344 = vmatpush.bf16.msra.mxu0 %v268
  %345 = vmatpush.bf16.msra.mxu0 %v267
  %346 = vmatpush.bf16.msra.mxu0 %v266
  %347 = vmatpush.bf16.msra.mxu0 %v265
  %348 = vmatpush.bf16.msra.mxu0 %v264
  %349 = vmatpush.bf16.msra.mxu0 %v263
  %350 = vmatpush.bf16.msra.mxu0 %v262
  %351 = vmatmul.bf16.gmra.mxu0 %v102
  %v352 = vpop.f32.mrf.mxu0
  %v353 = vadd.f32 %v340, %v352
  %v354 = vpop.f32.mrf.mxu0
  %355 = vdwg.mxu0
  %356 = vmatpush.bf16.msra.mxu0 %v277
  %357 = vmatpush.bf16.msra.mxu0 %v276
  %358 = vmatpush.bf16.msra.mxu0 %v275
  %359 = vmatpush.bf16.msra.mxu0 %v274
  %360 = vmatpush.bf16.msra.mxu0 %v273
  %361 = vmatpush.bf16.msra.mxu0 %v272
  %362 = vmatpush.bf16.msra.mxu0 %v271
  %363 = vmatpush.bf16.msra.mxu0 %v270
  %364 = vmatmul.bf16.gmra.mxu0 %v103
  %v365 = vpop.f32.mrf.mxu0
  %v366 = vadd.f32 %v353, %v365
  %v367 = vpop.f32.mrf.mxu0
  %368 = vdwg.mxu0
  %369 = vmatpush.bf16.msra.mxu0 %v285
  %370 = vmatpush.bf16.msra.mxu0 %v284
  %371 = vmatpush.bf16.msra.mxu0 %v283
  %372 = vmatpush.bf16.msra.mxu0 %v282
  %373 = vmatpush.bf16.msra.mxu0 %v281
  %374 = vmatpush.bf16.msra.mxu0 %v280
  %375 = vmatpush.bf16.msra.mxu0 %v279
  %376 = vmatpush.bf16.msra.mxu0 %v278
  %377 = vmatmul.bf16.gmra.mxu0 %v104
  %v378 = vpop.f32.mrf.mxu0
  %v379 = vadd.f32 %v366, %v378
  %v380 = vpop.f32.mrf.mxu0
  %381 = vdwg.mxu0
  %382 = vmatpush.bf16.msra.mxu0 0
  %383 = vmatpush.bf16.msra.mxu0 0
  %384 = vmatpush.bf16.msra.mxu0 0
  %385 = vmatpush.bf16.msra.mxu0 0
  %386 = vmatpush.bf16.msra.mxu0 %v289
  %387 = vmatpush.bf16.msra.mxu0 %v288
  %388 = vmatpush.bf16.msra.mxu0 %v287
  %389 = vmatpush.bf16.msra.mxu0 %v286
  %390 = vmatmul.bf16.gmra.mxu0 %v328
  %v391 = vpop.f32.mrf.mxu0
  %v392 = vadd.f32 %v379, %v391
  %v393 = vpop.f32.mrf.mxu0
  %394 = vdwg.mxu0
  %v395 = vld [vmem:[%s2] sm:$0x1]
  %v396 = vld [vmem:[%s3] sm:$0x1]
  %v397 = vrot.slane %v392, 4
  %v398 = vadd.f32 %v392, %v397
  %v399 = vrot.slane %v398, 2
  %v400 = vadd.f32 %v398, %v399
  %v401 = vrot.slane %v400, 1
  %v402 = vadd.f32 %v400, %v401
  %v403 = vrcp.pop 8.0
  %v404 = vmul.f32 8.0, %v403
  %v405 = vsub.f32 1.0, %v404
  %v406 = vmul.f32 %v403, %v405
  %v407 = vadd.f32 %v403, %v406
  %vm408 = vweird.f32 %v403
  %v409 = vsel %vm408, %v403, %v407
  %v410 = vmul.f32 %v402, %v409
  %v411 = vsub.f32 %v392, %v410
  %v412 = vmul.f32 %v411, %v411
  %v413 = vrot.slane %v412, 4
  %v414 = vadd.f32 %v412, %v413
  %v415 = vrot.slane %v414, 2
  %v416 = vadd.f32 %v414, %v415
  %v417 = vrot.slane %v416, 1
  %v418 = vadd.f32 %v416, %v417
  %v419 = vmul.f32 %v418, %v409
  %v420 = vadd.f32 %v419, 1e-05
  %v421 = vrsqrt.pop %v420
  %v422 = vmul.f32 %v421, %v420
  %v423 = vmul.f32 %v422, %v421
  %v424 = vmul.f32 0.5, %v423
  %v425 = vsub.f32 1.5, %v424
  %v426 = vmul.f32 %v421, %v425
  %vm427 = vweird.f32 %v420
  %vm428 = vweird.f32 %v421
  %vm429 = vmor %vm427, %vm428
  %v430 = vsel %vm429, %v421, %v426
  %v431 = vmul.f32 %v411, %v430
  %v433 = vperm.slane %v395, 0
  %v435 = vmul.f32 %v431, %v433
  %v437 = vperm.slane %v396, 0
  %v439 = vadd.f32 %v435, %v437
  %v440 = vmax.f32 %v439, 0.0
  %441 = vst [vmem:[%s4] sm:$0xff] %v440
  // Predicated region
  $region18: #{res_encoder_forward.16} parent=0 // pred_check
    _
  $region19: #{res_encoder_forward.16} parent=0 // pred_check_branch
    %443 = sbr.rel (0) target = $region21
  $region20: #{res_encoder_forward.16} parent=0 // pred_region
    _
  $region21: #{res_encoder_forward.16} parent=0 // pred_fallthru
    _
  // Predicated region
  $region22: #{res_encoder_forward.16} parent=0 // pred_check
    _
  $region23: #{res_encoder_forward.16} parent=0 // pred_check_branch
    %445 = sbr.rel (0) target = $region25
  $region24: #{res_encoder_forward.16} parent=0 // pred_region
    _
  $region25: #{res_encoder_forward.16} parent=0 // pred_fallthru
    _

// kernel: res_encoder_forward.18
$region0: #{res_encoder_forward.18}
  #allocation0 [shape = 'u32[]', space=smem, size = 0x4, offset = 0x4, fixed_abs, tag = 'smem constant byte address 0x4 - core index']
  #allocation1 [shape = 'u32[72,128]{1,0:T(1,128)}', space=vmem, size = 0x9000, scoped, tag = 'internal scratch']
  %s0 = inlined_call_operand.vmem [shape: bf16[8,1152], index: 0, kind: input, shape index: {}]
  %s1 = inlined_call_operand.vmem [shape: bf16[1152,128], index: 1, kind: input, shape index: {}]
  %s2 = inlined_call_operand.vmem [shape: f32[1,128], index: 2, kind: input, shape index: {}]
  %s3 = inlined_call_operand.vmem [shape: f32[1,128], index: 3, kind: input, shape index: {}]
  %s4 = inlined_call_operand.vmem [shape: f32[8,128], index: 4, kind: output, shape index: {}]
  %s5 = sld [smem:[#allocation0]]
  $region26: #{res_encoder_forward.18} parent=0
    _
  %s7 = ssub.s32 1, %s5
  %s8 = scalar_select 0, %s7, %s5
  // Predicated region
  $region2: #{res_encoder_forward.18} parent=0 // pred_check
    _
  $region3: #{res_encoder_forward.18} parent=0 // pred_check_branch
    %10 = sbr.rel (0) target = $region5
  $region4: #{res_encoder_forward.18} parent=0 // pred_region
    _
  $region5: #{res_encoder_forward.18} parent=0 // pred_fallthru
    _
  // Predicated region
  $region6: #{res_encoder_forward.18} parent=0 // pred_check
    _
  $region7: #{res_encoder_forward.18} parent=0 // pred_check_branch
    %12 = sbr.rel (0) target = $region9
  $region8: #{res_encoder_forward.18} parent=0 // pred_region
    _
  $region9: #{res_encoder_forward.18} parent=0 // pred_fallthru
    _
  // Predicated region
  $region10: #{res_encoder_forward.18} parent=0 // pred_check
    _
  $region11: #{res_encoder_forward.18} parent=0 // pred_check_branch
    %14 = sbr.rel (0) target = $region13
  $region12: #{res_encoder_forward.18} parent=0 // pred_region
    _
  $region13: #{res_encoder_forward.18} parent=0 // pred_fallthru
    _
  // Predicated region
  $region14: #{res_encoder_forward.18} parent=0 // pred_check
    _
  $region15: #{res_encoder_forward.18} parent=0 // pred_check_branch
    %16 = sbr.rel (0) target = $region17
  $region16: #{res_encoder_forward.18} parent=0 // pred_region
    _
  $region17: #{res_encoder_forward.18} parent=0 // pred_fallthru
    _
  %v17 = vld [vmem:[%s0] sm:$0xff]
  %v18 = vld [vmem:[%s0 + $0x8] sm:$0xff]
  %v19 = vld [vmem:[%s0 + $0x10] sm:$0xff]
  %v20 = vld [vmem:[%s0 + $0x18] sm:$0xff]
  %v21 = vld [vmem:[%s0 + $0x20] sm:$0xf]
  %v22 = vld [vmem:[%s1] sm:$0xf]
  %v23 = vld [vmem:[%s1 + $0x4] sm:$0xf]
  %v24 = vld [vmem:[%s1 + $0x8] sm:$0xf]
  %v25 = vld [vmem:[%s1 + $0xc] sm:$0xf]
  %v26 = vld [vmem:[%s1 + $0x10] sm:$0xf]
  %v27 = vld [vmem:[%s1 + $0x14] sm:$0xf]
  %v28 = vld [vmem:[%s1 + $0x18] sm:$0xf]
  %v29 = vld [vmem:[%s1 + $0x1c] sm:$0xf]
  %v30 = vld [vmem:[%s1 + $0x20] sm:$0xf]
  %v31 = vld [vmem:[%s1 + $0x24] sm:$0xf]
  %v32 = vld [vmem:[%s1 + $0x28] sm:$0xf]
  %v33 = vld [vmem:[%s1 + $0x2c] sm:$0xf]
  %v34 = vld [vmem:[%s1 + $0x30] sm:$0xf]
  %v35 = vld [vmem:[%s1 + $0x34] sm:$0xf]
  %v36 = vld [vmem:[%s1 + $0x38] sm:$0xf]
  %v37 = vld [vmem:[%s1 + $0x3c] sm:$0xf]
  %v38 = vld [vmem:[%s1 + $0x40] sm:$0xf]
  %v39 = vld [vmem:[%s1 + $0x44] sm:$0xf]
  %v40 = vld [vmem:[%s1 + $0x48] sm:$0xf]
  %v41 = vld [vmem:[%s1 + $0x4c] sm:$0xf]
  %v42 = vld [vmem:[%s1 + $0x50] sm:$0xf]
  %v43 = vld [vmem:[%s1 + $0x54] sm:$0xf]
  %v44 = vld [vmem:[%s1 + $0x58] sm:$0xf]
  %v45 = vld [vmem:[%s1 + $0x5c] sm:$0xf]
  %v46 = vld [vmem:[%s1 + $0x60] sm:$0xf]
  %v47 = vld [vmem:[%s1 + $0x64] sm:$0xf]
  %v48 = vld [vmem:[%s1 + $0x68] sm:$0xf]
  %v49 = vld [vmem:[%s1 + $0x6c] sm:$0xf]
  %v50 = vld [vmem:[%s1 + $0x70] sm:$0xf]
  %v51 = vld [vmem:[%s1 + $0x74] sm:$0xf]
  %v52 = vld [vmem:[%s1 + $0x78] sm:$0xf]
  %v53 = vld [vmem:[%s1 + $0x7c] sm:$0xf]
  %v54 = vld [vmem:[%s1 + $0x80] sm:$0xf]
  %v55 = vld [vmem:[%s1 + $0x84] sm:$0xf]
  %v56 = vld [vmem:[%s1 + $0x88] sm:$0xf]
  %v57 = vld [vmem:[%s1 + $0x8c] sm:$0xf]
  %v58 = vld [vmem:[%s1 + $0x90] sm:$0xf]
  %v59 = vld [vmem:[%s1 + $0x94] sm:$0xf]
  %v60 = vld [vmem:[%s1 + $0x98] sm:$0xf]
  %v61 = vld [vmem:[%s1 + $0x9c] sm:$0xf]
  %v62 = vld [vmem:[%s1 + $0xa0] sm:$0xf]
  %v63 = vld [vmem:[%s1 + $0xa4] sm:$0xf]
  %v64 = vld [vmem:[%s1 + $0xa8] sm:$0xf]
  %v65 = vld [vmem:[%s1 + $0xac] sm:$0xf]
  %v66 = vld [vmem:[%s1 + $0xb0] sm:$0xf]
  %v67 = vld [vmem:[%s1 + $0xb4] sm:$0xf]
  %v68 = vld [vmem:[%s1 + $0xb8] sm:$0xf]
  %v69 = vld [vmem:[%s1 + $0xbc] sm:$0xf]
  %v70 = vld [vmem:[%s1 + $0xc0] sm:$0xf]
  %v71 = vld [vmem:[%s1 + $0xc4] sm:$0xf]
  %v72 = vld [vmem:[%s1 + $0xc8] sm:$0xf]
  %v73 = vld [vmem:[%s1 + $0xcc] sm:$0xf]
  %v74 = vld [vmem:[%s1 + $0xd0] sm:$0xf]
  %v75 = vld [vmem:[%s1 + $0xd4] sm:$0xf]
  %v76 = vld [vmem:[%s1 + $0xd8] sm:$0xf]
  %v77 = vld [vmem:[%s1 + $0xdc] sm:$0xf]
  %v78 = vld [vmem:[%s1 + $0xe0] sm:$0xf]
  %v79 = vld [vmem:[%s1 + $0xe4] sm:$0xf]
  %v80 = vld [vmem:[%s1 + $0xe8] sm:$0xf]
  %v81 = vld [vmem:[%s1 + $0xec] sm:$0xf]
  %v82 = vld [vmem:[%s1 + $0xf0] sm:$0xf]
  %v83 = vld [vmem:[%s1 + $0xf4] sm:$0xf]
  %v84 = vld [vmem:[%s1 + $0xf8] sm:$0xf]
  %v85 = vld [vmem:[%s1 + $0xfc] sm:$0xf]
  %v86 = vld [vmem:[%s1 + $0x100] sm:$0xf]
  %v87 = vld [vmem:[%s1 + $0x104] sm:$0xf]
  %v88 = vld [vmem:[%s1 + $0x108] sm:$0xf]
  %v89 = vld [vmem:[%s1 + $0x10c] sm:$0xf]
  %v90 = vld [vmem:[%s1 + $0x110] sm:$0xf]
  %v91 = vld [vmem:[%s1 + $0x114] sm:$0xf]
  %v92 = vld [vmem:[%s1 + $0x118] sm:$0xf]
  %v93 = vld [vmem:[%s1 + $0x11c] sm:$0xf]
  %v94 = vld [vmem:[%s1 + $0x120] sm:$0xf]
  %v95 = vld [vmem:[%s1 + $0x124] sm:$0xf]
  %v96 = vld [vmem:[%s1 + $0x128] sm:$0xf]
  %v97 = vld [vmem:[%s1 + $0x12c] sm:$0xf]
  %v98 = vld [vmem:[%s1 + $0x130] sm:$0xf]
  %v99 = vld [vmem:[%s1 + $0x134] sm:$0xf]
  %v100 = vld [vmem:[%s1 + $0x138] sm:$0xf]
  %v101 = vld [vmem:[%s1 + $0x13c] sm:$0xf]
  %v102 = vld [vmem:[%s1 + $0x140] sm:$0xf]
  %v103 = vld [vmem:[%s1 + $0x144] sm:$0xf]
  %v104 = vld [vmem:[%s1 + $0x148] sm:$0xf]
  %v105 = vld [vmem:[%s1 + $0x14c] sm:$0xf]
  %v106 = vld [vmem:[%s1 + $0x150] sm:$0xf]
  %v107 = vld [vmem:[%s1 + $0x154] sm:$0xf]
  %v108 = vld [vmem:[%s1 + $0x158] sm:$0xf]
  %v109 = vld [vmem:[%s1 + $0x15c] sm:$0xf]
  %v110 = vld [vmem:[%s1 + $0x160] sm:$0xf]
  %v111 = vld [vmem:[%s1 + $0x164] sm:$0xf]
  %v112 = vld [vmem:[%s1 + $0x168] sm:$0xf]
  %v113 = vld [vmem:[%s1 + $0x16c] sm:$0xf]
  %v114 = vld [vmem:[%s1 + $0x170] sm:$0xf]
  %v115 = vld [vmem:[%s1 + $0x174] sm:$0xf]
  %v116 = vld [vmem:[%s1 + $0x178] sm:$0xf]
  %v117 = vld [vmem:[%s1 + $0x17c] sm:$0xf]
  %v118 = vld [vmem:[%s1 + $0x180] sm:$0xf]
  %v119 = vld [vmem:[%s1 + $0x184] sm:$0xf]
  %v120 = vld [vmem:[%s1 + $0x188] sm:$0xf]
  %v121 = vld [vmem:[%s1 + $0x18c] sm:$0xf]
  %v122 = vld [vmem:[%s1 + $0x190] sm:$0xf]
  %v123 = vld [vmem:[%s1 + $0x194] sm:$0xf]
  %v124 = vld [vmem:[%s1 + $0x198] sm:$0xf]
  %v125 = vld [vmem:[%s1 + $0x19c] sm:$0xf]
  %v126 = vld [vmem:[%s1 + $0x1a0] sm:$0xf]
  %v127 = vld [vmem:[%s1 + $0x1a4] sm:$0xf]
  %v128 = vld [vmem:[%s1 + $0x1a8] sm:$0xf]
  %v129 = vld [vmem:[%s1 + $0x1ac] sm:$0xf]
  %v130 = vld [vmem:[%s1 + $0x1b0] sm:$0xf]
  %v131 = vld [vmem:[%s1 + $0x1b4] sm:$0xf]
  %v132 = vld [vmem:[%s1 + $0x1b8] sm:$0xf]
  %v133 = vld [vmem:[%s1 + $0x1bc] sm:$0xf]
  %v134 = vld [vmem:[%s1 + $0x1c0] sm:$0xf]
  %v135 = vld [vmem:[%s1 + $0x1c4] sm:$0xf]
  %v136 = vld [vmem:[%s1 + $0x1c8] sm:$0xf]
  %v137 = vld [vmem:[%s1 + $0x1cc] sm:$0xf]
  %v138 = vld [vmem:[%s1 + $0x1d0] sm:$0xf]
  %v139 = vld [vmem:[%s1 + $0x1d4] sm:$0xf]
  %v140 = vld [vmem:[%s1 + $0x1d8] sm:$0xf]
  %v141 = vld [vmem:[%s1 + $0x1dc] sm:$0xf]
  %v142 = vld [vmem:[%s1 + $0x1e0] sm:$0xf]
  %v143 = vld [vmem:[%s1 + $0x1e4] sm:$0xf]
  %v144 = vld [vmem:[%s1 + $0x1e8] sm:$0xf]
  %v145 = vld [vmem:[%s1 + $0x1ec] sm:$0xf]
  %v146 = vld [vmem:[%s1 + $0x1f0] sm:$0xf]
  %v147 = vld [vmem:[%s1 + $0x1f4] sm:$0xf]
  %v148 = vld [vmem:[%s1 + $0x1f8] sm:$0xf]
  %v149 = vld [vmem:[%s1 + $0x1fc] sm:$0xf]
  %v150 = vld [vmem:[%s1 + $0x200] sm:$0xf]
  %v151 = vld [vmem:[%s1 + $0x204] sm:$0xf]
  %v152 = vld [vmem:[%s1 + $0x208] sm:$0xf]
  %v153 = vld [vmem:[%s1 + $0x20c] sm:$0xf]
  %v154 = vld [vmem:[%s1 + $0x210] sm:$0xf]
  %v155 = vld [vmem:[%s1 + $0x214] sm:$0xf]
  %v156 = vld [vmem:[%s1 + $0x218] sm:$0xf]
  %v157 = vld [vmem:[%s1 + $0x21c] sm:$0xf]
  %v158 = vld [vmem:[%s1 + $0x220] sm:$0xf]
  %v159 = vld [vmem:[%s1 + $0x224] sm:$0xf]
  %v160 = vld [vmem:[%s1 + $0x228] sm:$0xf]
  %v161 = vld [vmem:[%s1 + $0x22c] sm:$0xf]
  %v162 = vld [vmem:[%s1 + $0x230] sm:$0xf]
  %v163 = vld [vmem:[%s1 + $0x234] sm:$0xf]
  %v164 = vld [vmem:[%s1 + $0x238] sm:$0xf]
  %v165 = vld [vmem:[%s1 + $0x23c] sm:$0xf]
  %v171 = vunpack.c.l.b16 %v17
  %v172 = vunpack.c.h.b16 %v17
  %v173 = vunpack.c.l.b16 %v18
  %v174 = vunpack.c.h.b16 %v18
  %v175 = vunpack.c.l.b16 %v19
  %v176 = vunpack.c.h.b16 %v19
  %v177 = vunpack.c.l.b16 %v20
  %v178 = vunpack.c.h.b16 %v20
  %v179 = vunpack.c.l.b16 %v21
  %v180 = vpack.c.b16 %v171, %v171
  %v181 = vpack.c.b16 %v172, %v172
  %v182 = vpack.c.b16 %v173, %v173
  %v183 = vpack.c.b16 %v174, %v174
  %v184 = vpack.c.b16 %v175, %v175
  %v185 = vpack.c.b16 %v176, %v176
  %v186 = vpack.c.b16 %v177, %v177
  %v187 = vpack.c.b16 %v178, %v178
  %v188 = vpack.c.b16 %v179, %v179
  %v342 = vunpack.c.l.b16 %v22
  %v343 = vunpack.c.l.b16 %v23
  %v344 = vunpack.c.l.b16 %v24
  %v345 = vunpack.c.l.b16 %v25
  %v346 = vunpack.c.l.b16 %v26
  %v347 = vunpack.c.l.b16 %v27
  %v348 = vunpack.c.l.b16 %v28
  %v349 = vunpack.c.l.b16 %v29
  %v350 = vunpack.c.l.b16 %v30
  %v351 = vunpack.c.l.b16 %v31
  %v352 = vunpack.c.l.b16 %v32
  %v353 = vunpack.c.l.b16 %v33
  %v354 = vunpack.c.l.b16 %v34
  %v355 = vunpack.c.l.b16 %v35
  %v356 = vunpack.c.l.b16 %v36
  %v357 = vunpack.c.l.b16 %v37
  %v358 = vunpack.c.l.b16 %v38
  %v359 = vunpack.c.l.b16 %v39
  %v360 = vunpack.c.l.b16 %v40
  %v361 = vunpack.c.l.b16 %v41
  %v362 = vunpack.c.l.b16 %v42
  %v363 = vunpack.c.l.b16 %v43
  %v364 = vunpack.c.l.b16 %v44
  %v365 = vunpack.c.l.b16 %v45
  %v366 = vunpack.c.l.b16 %v46
  %v367 = vunpack.c.l.b16 %v47
  %v368 = vunpack.c.l.b16 %v48
  %v369 = vunpack.c.l.b16 %v49
  %v370 = vunpack.c.l.b16 %v50
  %v371 = vunpack.c.l.b16 %v51
  %v372 = vunpack.c.l.b16 %v52
  %v373 = vunpack.c.l.b16 %v53
  %v374 = vunpack.c.l.b16 %v54
  %v375 = vunpack.c.l.b16 %v55
  %v376 = vunpack.c.l.b16 %v56
  %v377 = vunpack.c.l.b16 %v57
  %v378 = vunpack.c.l.b16 %v58
  %v379 = vunpack.c.l.b16 %v59
  %v380 = vunpack.c.l.b16 %v60
  %v381 = vunpack.c.l.b16 %v61
  %v382 = vunpack.c.l.b16 %v62
  %v383 = vunpack.c.l.b16 %v63
  %v384 = vunpack.c.l.b16 %v64
  %v385 = vunpack.c.l.b16 %v65
  %v386 = vunpack.c.l.b16 %v66
  %v387 = vunpack.c.l.b16 %v67
  %v388 = vunpack.c.l.b16 %v68
  %v389 = vunpack.c.l.b16 %v69
  %v390 = vunpack.c.l.b16 %v70
  %v391 = vunpack.c.l.b16 %v71
  %v392 = vunpack.c.l.b16 %v72
  %v393 = vunpack.c.l.b16 %v73
  %v394 = vunpack.c.l.b16 %v74
  %v395 = vunpack.c.l.b16 %v75
  %v396 = vunpack.c.l.b16 %v76
  %v397 = vunpack.c.l.b16 %v77
  %v398 = vunpack.c.l.b16 %v78
  %v399 = vunpack.c.l.b16 %v79
  %v400 = vunpack.c.l.b16 %v80
  %v401 = vunpack.c.l.b16 %v81
  %v402 = vunpack.c.l.b16 %v82
  %v403 = vunpack.c.l.b16 %v83
  %v404 = vunpack.c.l.b16 %v84
  %v405 = vunpack.c.l.b16 %v85
  %v406 = vunpack.c.l.b16 %v86
  %v407 = vunpack.c.l.b16 %v87
  %v408 = vunpack.c.l.b16 %v88
  %v409 = vunpack.c.l.b16 %v89
  %v410 = vunpack.c.l.b16 %v90
  %v411 = vunpack.c.l.b16 %v91
  %v412 = vunpack.c.l.b16 %v92
  %v413 = vunpack.c.l.b16 %v93
  %v414 = vunpack.c.l.b16 %v94
  %v415 = vunpack.c.l.b16 %v95
  %v416 = vunpack.c.l.b16 %v96
  %v417 = vunpack.c.l.b16 %v97
  %v418 = vunpack.c.l.b16 %v98
  %v419 = vunpack.c.l.b16 %v99
  %v420 = vunpack.c.l.b16 %v100
  %v421 = vunpack.c.l.b16 %v101
  %v422 = vunpack.c.l.b16 %v102
  %v423 = vunpack.c.l.b16 %v103
  %v424 = vunpack.c.l.b16 %v104
  %v425 = vunpack.c.l.b16 %v105
  %v426 = vunpack.c.l.b16 %v106
  %v427 = vunpack.c.l.b16 %v107
  %v428 = vunpack.c.l.b16 %v108
  %v429 = vunpack.c.l.b16 %v109
  %v430 = vunpack.c.l.b16 %v110
  %v431 = vunpack.c.l.b16 %v111
  %v432 = vunpack.c.l.b16 %v112
  %v433 = vunpack.c.l.b16 %v113
  %v434 = vunpack.c.l.b16 %v114
  %v435 = vunpack.c.l.b16 %v115
  %v436 = vunpack.c.l.b16 %v116
  %v437 = vunpack.c.l.b16 %v117
  %v438 = vunpack.c.l.b16 %v118
  %v439 = vunpack.c.l.b16 %v119
  %v440 = vunpack.c.l.b16 %v120
  %v441 = vunpack.c.l.b16 %v121
  %v442 = vunpack.c.l.b16 %v122
  %v443 = vunpack.c.l.b16 %v123
  %v444 = vunpack.c.l.b16 %v124
  %v445 = vunpack.c.l.b16 %v125
  %v446 = vunpack.c.l.b16 %v126
  %v447 = vunpack.c.l.b16 %v127
  %v448 = vunpack.c.l.b16 %v128
  %v449 = vunpack.c.l.b16 %v129
  %v450 = vunpack.c.l.b16 %v130
  %v451 = vunpack.c.l.b16 %v131
  %v452 = vunpack.c.l.b16 %v132
  %v453 = vunpack.c.l.b16 %v133
  %v454 = vunpack.c.l.b16 %v134
  %v455 = vunpack.c.l.b16 %v135
  %v456 = vunpack.c.l.b16 %v136
  %v457 = vunpack.c.l.b16 %v137
  %v458 = vunpack.c.l.b16 %v138
  %v459 = vunpack.c.l.b16 %v139
  %v460 = vunpack.c.l.b16 %v140
  %v461 = vunpack.c.l.b16 %v141
  %v462 = vunpack.c.l.b16 %v142
  %v463 = vunpack.c.l.b16 %v143
  %v464 = vunpack.c.l.b16 %v144
  %v465 = vunpack.c.l.b16 %v145
  %v466 = vunpack.c.l.b16 %v146
  %v467 = vunpack.c.l.b16 %v147
  %v468 = vunpack.c.l.b16 %v148
  %v469 = vunpack.c.l.b16 %v149
  %v470 = vunpack.c.l.b16 %v150
  %v471 = vunpack.c.l.b16 %v151
  %v472 = vunpack.c.l.b16 %v152
  %v473 = vunpack.c.l.b16 %v153
  %v474 = vunpack.c.l.b16 %v154
  %v475 = vunpack.c.l.b16 %v155
  %v476 = vunpack.c.l.b16 %v156
  %v477 = vunpack.c.l.b16 %v157
  %v478 = vunpack.c.l.b16 %v158
  %v479 = vunpack.c.l.b16 %v159
  %v480 = vunpack.c.l.b16 %v160
  %v481 = vunpack.c.l.b16 %v161
  %v482 = vunpack.c.l.b16 %v162
  %v483 = vunpack.c.l.b16 %v163
  %v484 = vunpack.c.l.b16 %v164
  %v485 = vunpack.c.l.b16 %v165
  %v486 = vpack.c.b16 %v343, %v342
  %v487 = vpack.c.b16 %v345, %v344
  %v488 = vpack.c.b16 %v347, %v346
  %v489 = vpack.c.b16 %v349, %v348
  %v490 = vpack.c.b16 %v351, %v350
  %v491 = vpack.c.b16 %v353, %v352
  %v492 = vpack.c.b16 %v355, %v354
  %v493 = vpack.c.b16 %v357, %v356
  %v494 = vpack.c.b16 %v359, %v358
  %v495 = vpack.c.b16 %v361, %v360
  %v496 = vpack.c.b16 %v363, %v362
  %v497 = vpack.c.b16 %v365, %v364
  %v498 = vpack.c.b16 %v367, %v366
  %v499 = vpack.c.b16 %v369, %v368
  %v500 = vpack.c.b16 %v371, %v370
  %v501 = vpack.c.b16 %v373, %v372
  %v502 = vpack.c.b16 %v375, %v374
  %v503 = vpack.c.b16 %v377, %v376
  %v504 = vpack.c.b16 %v379, %v378
  %v505 = vpack.c.b16 %v381, %v380
  %v506 = vpack.c.b16 %v383, %v382
  %v507 = vpack.c.b16 %v385, %v384
  %v508 = vpack.c.b16 %v387, %v386
  %v509 = vpack.c.b16 %v389, %v388
  %v510 = vpack.c.b16 %v391, %v390
  %v511 = vpack.c.b16 %v393, %v392
  %v512 = vpack.c.b16 %v395, %v394
  %v513 = vpack.c.b16 %v397, %v396
  %v514 = vpack.c.b16 %v399, %v398
  %v515 = vpack.c.b16 %v401, %v400
  %v516 = vpack.c.b16 %v403, %v402
  %v517 = vpack.c.b16 %v405, %v404
  %v518 = vpack.c.b16 %v407, %v406
  %v519 = vpack.c.b16 %v409, %v408
  %v520 = vpack.c.b16 %v411, %v410
  %v521 = vpack.c.b16 %v413, %v412
  %v522 = vpack.c.b16 %v415, %v414
  %v523 = vpack.c.b16 %v417, %v416
  %v524 = vpack.c.b16 %v419, %v418
  %v525 = vpack.c.b16 %v421, %v420
  %v526 = vpack.c.b16 %v423, %v422
  %v527 = vpack.c.b16 %v425, %v424
  %v528 = vpack.c.b16 %v427, %v426
  %v529 = vpack.c.b16 %v429, %v428
  %v530 = vpack.c.b16 %v431, %v430
  %v531 = vpack.c.b16 %v433, %v432
  %v532 = vpack.c.b16 %v435, %v434
  %v533 = vpack.c.b16 %v437, %v436
  %v534 = vpack.c.b16 %v439, %v438
  %v535 = vpack.c.b16 %v441, %v440
  %v536 = vpack.c.b16 %v443, %v442
  %v537 = vpack.c.b16 %v445, %v444
  %v538 = vpack.c.b16 %v447, %v446
  %v539 = vpack.c.b16 %v449, %v448
  %v540 = vpack.c.b16 %v451, %v450
  %v541 = vpack.c.b16 %v453, %v452
  %v542 = vpack.c.b16 %v455, %v454
  %v543 = vpack.c.b16 %v457, %v456
  %v544 = vpack.c.b16 %v459, %v458
  %v545 = vpack.c.b16 %v461, %v460
  %v546 = vpack.c.b16 %v463, %v462
  %v547 = vpack.c.b16 %v465, %v464
  %v548 = vpack.c.b16 %v467, %v466
  %v549 = vpack.c.b16 %v469, %v468
  %v550 = vpack.c.b16 %v471, %v470
  %v551 = vpack.c.b16 %v473, %v472
  %v552 = vpack.c.b16 %v475, %v474
  %v553 = vpack.c.b16 %v477, %v476
  %v554 = vpack.c.b16 %v479, %v478
  %v555 = vpack.c.b16 %v481, %v480
  %v556 = vpack.c.b16 %v483, %v482
  %v557 = vpack.c.b16 %v485, %v484
  %630 = vmatpush.bf16.msra.mxu0 %v493
  %631 = vmatpush.bf16.msra.mxu0 %v492
  %632 = vmatpush.bf16.msra.mxu0 %v491
  %633 = vmatpush.bf16.msra.mxu0 %v490
  %634 = vmatpush.bf16.msra.mxu0 %v489
  %635 = vmatpush.bf16.msra.mxu0 %v488
  %636 = vmatpush.bf16.msra.mxu0 %v487
  %637 = vmatpush.bf16.msra.mxu0 %v486
  %638 = vmatmul.bf16.gmra.mxu0 %v180
  %v639 = vpop.f32.mrf.mxu0
  %v640 = vadd.f32 0.0, %v639
  %v641 = vpop.f32.mrf.mxu0
  %642 = vdwg.mxu0
  %643 = vmatpush.bf16.msra.mxu0 %v501
  %644 = vmatpush.bf16.msra.mxu0 %v500
  %645 = vmatpush.bf16.msra.mxu0 %v499
  %646 = vmatpush.bf16.msra.mxu0 %v498
  %647 = vmatpush.bf16.msra.mxu0 %v497
  %648 = vmatpush.bf16.msra.mxu0 %v496
  %649 = vmatpush.bf16.msra.mxu0 %v495
  %650 = vmatpush.bf16.msra.mxu0 %v494
  %651 = vmatmul.bf16.gmra.mxu0 %v181
  %v652 = vpop.f32.mrf.mxu0
  %v653 = vadd.f32 %v640, %v652
  %v654 = vpop.f32.mrf.mxu0
  %655 = vdwg.mxu0
  %656 = vmatpush.bf16.msra.mxu0 %v509
  %657 = vmatpush.bf16.msra.mxu0 %v508
  %658 = vmatpush.bf16.msra.mxu0 %v507
  %659 = vmatpush.bf16.msra.mxu0 %v506
  %660 = vmatpush.bf16.msra.mxu0 %v505
  %661 = vmatpush.bf16.msra.mxu0 %v504
  %662 = vmatpush.bf16.msra.mxu0 %v503
  %663 = vmatpush.bf16.msra.mxu0 %v502
  %664 = vmatmul.bf16.gmra.mxu0 %v182
  %v665 = vpop.f32.mrf.mxu0
  %v666 = vadd.f32 %v653, %v665
  %v667 = vpop.f32.mrf.mxu0
  %668 = vdwg.mxu0
  %669 = vmatpush.bf16.msra.mxu0 %v517
  %670 = vmatpush.bf16.msra.mxu0 %v516
  %671 = vmatpush.bf16.msra.mxu0 %v515
  %672 = vmatpush.bf16.msra.mxu0 %v514
  %673 = vmatpush.bf16.msra.mxu0 %v513
  %674 = vmatpush.bf16.msra.mxu0 %v512
  %675 = vmatpush.bf16.msra.mxu0 %v511
  %676 = vmatpush.bf16.msra.mxu0 %v510
  %677 = vmatmul.bf16.gmra.mxu0 %v183
  %v678 = vpop.f32.mrf.mxu0
  %v679 = vadd.f32 %v666, %v678
  %v680 = vpop.f32.mrf.mxu0
  %681 = vdwg.mxu0
  %682 = vmatpush.bf16.msra.mxu0 %v525
  %683 = vmatpush.bf16.msra.mxu0 %v524
  %684 = vmatpush.bf16.msra.mxu0 %v523
  %685 = vmatpush.bf16.msra.mxu0 %v522
  %686 = vmatpush.bf16.msra.mxu0 %v521
  %687 = vmatpush.bf16.msra.mxu0 %v520
  %688 = vmatpush.bf16.msra.mxu0 %v519
  %689 = vmatpush.bf16.msra.mxu0 %v518
  %690 = vmatmul.bf16.gmra.mxu0 %v184
  %v691 = vpop.f32.mrf.mxu0
  %v692 = vadd.f32 %v679, %v691
  %v693 = vpop.f32.mrf.mxu0
  %694 = vdwg.mxu0
  %695 = vmatpush.bf16.msra.mxu0 %v533
  %696 = vmatpush.bf16.msra.mxu0 %v532
  %697 = vmatpush.bf16.msra.mxu0 %v531
  %698 = vmatpush.bf16.msra.mxu0 %v530
  %699 = vmatpush.bf16.msra.mxu0 %v529
  %700 = vmatpush.bf16.msra.mxu0 %v528
  %701 = vmatpush.bf16.msra.mxu0 %v527
  %702 = vmatpush.bf16.msra.mxu0 %v526
  %703 = vmatmul.bf16.gmra.mxu0 %v185
  %v704 = vpop.f32.mrf.mxu0
  %v705 = vadd.f32 %v692, %v704
  %v706 = vpop.f32.mrf.mxu0
  %707 = vdwg.mxu0
  %708 = vmatpush.bf16.msra.mxu0 %v541
  %709 = vmatpush.bf16.msra.mxu0 %v540
  %710 = vmatpush.bf16.msra.mxu0 %v539
  %711 = vmatpush.bf16.msra.mxu0 %v538
  %712 = vmatpush.bf16.msra.mxu0 %v537
  %713 = vmatpush.bf16.msra.mxu0 %v536
  %714 = vmatpush.bf16.msra.mxu0 %v535
  %715 = vmatpush.bf16.msra.mxu0 %v534
  %716 = vmatmul.bf16.gmra.mxu0 %v186
  %v717 = vpop.f32.mrf.mxu0
  %v718 = vadd.f32 %v705, %v717
  %v719 = vpop.f32.mrf.mxu0
  %720 = vdwg.mxu0
  %721 = vmatpush.bf16.msra.mxu0 %v549
  %722 = vmatpush.bf16.msra.mxu0 %v548
  %723 = vmatpush.bf16.msra.mxu0 %v547
  %724 = vmatpush.bf16.msra.mxu0 %v546
  %725 = vmatpush.bf16.msra.mxu0 %v545
  %726 = vmatpush.bf16.msra.mxu0 %v544
  %727 = vmatpush.bf16.msra.mxu0 %v543
  %728 = vmatpush.bf16.msra.mxu0 %v542
  %729 = vmatmul.bf16.gmra.mxu0 %v187
  %v730 = vpop.f32.mrf.mxu0
  %v731 = vadd.f32 %v718, %v730
  %v732 = vpop.f32.mrf.mxu0
  %733 = vdwg.mxu0
  %734 = vmatpush.bf16.msra.mxu0 %v557
  %735 = vmatpush.bf16.msra.mxu0 %v556
  %736 = vmatpush.bf16.msra.mxu0 %v555
  %737 = vmatpush.bf16.msra.mxu0 %v554
  %738 = vmatpush.bf16.msra.mxu0 %v553
  %739 = vmatpush.bf16.msra.mxu0 %v552
  %740 = vmatpush.bf16.msra.mxu0 %v551
  %741 = vmatpush.bf16.msra.mxu0 %v550
  %742 = vmatmul.bf16.gmra.mxu0 %v188
  %v743 = vpop.f32.mrf.mxu0
  %v744 = vadd.f32 %v731, %v743
  %v745 = vpop.f32.mrf.mxu0
  %746 = vdwg.mxu0
  %v747 = vld [vmem:[%s2] sm:$0x1]
  %v748 = vld [vmem:[%s3] sm:$0x1]
  %v749 = vrot.slane %v744, 4
  %v750 = vadd.f32 %v744, %v749
  %v751 = vrot.slane %v750, 2
  %v752 = vadd.f32 %v750, %v751
  %v753 = vrot.slane %v752, 1
  %v754 = vadd.f32 %v752, %v753
  %v755 = vrcp.pop 8.0
  %v756 = vmul.f32 8.0, %v755
  %v757 = vsub.f32 1.0, %v756
  %v758 = vmul.f32 %v755, %v757
  %v759 = vadd.f32 %v755, %v758
  %vm760 = vweird.f32 %v755
  %v761 = vsel %vm760, %v755, %v759
  %v762 = vmul.f32 %v754, %v761
  %v763 = vsub.f32 %v744, %v762
  %v764 = vmul.f32 %v763, %v763
  %v765 = vrot.slane %v764, 4
  %v766 = vadd.f32 %v764, %v765
  %v767 = vrot.slane %v766, 2
  %v768 = vadd.f32 %v766, %v767
  %v769 = vrot.slane %v768, 1
  %v770 = vadd.f32 %v768, %v769
  %v771 = vmul.f32 %v770, %v761
  %v772 = vadd.f32 %v771, 1e-05
  %v773 = vrsqrt.pop %v772
  %v774 = vmul.f32 %v773, %v772
  %v775 = vmul.f32 %v774, %v773
  %v776 = vmul.f32 0.5, %v775
  %v777 = vsub.f32 1.5, %v776
  %v778 = vmul.f32 %v773, %v777
  %vm779 = vweird.f32 %v772
  %vm780 = vweird.f32 %v773
  %vm781 = vmor %vm779, %vm780
  %v782 = vsel %vm781, %v773, %v778
  %v783 = vmul.f32 %v763, %v782
  %v785 = vperm.slane %v747, 0
  %v787 = vmul.f32 %v783, %v785
  %v789 = vperm.slane %v748, 0
  %v791 = vadd.f32 %v787, %v789
  %v792 = vmax.f32 %v791, 0.0
  %793 = vst [vmem:[%s4] sm:$0xff] %v792
  // Predicated region
  $region18: #{res_encoder_forward.18} parent=0 // pred_check
    _
  $region19: #{res_encoder_forward.18} parent=0 // pred_check_branch
    %795 = sbr.rel (0) target = $region21
  $region20: #{res_encoder_forward.18} parent=0 // pred_region
    _
  $region21: #{res_encoder_forward.18} parent=0 // pred_fallthru
    _
  // Predicated region
  $region22: #{res_encoder_forward.18} parent=0 // pred_check
    _
  $region23: #{res_encoder_forward.18} parent=0 // pred_check_branch
    %797 = sbr.rel (0) target = $region25
  $region24: #{res_encoder_forward.18} parent=0 // pred_region
    _
  $region25: #{res_encoder_forward.18} parent=0 // pred_fallthru
    _

// kernel: res_encoder_forward.17
$region0: #{res_encoder_forward.17}
  #allocation0 [shape = 'u32[]', space=smem, size = 0x4, offset = 0x4, fixed_abs, tag = 'smem constant byte address 0x4 - core index']
  #allocation1 [shape = 'u32[72,128]{1,0:T(1,128)}', space=vmem, size = 0x9000, scoped, tag = 'internal scratch']
  %s0 = inlined_call_operand.vmem [shape: bf16[8,1152], index: 0, kind: input, shape index: {}]
  %s1 = inlined_call_operand.vmem [shape: bf16[1152,128], index: 1, kind: input, shape index: {}]
  %s2 = inlined_call_operand.vmem [shape: f32[1,128], index: 2, kind: input, shape index: {}]
  %s3 = inlined_call_operand.vmem [shape: f32[1,128], index: 3, kind: input, shape index: {}]
  %s4 = inlined_call_operand.vmem [shape: bf16[8,64], index: 4, kind: input, shape index: {}]
  %s5 = inlined_call_operand.vmem [shape: bf16[64,128], index: 5, kind: input, shape index: {}]
  %s6 = inlined_call_operand.vmem [shape: f32[1,128], index: 6, kind: input, shape index: {}]
  %s7 = inlined_call_operand.vmem [shape: f32[1,128], index: 7, kind: input, shape index: {}]
  %s8 = inlined_call_operand.vmem [shape: f32[8,128], index: 8, kind: output, shape index: {}]
  %s9 = sld [smem:[#allocation0]]
  $region42: #{res_encoder_forward.17} parent=0
    _
  %s11 = ssub.s32 1, %s9
  %s12 = scalar_select 0, %s11, %s9
  // Predicated region
  $region2: #{res_encoder_forward.17} parent=0 // pred_check
    _
  $region3: #{res_encoder_forward.17} parent=0 // pred_check_branch
    %14 = sbr.rel (0) target = $region5
  $region4: #{res_encoder_forward.17} parent=0 // pred_region
    _
  $region5: #{res_encoder_forward.17} parent=0 // pred_fallthru
    _
  // Predicated region
  $region6: #{res_encoder_forward.17} parent=0 // pred_check
    _
  $region7: #{res_encoder_forward.17} parent=0 // pred_check_branch
    %16 = sbr.rel (0) target = $region9
  $region8: #{res_encoder_forward.17} parent=0 // pred_region
    _
  $region9: #{res_encoder_forward.17} parent=0 // pred_fallthru
    _
  // Predicated region
  $region10: #{res_encoder_forward.17} parent=0 // pred_check
    _
  $region11: #{res_encoder_forward.17} parent=0 // pred_check_branch
    %18 = sbr.rel (0) target = $region13
  $region12: #{res_encoder_forward.17} parent=0 // pred_region
    _
  $region13: #{res_encoder_forward.17} parent=0 // pred_fallthru
    _
  // Predicated region
  $region14: #{res_encoder_forward.17} parent=0 // pred_check
    _
  $region15: #{res_encoder_forward.17} parent=0 // pred_check_branch
    %20 = sbr.rel (0) target = $region17
  $region16: #{res_encoder_forward.17} parent=0 // pred_region
    _
  $region17: #{res_encoder_forward.17} parent=0 // pred_fallthru
    _
  // Predicated region
  $region18: #{res_encoder_forward.17} parent=0 // pred_check
    _
  $region19: #{res_encoder_forward.17} parent=0 // pred_check_branch
    %22 = sbr.rel (0) target = $region21
  $region20: #{res_encoder_forward.17} parent=0 // pred_region
    _
  $region21: #{res_encoder_forward.17} parent=0 // pred_fallthru
    _
  // Predicated region
  $region22: #{res_encoder_forward.17} parent=0 // pred_check
    _
  $region23: #{res_encoder_forward.17} parent=0 // pred_check_branch
    %24 = sbr.rel (0) target = $region25
  $region24: #{res_encoder_forward.17} parent=0 // pred_region
    _
  $region25: #{res_encoder_forward.17} parent=0 // pred_fallthru
    _
  // Predicated region
  $region26: #{res_encoder_forward.17} parent=0 // pred_check
    _
  $region27: #{res_encoder_forward.17} parent=0 // pred_check_branch
    %26 = sbr.rel (0) target = $region29
  $region28: #{res_encoder_forward.17} parent=0 // pred_region
    _
  $region29: #{res_encoder_forward.17} parent=0 // pred_fallthru
    _
  // Predicated region
  $region30: #{res_encoder_forward.17} parent=0 // pred_check
    _
  $region31: #{res_encoder_forward.17} parent=0 // pred_check_branch
    %28 = sbr.rel (0) target = $region33
  $region32: #{res_encoder_forward.17} parent=0 // pred_region
    _
  $region33: #{res_encoder_forward.17} parent=0 // pred_fallthru
    _
  %v30 = vld [vmem:[%s0] sm:$0xff]
  %v31 = vld [vmem:[%s0 + $0x8] sm:$0xff]
  %v32 = vld [vmem:[%s0 + $0x10] sm:$0xff]
  %v33 = vld [vmem:[%s0 + $0x18] sm:$0xff]
  %v34 = vld [vmem:[%s0 + $0x20] sm:$0xf]
  %v35 = vld [vmem:[%s1] sm:$0xf]
  %v36 = vld [vmem:[%s1 + $0x4] sm:$0xf]
  %v37 = vld [vmem:[%s1 + $0x8] sm:$0xf]
  %v38 = vld [vmem:[%s1 + $0xc] sm:$0xf]
  %v39 = vld [vmem:[%s1 + $0x10] sm:$0xf]
  %v40 = vld [vmem:[%s1 + $0x14] sm:$0xf]
  %v41 = vld [vmem:[%s1 + $0x18] sm:$0xf]
  %v42 = vld [vmem:[%s1 + $0x1c] sm:$0xf]
  %v43 = vld [vmem:[%s1 + $0x20] sm:$0xf]
  %v44 = vld [vmem:[%s1 + $0x24] sm:$0xf]
  %v45 = vld [vmem:[%s1 + $0x28] sm:$0xf]
  %v46 = vld [vmem:[%s1 + $0x2c] sm:$0xf]
  %v47 = vld [vmem:[%s1 + $0x30] sm:$0xf]
  %v48 = vld [vmem:[%s1 + $0x34] sm:$0xf]
  %v49 = vld [vmem:[%s1 + $0x38] sm:$0xf]
  %v50 = vld [vmem:[%s1 + $0x3c] sm:$0xf]
  %v51 = vld [vmem:[%s1 + $0x40] sm:$0xf]
  %v52 = vld [vmem:[%s1 + $0x44] sm:$0xf]
  %v53 = vld [vmem:[%s1 + $0x48] sm:$0xf]
  %v54 = vld [vmem:[%s1 + $0x4c] sm:$0xf]
  %v55 = vld [vmem:[%s1 + $0x50] sm:$0xf]
  %v56 = vld [vmem:[%s1 + $0x54] sm:$0xf]
  %v57 = vld [vmem:[%s1 + $0x58] sm:$0xf]
  %v58 = vld [vmem:[%s1 + $0x5c] sm:$0xf]
  %v59 = vld [vmem:[%s1 + $0x60] sm:$0xf]
  %v60 = vld [vmem:[%s1 + $0x64] sm:$0xf]
  %v61 = vld [vmem:[%s1 + $0x68] sm:$0xf]
  %v62 = vld [vmem:[%s1 + $0x6c] sm:$0xf]
  %v63 = vld [vmem:[%s1 + $0x70] sm:$0xf]
  %v64 = vld [vmem:[%s1 + $0x74] sm:$0xf]
  %v65 = vld [vmem:[%s1 + $0x78] sm:$0xf]
  %v66 = vld [vmem:[%s1 + $0x7c] sm:$0xf]
  %v67 = vld [vmem:[%s1 + $0x80] sm:$0xf]
  %v68 = vld [vmem:[%s1 + $0x84] sm:$0xf]
  %v69 = vld [vmem:[%s1 + $0x88] sm:$0xf]
  %v70 = vld [vmem:[%s1 + $0x8c] sm:$0xf]
  %v71 = vld [vmem:[%s1 + $0x90] sm:$0xf]
  %v72 = vld [vmem:[%s1 + $0x94] sm:$0xf]
  %v73 = vld [vmem:[%s1 + $0x98] sm:$0xf]
  %v74 = vld [vmem:[%s1 + $0x9c] sm:$0xf]
  %v75 = vld [vmem:[%s1 + $0xa0] sm:$0xf]
  %v76 = vld [vmem:[%s1 + $0xa4] sm:$0xf]
  %v77 = vld [vmem:[%s1 + $0xa8] sm:$0xf]
  %v78 = vld [vmem:[%s1 + $0xac] sm:$0xf]
  %v79 = vld [vmem:[%s1 + $0xb0] sm:$0xf]
  %v80 = vld [vmem:[%s1 + $0xb4] sm:$0xf]
  %v81 = vld [vmem:[%s1 + $0xb8] sm:$0xf]
  %v82 = vld [vmem:[%s1 + $0xbc] sm:$0xf]
  %v83 = vld [vmem:[%s1 + $0xc0] sm:$0xf]
  %v84 = vld [vmem:[%s1 + $0xc4] sm:$0xf]
  %v85 = vld [vmem:[%s1 + $0xc8] sm:$0xf]
  %v86 = vld [vmem:[%s1 + $0xcc] sm:$0xf]
  %v87 = vld [vmem:[%s1 + $0xd0] sm:$0xf]
  %v88 = vld [vmem:[%s1 + $0xd4] sm:$0xf]
  %v89 = vld [vmem:[%s1 + $0xd8] sm:$0xf]
  %v90 = vld [vmem:[%s1 + $0xdc] sm:$0xf]
  %v91 = vld [vmem:[%s1 + $0xe0] sm:$0xf]
  %v92 = vld [vmem:[%s1 + $0xe4] sm:$0xf]
  %v93 = vld [vmem:[%s1 + $0xe8] sm:$0xf]
  %v94 = vld [vmem:[%s1 + $0xec] sm:$0xf]
  %v95 = vld [vmem:[%s1 + $0xf0] sm:$0xf]
  %v96 = vld [vmem:[%s1 + $0xf4] sm:$0xf]
  %v97 = vld [vmem:[%s1 + $0xf8] sm:$0xf]
  %v98 = vld [vmem:[%s1 + $0xfc] sm:$0xf]
  %v99 = vld [vmem:[%s1 + $0x100] sm:$0xf]
  %v100 = vld [vmem:[%s1 + $0x104] sm:$0xf]
  %v101 = vld [vmem:[%s1 + $0x108] sm:$0xf]
  %v102 = vld [vmem:[%s1 + $0x10c] sm:$0xf]
  %v103 = vld [vmem:[%s1 + $0x110] sm:$0xf]
  %v104 = vld [vmem:[%s1 + $0x114] sm:$0xf]
  %v105 = vld [vmem:[%s1 + $0x118] sm:$0xf]
  %v106 = vld [vmem:[%s1 + $0x11c] sm:$0xf]
  %v107 = vld [vmem:[%s1 + $0x120] sm:$0xf]
  %v108 = vld [vmem:[%s1 + $0x124] sm:$0xf]
  %v109 = vld [vmem:[%s1 + $0x128] sm:$0xf]
  %v110 = vld [vmem:[%s1 + $0x12c] sm:$0xf]
  %v111 = vld [vmem:[%s1 + $0x130] sm:$0xf]
  %v112 = vld [vmem:[%s1 + $0x134] sm:$0xf]
  %v113 = vld [vmem:[%s1 + $0x138] sm:$0xf]
  %v114 = vld [vmem:[%s1 + $0x13c] sm:$0xf]
  %v115 = vld [vmem:[%s1 + $0x140] sm:$0xf]
  %v116 = vld [vmem:[%s1 + $0x144] sm:$0xf]
  %v117 = vld [vmem:[%s1 + $0x148] sm:$0xf]
  %v118 = vld [vmem:[%s1 + $0x14c] sm:$0xf]
  %v119 = vld [vmem:[%s1 + $0x150] sm:$0xf]
  %v120 = vld [vmem:[%s1 + $0x154] sm:$0xf]
  %v121 = vld [vmem:[%s1 + $0x158] sm:$0xf]
  %v122 = vld [vmem:[%s1 + $0x15c] sm:$0xf]
  %v123 = vld [vmem:[%s1 + $0x160] sm:$0xf]
  %v124 = vld [vmem:[%s1 + $0x164] sm:$0xf]
  %v125 = vld [vmem:[%s1 + $0x168] sm:$0xf]
  %v126 = vld [vmem:[%s1 + $0x16c] sm:$0xf]
  %v127 = vld [vmem:[%s1 + $0x170] sm:$0xf]
  %v128 = vld [vmem:[%s1 + $0x174] sm:$0xf]
  %v129 = vld [vmem:[%s1 + $0x178] sm:$0xf]
  %v130 = vld [vmem:[%s1 + $0x17c] sm:$0xf]
  %v131 = vld [vmem:[%s1 + $0x180] sm:$0xf]
  %v132 = vld [vmem:[%s1 + $0x184] sm:$0xf]
  %v133 = vld [vmem:[%s1 + $0x188] sm:$0xf]
  %v134 = vld [vmem:[%s1 + $0x18c] sm:$0xf]
  %v135 = vld [vmem:[%s1 + $0x190] sm:$0xf]
  %v136 = vld [vmem:[%s1 + $0x194] sm:$0xf]
  %v137 = vld [vmem:[%s1 + $0x198] sm:$0xf]
  %v138 = vld [vmem:[%s1 + $0x19c] sm:$0xf]
  %v139 = vld [vmem:[%s1 + $0x1a0] sm:$0xf]
  %v140 = vld [vmem:[%s1 + $0x1a4] sm:$0xf]
  %v141 = vld [vmem:[%s1 + $0x1a8] sm:$0xf]
  %v142 = vld [vmem:[%s1 + $0x1ac] sm:$0xf]
  %v143 = vld [vmem:[%s1 + $0x1b0] sm:$0xf]
  %v144 = vld [vmem:[%s1 + $0x1b4] sm:$0xf]
  %v145 = vld [vmem:[%s1 + $0x1b8] sm:$0xf]
  %v146 = vld [vmem:[%s1 + $0x1bc] sm:$0xf]
  %v147 = vld [vmem:[%s1 + $0x1c0] sm:$0xf]
  %v148 = vld [vmem:[%s1 + $0x1c4] sm:$0xf]
  %v149 = vld [vmem:[%s1 + $0x1c8] sm:$0xf]
  %v150 = vld [vmem:[%s1 + $0x1cc] sm:$0xf]
  %v151 = vld [vmem:[%s1 + $0x1d0] sm:$0xf]
  %v152 = vld [vmem:[%s1 + $0x1d4] sm:$0xf]
  %v153 = vld [vmem:[%s1 + $0x1d8] sm:$0xf]
  %v154 = vld [vmem:[%s1 + $0x1dc] sm:$0xf]
  %v155 = vld [vmem:[%s1 + $0x1e0] sm:$0xf]
  %v156 = vld [vmem:[%s1 + $0x1e4] sm:$0xf]
  %v157 = vld [vmem:[%s1 + $0x1e8] sm:$0xf]
  %v158 = vld [vmem:[%s1 + $0x1ec] sm:$0xf]
  %v159 = vld [vmem:[%s1 + $0x1f0] sm:$0xf]
  %v160 = vld [vmem:[%s1 + $0x1f4] sm:$0xf]
  %v161 = vld [vmem:[%s1 + $0x1f8] sm:$0xf]
  %v162 = vld [vmem:[%s1 + $0x1fc] sm:$0xf]
  %v163 = vld [vmem:[%s1 + $0x200] sm:$0xf]
  %v164 = vld [vmem:[%s1 + $0x204] sm:$0xf]
  %v165 = vld [vmem:[%s1 + $0x208] sm:$0xf]
  %v166 = vld [vmem:[%s1 + $0x20c] sm:$0xf]
  %v167 = vld [vmem:[%s1 + $0x210] sm:$0xf]
  %v168 = vld [vmem:[%s1 + $0x214] sm:$0xf]
  %v169 = vld [vmem:[%s1 + $0x218] sm:$0xf]
  %v170 = vld [vmem:[%s1 + $0x21c] sm:$0xf]
  %v171 = vld [vmem:[%s1 + $0x220] sm:$0xf]
  %v172 = vld [vmem:[%s1 + $0x224] sm:$0xf]
  %v173 = vld [vmem:[%s1 + $0x228] sm:$0xf]
  %v174 = vld [vmem:[%s1 + $0x22c] sm:$0xf]
  %v175 = vld [vmem:[%s1 + $0x230] sm:$0xf]
  %v176 = vld [vmem:[%s1 + $0x234] sm:$0xf]
  %v177 = vld [vmem:[%s1 + $0x238] sm:$0xf]
  %v178 = vld [vmem:[%s1 + $0x23c] sm:$0xf]
  %v184 = vunpack.c.l.b16 %v30
  %v185 = vunpack.c.h.b16 %v30
  %v186 = vunpack.c.l.b16 %v31
  %v187 = vunpack.c.h.b16 %v31
  %v188 = vunpack.c.l.b16 %v32
  %v189 = vunpack.c.h.b16 %v32
  %v190 = vunpack.c.l.b16 %v33
  %v191 = vunpack.c.h.b16 %v33
  %v192 = vunpack.c.l.b16 %v34
  %v193 = vpack.c.b16 %v184, %v184
  %v194 = vpack.c.b16 %v185, %v185
  %v195 = vpack.c.b16 %v186, %v186
  %v196 = vpack.c.b16 %v187, %v187
  %v197 = vpack.c.b16 %v188, %v188
  %v198 = vpack.c.b16 %v189, %v189
  %v199 = vpack.c.b16 %v190, %v190
  %v200 = vpack.c.b16 %v191, %v191
  %v201 = vpack.c.b16 %v192, %v192
  %v355 = vunpack.c.l.b16 %v35
  %v356 = vunpack.c.l.b16 %v36
  %v357 = vunpack.c.l.b16 %v37
  %v358 = vunpack.c.l.b16 %v38
  %v359 = vunpack.c.l.b16 %v39
  %v360 = vunpack.c.l.b16 %v40
  %v361 = vunpack.c.l.b16 %v41
  %v362 = vunpack.c.l.b16 %v42
  %v363 = vunpack.c.l.b16 %v43
  %v364 = vunpack.c.l.b16 %v44
  %v365 = vunpack.c.l.b16 %v45
  %v366 = vunpack.c.l.b16 %v46
  %v367 = vunpack.c.l.b16 %v47
  %v368 = vunpack.c.l.b16 %v48
  %v369 = vunpack.c.l.b16 %v49
  %v370 = vunpack.c.l.b16 %v50
  %v371 = vunpack.c.l.b16 %v51
  %v372 = vunpack.c.l.b16 %v52
  %v373 = vunpack.c.l.b16 %v53
  %v374 = vunpack.c.l.b16 %v54
  %v375 = vunpack.c.l.b16 %v55
  %v376 = vunpack.c.l.b16 %v56
  %v377 = vunpack.c.l.b16 %v57
  %v378 = vunpack.c.l.b16 %v58
  %v379 = vunpack.c.l.b16 %v59
  %v380 = vunpack.c.l.b16 %v60
  %v381 = vunpack.c.l.b16 %v61
  %v382 = vunpack.c.l.b16 %v62
  %v383 = vunpack.c.l.b16 %v63
  %v384 = vunpack.c.l.b16 %v64
  %v385 = vunpack.c.l.b16 %v65
  %v386 = vunpack.c.l.b16 %v66
  %v387 = vunpack.c.l.b16 %v67
  %v388 = vunpack.c.l.b16 %v68
  %v389 = vunpack.c.l.b16 %v69
  %v390 = vunpack.c.l.b16 %v70
  %v391 = vunpack.c.l.b16 %v71
  %v392 = vunpack.c.l.b16 %v72
  %v393 = vunpack.c.l.b16 %v73
  %v394 = vunpack.c.l.b16 %v74
  %v395 = vunpack.c.l.b16 %v75
  %v396 = vunpack.c.l.b16 %v76
  %v397 = vunpack.c.l.b16 %v77
  %v398 = vunpack.c.l.b16 %v78
  %v399 = vunpack.c.l.b16 %v79
  %v400 = vunpack.c.l.b16 %v80
  %v401 = vunpack.c.l.b16 %v81
  %v402 = vunpack.c.l.b16 %v82
  %v403 = vunpack.c.l.b16 %v83
  %v404 = vunpack.c.l.b16 %v84
  %v405 = vunpack.c.l.b16 %v85
  %v406 = vunpack.c.l.b16 %v86
  %v407 = vunpack.c.l.b16 %v87
  %v408 = vunpack.c.l.b16 %v88
  %v409 = vunpack.c.l.b16 %v89
  %v410 = vunpack.c.l.b16 %v90
  %v411 = vunpack.c.l.b16 %v91
  %v412 = vunpack.c.l.b16 %v92
  %v413 = vunpack.c.l.b16 %v93
  %v414 = vunpack.c.l.b16 %v94
  %v415 = vunpack.c.l.b16 %v95
  %v416 = vunpack.c.l.b16 %v96
  %v417 = vunpack.c.l.b16 %v97
  %v418 = vunpack.c.l.b16 %v98
  %v419 = vunpack.c.l.b16 %v99
  %v420 = vunpack.c.l.b16 %v100
  %v421 = vunpack.c.l.b16 %v101
  %v422 = vunpack.c.l.b16 %v102
  %v423 = vunpack.c.l.b16 %v103
  %v424 = vunpack.c.l.b16 %v104
  %v425 = vunpack.c.l.b16 %v105
  %v426 = vunpack.c.l.b16 %v106
  %v427 = vunpack.c.l.b16 %v107
  %v428 = vunpack.c.l.b16 %v108
  %v429 = vunpack.c.l.b16 %v109
  %v430 = vunpack.c.l.b16 %v110
  %v431 = vunpack.c.l.b16 %v111
  %v432 = vunpack.c.l.b16 %v112
  %v433 = vunpack.c.l.b16 %v113
  %v434 = vunpack.c.l.b16 %v114
  %v435 = vunpack.c.l.b16 %v115
  %v436 = vunpack.c.l.b16 %v116
  %v437 = vunpack.c.l.b16 %v117
  %v438 = vunpack.c.l.b16 %v118
  %v439 = vunpack.c.l.b16 %v119
  %v440 = vunpack.c.l.b16 %v120
  %v441 = vunpack.c.l.b16 %v121
  %v442 = vunpack.c.l.b16 %v122
  %v443 = vunpack.c.l.b16 %v123
  %v444 = vunpack.c.l.b16 %v124
  %v445 = vunpack.c.l.b16 %v125
  %v446 = vunpack.c.l.b16 %v126
  %v447 = vunpack.c.l.b16 %v127
  %v448 = vunpack.c.l.b16 %v128
  %v449 = vunpack.c.l.b16 %v129
  %v450 = vunpack.c.l.b16 %v130
  %v451 = vunpack.c.l.b16 %v131
  %v452 = vunpack.c.l.b16 %v132
  %v453 = vunpack.c.l.b16 %v133
  %v454 = vunpack.c.l.b16 %v134
  %v455 = vunpack.c.l.b16 %v135
  %v456 = vunpack.c.l.b16 %v136
  %v457 = vunpack.c.l.b16 %v137
  %v458 = vunpack.c.l.b16 %v138
  %v459 = vunpack.c.l.b16 %v139
  %v460 = vunpack.c.l.b16 %v140
  %v461 = vunpack.c.l.b16 %v141
  %v462 = vunpack.c.l.b16 %v142
  %v463 = vunpack.c.l.b16 %v143
  %v464 = vunpack.c.l.b16 %v144
  %v465 = vunpack.c.l.b16 %v145
  %v466 = vunpack.c.l.b16 %v146
  %v467 = vunpack.c.l.b16 %v147
  %v468 = vunpack.c.l.b16 %v148
  %v469 = vunpack.c.l.b16 %v149
  %v470 = vunpack.c.l.b16 %v150
  %v471 = vunpack.c.l.b16 %v151
  %v472 = vunpack.c.l.b16 %v152
  %v473 = vunpack.c.l.b16 %v153
  %v474 = vunpack.c.l.b16 %v154
  %v475 = vunpack.c.l.b16 %v155
  %v476 = vunpack.c.l.b16 %v156
  %v477 = vunpack.c.l.b16 %v157
  %v478 = vunpack.c.l.b16 %v158
  %v479 = vunpack.c.l.b16 %v159
  %v480 = vunpack.c.l.b16 %v160
  %v481 = vunpack.c.l.b16 %v161
  %v482 = vunpack.c.l.b16 %v162
  %v483 = vunpack.c.l.b16 %v163
  %v484 = vunpack.c.l.b16 %v164
  %v485 = vunpack.c.l.b16 %v165
  %v486 = vunpack.c.l.b16 %v166
  %v487 = vunpack.c.l.b16 %v167
  %v488 = vunpack.c.l.b16 %v168
  %v489 = vunpack.c.l.b16 %v169
  %v490 = vunpack.c.l.b16 %v170
  %v491 = vunpack.c.l.b16 %v171
  %v492 = vunpack.c.l.b16 %v172
  %v493 = vunpack.c.l.b16 %v173
  %v494 = vunpack.c.l.b16 %v174
  %v495 = vunpack.c.l.b16 %v175
  %v496 = vunpack.c.l.b16 %v176
  %v497 = vunpack.c.l.b16 %v177
  %v498 = vunpack.c.l.b16 %v178
  %v499 = vpack.c.b16 %v356, %v355
  %v500 = vpack.c.b16 %v358, %v357
  %v501 = vpack.c.b16 %v360, %v359
  %v502 = vpack.c.b16 %v362, %v361
  %v503 = vpack.c.b16 %v364, %v363
  %v504 = vpack.c.b16 %v366, %v365
  %v505 = vpack.c.b16 %v368, %v367
  %v506 = vpack.c.b16 %v370, %v369
  %v507 = vpack.c.b16 %v372, %v371
  %v508 = vpack.c.b16 %v374, %v373
  %v509 = vpack.c.b16 %v376, %v375
  %v510 = vpack.c.b16 %v378, %v377
  %v511 = vpack.c.b16 %v380, %v379
  %v512 = vpack.c.b16 %v382, %v381
  %v513 = vpack.c.b16 %v384, %v383
  %v514 = vpack.c.b16 %v386, %v385
  %v515 = vpack.c.b16 %v388, %v387
  %v516 = vpack.c.b16 %v390, %v389
  %v517 = vpack.c.b16 %v392, %v391
  %v518 = vpack.c.b16 %v394, %v393
  %v519 = vpack.c.b16 %v396, %v395
  %v520 = vpack.c.b16 %v398, %v397
  %v521 = vpack.c.b16 %v400, %v399
  %v522 = vpack.c.b16 %v402, %v401
  %v523 = vpack.c.b16 %v404, %v403
  %v524 = vpack.c.b16 %v406, %v405
  %v525 = vpack.c.b16 %v408, %v407
  %v526 = vpack.c.b16 %v410, %v409
  %v527 = vpack.c.b16 %v412, %v411
  %v528 = vpack.c.b16 %v414, %v413
  %v529 = vpack.c.b16 %v416, %v415
  %v530 = vpack.c.b16 %v418, %v417
  %v531 = vpack.c.b16 %v420, %v419
  %v532 = vpack.c.b16 %v422, %v421
  %v533 = vpack.c.b16 %v424, %v423
  %v534 = vpack.c.b16 %v426, %v425
  %v535 = vpack.c.b16 %v428, %v427
  %v536 = vpack.c.b16 %v430, %v429
  %v537 = vpack.c.b16 %v432, %v431
  %v538 = vpack.c.b16 %v434, %v433
  %v539 = vpack.c.b16 %v436, %v435
  %v540 = vpack.c.b16 %v438, %v437
  %v541 = vpack.c.b16 %v440, %v439
  %v542 = vpack.c.b16 %v442, %v441
  %v543 = vpack.c.b16 %v444, %v443
  %v544 = vpack.c.b16 %v446, %v445
  %v545 = vpack.c.b16 %v448, %v447
  %v546 = vpack.c.b16 %v450, %v449
  %v547 = vpack.c.b16 %v452, %v451
  %v548 = vpack.c.b16 %v454, %v453
  %v549 = vpack.c.b16 %v456, %v455
  %v550 = vpack.c.b16 %v458, %v457
  %v551 = vpack.c.b16 %v460, %v459
  %v552 = vpack.c.b16 %v462, %v461
  %v553 = vpack.c.b16 %v464, %v463
  %v554 = vpack.c.b16 %v466, %v465
  %v555 = vpack.c.b16 %v468, %v467
  %v556 = vpack.c.b16 %v470, %v469
  %v557 = vpack.c.b16 %v472, %v471
  %v558 = vpack.c.b16 %v474, %v473
  %v559 = vpack.c.b16 %v476, %v475
  %v560 = vpack.c.b16 %v478, %v477
  %v561 = vpack.c.b16 %v480, %v479
  %v562 = vpack.c.b16 %v482, %v481
  %v563 = vpack.c.b16 %v484, %v483
  %v564 = vpack.c.b16 %v486, %v485
  %v565 = vpack.c.b16 %v488, %v487
  %v566 = vpack.c.b16 %v490, %v489
  %v567 = vpack.c.b16 %v492, %v491
  %v568 = vpack.c.b16 %v494, %v493
  %v569 = vpack.c.b16 %v496, %v495
  %v570 = vpack.c.b16 %v498, %v497
  %643 = vmatpush.bf16.msra.mxu0 %v506
  %644 = vmatpush.bf16.msra.mxu0 %v505
  %645 = vmatpush.bf16.msra.mxu0 %v504
  %646 = vmatpush.bf16.msra.mxu0 %v503
  %647 = vmatpush.bf16.msra.mxu0 %v502
  %648 = vmatpush.bf16.msra.mxu0 %v501
  %649 = vmatpush.bf16.msra.mxu0 %v500
  %650 = vmatpush.bf16.msra.mxu0 %v499
  %651 = vmatmul.bf16.gmra.mxu0 %v193
  %v652 = vpop.f32.mrf.mxu0
  %v653 = vadd.f32 0.0, %v652
  %v654 = vpop.f32.mrf.mxu0
  %655 = vdwg.mxu0
  %656 = vmatpush.bf16.msra.mxu0 %v514
  %657 = vmatpush.bf16.msra.mxu0 %v513
  %658 = vmatpush.bf16.msra.mxu0 %v512
  %659 = vmatpush.bf16.msra.mxu0 %v511
  %660 = vmatpush.bf16.msra.mxu0 %v510
  %661 = vmatpush.bf16.msra.mxu0 %v509
  %662 = vmatpush.bf16.msra.mxu0 %v508
  %663 = vmatpush.bf16.msra.mxu0 %v507
  %664 = vmatmul.bf16.gmra.mxu0 %v194
  %v665 = vpop.f32.mrf.mxu0
  %v666 = vadd.f32 %v653, %v665
  %v667 = vpop.f32.mrf.mxu0
  %668 = vdwg.mxu0
  %669 = vmatpush.bf16.msra.mxu0 %v522
  %670 = vmatpush.bf16.msra.mxu0 %v521
  %671 = vmatpush.bf16.msra.mxu0 %v520
  %672 = vmatpush.bf16.msra.mxu0 %v519
  %673 = vmatpush.bf16.msra.mxu0 %v518
  %674 = vmatpush.bf16.msra.mxu0 %v517
  %675 = vmatpush.bf16.msra.mxu0 %v516
  %676 = vmatpush.bf16.msra.mxu0 %v515
  %677 = vmatmul.bf16.gmra.mxu0 %v195
  %v678 = vpop.f32.mrf.mxu0
  %v679 = vadd.f32 %v666, %v678
  %v680 = vpop.f32.mrf.mxu0
  %681 = vdwg.mxu0
  %682 = vmatpush.bf16.msra.mxu0 %v530
  %683 = vmatpush.bf16.msra.mxu0 %v529
  %684 = vmatpush.bf16.msra.mxu0 %v528
  %685 = vmatpush.bf16.msra.mxu0 %v527
  %686 = vmatpush.bf16.msra.mxu0 %v526
  %687 = vmatpush.bf16.msra.mxu0 %v525
  %688 = vmatpush.bf16.msra.mxu0 %v524
  %689 = vmatpush.bf16.msra.mxu0 %v523
  %690 = vmatmul.bf16.gmra.mxu0 %v196
  %v691 = vpop.f32.mrf.mxu0
  %v692 = vadd.f32 %v679, %v691
  %v693 = vpop.f32.mrf.mxu0
  %694 = vdwg.mxu0
  %695 = vmatpush.bf16.msra.mxu0 %v538
  %696 = vmatpush.bf16.msra.mxu0 %v537
  %697 = vmatpush.bf16.msra.mxu0 %v536
  %698 = vmatpush.bf16.msra.mxu0 %v535
  %699 = vmatpush.bf16.msra.mxu0 %v534
  %700 = vmatpush.bf16.msra.mxu0 %v533
  %701 = vmatpush.bf16.msra.mxu0 %v532
  %702 = vmatpush.bf16.msra.mxu0 %v531
  %703 = vmatmul.bf16.gmra.mxu0 %v197
  %v704 = vpop.f32.mrf.mxu0
  %v705 = vadd.f32 %v692, %v704
  %v706 = vpop.f32.mrf.mxu0
  %707 = vdwg.mxu0
  %708 = vmatpush.bf16.msra.mxu0 %v546
  %709 = vmatpush.bf16.msra.mxu0 %v545
  %710 = vmatpush.bf16.msra.mxu0 %v544
  %711 = vmatpush.bf16.msra.mxu0 %v543
  %712 = vmatpush.bf16.msra.mxu0 %v542
  %713 = vmatpush.bf16.msra.mxu0 %v541
  %714 = vmatpush.bf16.msra.mxu0 %v540
  %715 = vmatpush.bf16.msra.mxu0 %v539
  %716 = vmatmul.bf16.gmra.mxu0 %v198
  %v717 = vpop.f32.mrf.mxu0
  %v718 = vadd.f32 %v705, %v717
  %v719 = vpop.f32.mrf.mxu0
  %720 = vdwg.mxu0
  %721 = vmatpush.bf16.msra.mxu0 %v554
  %722 = vmatpush.bf16.msra.mxu0 %v553
  %723 = vmatpush.bf16.msra.mxu0 %v552
  %724 = vmatpush.bf16.msra.mxu0 %v551
  %725 = vmatpush.bf16.msra.mxu0 %v550
  %726 = vmatpush.bf16.msra.mxu0 %v549
  %727 = vmatpush.bf16.msra.mxu0 %v548
  %728 = vmatpush.bf16.msra.mxu0 %v547
  %729 = vmatmul.bf16.gmra.mxu0 %v199
  %v730 = vpop.f32.mrf.mxu0
  %v731 = vadd.f32 %v718, %v730
  %v732 = vpop.f32.mrf.mxu0
  %733 = vdwg.mxu0
  %734 = vmatpush.bf16.msra.mxu0 %v562
  %735 = vmatpush.bf16.msra.mxu0 %v561
  %736 = vmatpush.bf16.msra.mxu0 %v560
  %737 = vmatpush.bf16.msra.mxu0 %v559
  %738 = vmatpush.bf16.msra.mxu0 %v558
  %739 = vmatpush.bf16.msra.mxu0 %v557
  %740 = vmatpush.bf16.msra.mxu0 %v556
  %741 = vmatpush.bf16.msra.mxu0 %v555
  %742 = vmatmul.bf16.gmra.mxu0 %v200
  %v743 = vpop.f32.mrf.mxu0
  %v744 = vadd.f32 %v731, %v743
  %v745 = vpop.f32.mrf.mxu0
  %746 = vdwg.mxu0
  %747 = vmatpush.bf16.msra.mxu0 %v570
  %748 = vmatpush.bf16.msra.mxu0 %v569
  %749 = vmatpush.bf16.msra.mxu0 %v568
  %750 = vmatpush.bf16.msra.mxu0 %v567
  %751 = vmatpush.bf16.msra.mxu0 %v566
  %752 = vmatpush.bf16.msra.mxu0 %v565
  %753 = vmatpush.bf16.msra.mxu0 %v564
  %754 = vmatpush.bf16.msra.mxu0 %v563
  %755 = vmatmul.bf16.gmra.mxu0 %v201
  %v756 = vpop.f32.mrf.mxu0
  %v757 = vadd.f32 %v744, %v756
  %v758 = vpop.f32.mrf.mxu0
  %759 = vdwg.mxu0
  %v760 = vld [vmem:[%s2] sm:$0x1]
  %v761 = vld [vmem:[%s3] sm:$0x1]
  %v762 = vrot.slane %v757, 4
  %v763 = vadd.f32 %v757, %v762
  %v764 = vrot.slane %v763, 2
  %v765 = vadd.f32 %v763, %v764
  %v766 = vrot.slane %v765, 1
  %v767 = vadd.f32 %v765, %v766
  %v768 = vrcp.pop 8.0
  %v769 = vmul.f32 8.0, %v768
  %v770 = vsub.f32 1.0, %v769
  %v771 = vmul.f32 %v768, %v770
  %v772 = vadd.f32 %v768, %v771
  %vm773 = vweird.f32 %v768
  %v774 = vsel %vm773, %v768, %v772
  %v775 = vmul.f32 %v767, %v774
  %v776 = vsub.f32 %v757, %v775
  %v777 = vmul.f32 %v776, %v776
  %v778 = vrot.slane %v777, 4
  %v779 = vadd.f32 %v777, %v778
  %v780 = vrot.slane %v779, 2
  %v781 = vadd.f32 %v779, %v780
  %v782 = vrot.slane %v781, 1
  %v783 = vadd.f32 %v781, %v782
  %v784 = vmul.f32 %v783, %v774
  %v785 = vadd.f32 %v784, 1e-05
  %v786 = vrsqrt.pop %v785
  %v787 = vmul.f32 %v786, %v785
  %v788 = vmul.f32 %v787, %v786
  %v789 = vmul.f32 0.5, %v788
  %v790 = vsub.f32 1.5, %v789
  %v791 = vmul.f32 %v786, %v790
  %vm792 = vweird.f32 %v785
  %vm793 = vweird.f32 %v786
  %vm794 = vmor %vm792, %vm793
  %v795 = vsel %vm794, %v786, %v791
  %v796 = vmul.f32 %v776, %v795
  %v798 = vperm.slane %v760, 0
  %v800 = vmul.f32 %v796, %v798
  %v802 = vperm.slane %v761, 0
  %v804 = vadd.f32 %v800, %v802
  %v805 = vld [vmem:[%s4] sm:$0xf]
  %v806 = vld [vmem:[%s5] sm:$0xf]
  %v807 = vld [vmem:[%s5 + $0x4] sm:$0xf]
  %v808 = vld [vmem:[%s5 + $0x8] sm:$0xf]
  %v809 = vld [vmem:[%s5 + $0xc] sm:$0xf]
  %v810 = vld [vmem:[%s5 + $0x10] sm:$0xf]
  %v811 = vld [vmem:[%s5 + $0x14] sm:$0xf]
  %v812 = vld [vmem:[%s5 + $0x18] sm:$0xf]
  %v813 = vld [vmem:[%s5 + $0x1c] sm:$0xf]
  %v822 = vunpack.c.l.b16 %v806
  %v823 = vunpack.c.l.b16 %v807
  %v824 = vunpack.c.l.b16 %v808
  %v825 = vunpack.c.l.b16 %v809
  %v826 = vunpack.c.l.b16 %v810
  %v827 = vunpack.c.l.b16 %v811
  %v828 = vunpack.c.l.b16 %v812
  %v829 = vunpack.c.l.b16 %v813
  %v830 = vpack.c.b16 %v823, %v822
  %v831 = vpack.c.b16 %v825, %v824
  %v832 = vpack.c.b16 %v827, %v826
  %v833 = vpack.c.b16 %v829, %v828
  %vm838 = vcmask 523264
  %v840 = vsel %vm838, %v805, 0
  %842 = vmatpush.bf16.msra.mxu0 0
  %843 = vmatpush.bf16.msra.mxu0 0
  %844 = vmatpush.bf16.msra.mxu0 0
  %845 = vmatpush.bf16.msra.mxu0 0
  %846 = vmatpush.bf16.msra.mxu0 %v833
  %847 = vmatpush.bf16.msra.mxu0 %v832
  %848 = vmatpush.bf16.msra.mxu0 %v831
  %849 = vmatpush.bf16.msra.mxu0 %v830
  %850 = vmatmul.bf16.gmra.mxu0 %v840
  %v851 = vpop.f32.mrf.mxu0
  %v852 = vadd.f32 0.0, %v851
  %v853 = vpop.f32.mrf.mxu0
  %854 = vdwg.mxu0
  %v855 = vld [vmem:[%s6] sm:$0x1]
  %v856 = vld [vmem:[%s7] sm:$0x1]
  %v857 = vrot.slane %v852, 4
  %v858 = vadd.f32 %v852, %v857
  %v859 = vrot.slane %v858, 2
  %v860 = vadd.f32 %v858, %v859
  %v861 = vrot.slane %v860, 1
  %v862 = vadd.f32 %v860, %v861
  %v863 = vmul.f32 %v862, %v774
  %v864 = vsub.f32 %v852, %v863
  %v865 = vmul.f32 %v864, %v864
  %v866 = vrot.slane %v865, 4
  %v867 = vadd.f32 %v865, %v866
  %v868 = vrot.slane %v867, 2
  %v869 = vadd.f32 %v867, %v868
  %v870 = vrot.slane %v869, 1
  %v871 = vadd.f32 %v869, %v870
  %v872 = vmul.f32 %v871, %v774
  %v873 = vadd.f32 %v872, 1e-05
  %v874 = vrsqrt.pop %v873
  %v875 = vmul.f32 %v874, %v873
  %v876 = vmul.f32 %v875, %v874
  %v877 = vmul.f32 0.5, %v876
  %v878 = vsub.f32 1.5, %v877
  %v879 = vmul.f32 %v874, %v878
  %vm880 = vweird.f32 %v873
  %vm881 = vweird.f32 %v874
  %vm882 = vmor %vm880, %vm881
  %v883 = vsel %vm882, %v874, %v879
  %v884 = vmul.f32 %v864, %v883
  %v886 = vperm.slane %v855, 0
  %v888 = vmul.f32 %v884, %v886
  %v890 = vperm.slane %v856, 0
  %v892 = vadd.f32 %v888, %v890
  %v893 = vadd.f32 %v804, %v892
  %v894 = vmax.f32 %v893, 0.0
  %895 = vst [vmem:[%s8] sm:$0xff] %v894
  // Predicated region
  $region34: #{res_encoder_forward.17} parent=0 // pred_check
    _
  $region35: #{res_encoder_forward.17} parent=0 // pred_check_branch
    %897 = sbr.rel (0) target = $region37
  $region36: #{res_encoder_forward.17} parent=0 // pred_region
    _
  $region37: #{res_encoder_forward.17} parent=0 // pred_fallthru
    _
  // Predicated region
  $region38: #{res_encoder_forward.17} parent=0 // pred_check
    _
  $region39: #{res_encoder_forward.17} parent=0 // pred_check_branch
    %899 = sbr.rel (0) target = $region41
  $region40: #{res_encoder_forward.17} parent=0 // pred_region
    _
  $region41: #{res_encoder_forward.17} parent=0 // pred_fallthru
    _

// kernel: res_encoder_forward.19
$region0: #{res_encoder_forward.19}
  #allocation0 [shape = 'u32[]', space=smem, size = 0x4, offset = 0x4, fixed_abs, tag = 'smem constant byte address 0x4 - core index']
  #allocation1 [shape = 'u32[72,128]{1,0:T(1,128)}', space=vmem, size = 0x9000, scoped, tag = 'internal scratch']
  %s0 = inlined_call_operand.vmem [shape: bf16[8,1152], index: 0, kind: input, shape index: {}]
  %s1 = inlined_call_operand.vmem [shape: bf16[1152,128], index: 1, kind: input, shape index: {}]
  %s2 = inlined_call_operand.vmem [shape: f32[1,128], index: 2, kind: input, shape index: {}]
  %s3 = inlined_call_operand.vmem [shape: f32[1,128], index: 3, kind: input, shape index: {}]
  %s4 = inlined_call_operand.vmem [shape: f32[8,128], index: 4, kind: input, shape index: {}]
  %s5 = inlined_call_operand.hbm [shape: f32[8,128], index: 5, kind: output, shape index: {}]
  %s6 = sld [smem:[#allocation0]]
  $region30: #{res_encoder_forward.19} parent=0
    _
  %s8 = ssub.s32 1, %s6
  %s9 = scalar_select 0, %s8, %s6
  $region1: #{res_encoder_forward.19} parent=0
    #allocation2 [shape = 'u8[4096]{0}', space=vmem, size = 0x1000, scoped, tag = 'output window, operand 0, single buffered']
    #allocation3 [shape = 's32[1]{0}', space=sflag, size = 0x4, scoped, tag = 'scoped memory for res_encoder_forward.19']
    %10 = vsyncpa [#allocation3], 0
    // Predicated region
    $region2: #{res_encoder_forward.19} parent=1 // pred_check
      _
    $region3: #{res_encoder_forward.19} parent=1 // pred_check_branch
      %12 = sbr.rel (0) target = $region5
    $region4: #{res_encoder_forward.19} parent=1 // pred_region
      _
    $region5: #{res_encoder_forward.19} parent=1 // pred_fallthru
      _
    // Predicated region
    $region6: #{res_encoder_forward.19} parent=1 // pred_check
      _
    $region7: #{res_encoder_forward.19} parent=1 // pred_check_branch
      %14 = sbr.rel (0) target = $region9
    $region8: #{res_encoder_forward.19} parent=1 // pred_region
      _
    $region9: #{res_encoder_forward.19} parent=1 // pred_fallthru
      _
    // Predicated region
    $region10: #{res_encoder_forward.19} parent=1 // pred_check
      _
    $region11: #{res_encoder_forward.19} parent=1 // pred_check_branch
      %16 = sbr.rel (0) target = $region13
    $region12: #{res_encoder_forward.19} parent=1 // pred_region
      _
    $region13: #{res_encoder_forward.19} parent=1 // pred_fallthru
      _
    // Predicated region
    $region14: #{res_encoder_forward.19} parent=1 // pred_check
      _
    $region15: #{res_encoder_forward.19} parent=1 // pred_check_branch
      %18 = sbr.rel (0) target = $region17
    $region16: #{res_encoder_forward.19} parent=1 // pred_region
      _
    $region17: #{res_encoder_forward.19} parent=1 // pred_fallthru
      _
    // Predicated region
    $region18: #{res_encoder_forward.19} parent=1 // pred_check
      _
    $region19: #{res_encoder_forward.19} parent=1 // pred_check_branch
      %20 = sbr.rel (0) target = $region21
    $region20: #{res_encoder_forward.19} parent=1 // pred_region
      _
    $region21: #{res_encoder_forward.19} parent=1 // pred_fallthru
      _
    %v21 = vld [vmem:[%s0] sm:$0xff]
    %v22 = vld [vmem:[%s0 + $0x8] sm:$0xff]
    %v23 = vld [vmem:[%s0 + $0x10] sm:$0xff]
    %v24 = vld [vmem:[%s0 + $0x18] sm:$0xff]
    %v25 = vld [vmem:[%s0 + $0x20] sm:$0xf]
    %v26 = vld [vmem:[%s1] sm:$0xf]
    %v27 = vld [vmem:[%s1 + $0x4] sm:$0xf]
    %v28 = vld [vmem:[%s1 + $0x8] sm:$0xf]
    %v29 = vld [vmem:[%s1 + $0xc] sm:$0xf]
    %v30 = vld [vmem:[%s1 + $0x10] sm:$0xf]
    %v31 = vld [vmem:[%s1 + $0x14] sm:$0xf]
    %v32 = vld [vmem:[%s1 + $0x18] sm:$0xf]
    %v33 = vld [vmem:[%s1 + $0x1c] sm:$0xf]
    %v34 = vld [vmem:[%s1 + $0x20] sm:$0xf]
    %v35 = vld [vmem:[%s1 + $0x24] sm:$0xf]
    %v36 = vld [vmem:[%s1 + $0x28] sm:$0xf]
    %v37 = vld [vmem:[%s1 + $0x2c] sm:$0xf]
    %v38 = vld [vmem:[%s1 + $0x30] sm:$0xf]
    %v39 = vld [vmem:[%s1 + $0x34] sm:$0xf]
    %v40 = vld [vmem:[%s1 + $0x38] sm:$0xf]
    %v41 = vld [vmem:[%s1 + $0x3c] sm:$0xf]
    %v42 = vld [vmem:[%s1 + $0x40] sm:$0xf]
    %v43 = vld [vmem:[%s1 + $0x44] sm:$0xf]
    %v44 = vld [vmem:[%s1 + $0x48] sm:$0xf]
    %v45 = vld [vmem:[%s1 + $0x4c] sm:$0xf]
    %v46 = vld [vmem:[%s1 + $0x50] sm:$0xf]
    %v47 = vld [vmem:[%s1 + $0x54] sm:$0xf]
    %v48 = vld [vmem:[%s1 + $0x58] sm:$0xf]
    %v49 = vld [vmem:[%s1 + $0x5c] sm:$0xf]
    %v50 = vld [vmem:[%s1 + $0x60] sm:$0xf]
    %v51 = vld [vmem:[%s1 + $0x64] sm:$0xf]
    %v52 = vld [vmem:[%s1 + $0x68] sm:$0xf]
    %v53 = vld [vmem:[%s1 + $0x6c] sm:$0xf]
    %v54 = vld [vmem:[%s1 + $0x70] sm:$0xf]
    %v55 = vld [vmem:[%s1 + $0x74] sm:$0xf]
    %v56 = vld [vmem:[%s1 + $0x78] sm:$0xf]
    %v57 = vld [vmem:[%s1 + $0x7c] sm:$0xf]
    %v58 = vld [vmem:[%s1 + $0x80] sm:$0xf]
    %v59 = vld [vmem:[%s1 + $0x84] sm:$0xf]
    %v60 = vld [vmem:[%s1 + $0x88] sm:$0xf]
    %v61 = vld [vmem:[%s1 + $0x8c] sm:$0xf]
    %v62 = vld [vmem:[%s1 + $0x90] sm:$0xf]
    %v63 = vld [vmem:[%s1 + $0x94] sm:$0xf]
    %v64 = vld [vmem:[%s1 + $0x98] sm:$0xf]
    %v65 = vld [vmem:[%s1 + $0x9c] sm:$0xf]
    %v66 = vld [vmem:[%s1 + $0xa0] sm:$0xf]
    %v67 = vld [vmem:[%s1 + $0xa4] sm:$0xf]
    %v68 = vld [vmem:[%s1 + $0xa8] sm:$0xf]
    %v69 = vld [vmem:[%s1 + $0xac] sm:$0xf]
    %v70 = vld [vmem:[%s1 + $0xb0] sm:$0xf]
    %v71 = vld [vmem:[%s1 + $0xb4] sm:$0xf]
    %v72 = vld [vmem:[%s1 + $0xb8] sm:$0xf]
    %v73 = vld [vmem:[%s1 + $0xbc] sm:$0xf]
    %v74 = vld [vmem:[%s1 + $0xc0] sm:$0xf]
    %v75 = vld [vmem:[%s1 + $0xc4] sm:$0xf]
    %v76 = vld [vmem:[%s1 + $0xc8] sm:$0xf]
    %v77 = vld [vmem:[%s1 + $0xcc] sm:$0xf]
    %v78 = vld [vmem:[%s1 + $0xd0] sm:$0xf]
    %v79 = vld [vmem:[%s1 + $0xd4] sm:$0xf]
    %v80 = vld [vmem:[%s1 + $0xd8] sm:$0xf]
    %v81 = vld [vmem:[%s1 + $0xdc] sm:$0xf]
    %v82 = vld [vmem:[%s1 + $0xe0] sm:$0xf]
    %v83 = vld [vmem:[%s1 + $0xe4] sm:$0xf]
    %v84 = vld [vmem:[%s1 + $0xe8] sm:$0xf]
    %v85 = vld [vmem:[%s1 + $0xec] sm:$0xf]
    %v86 = vld [vmem:[%s1 + $0xf0] sm:$0xf]
    %v87 = vld [vmem:[%s1 + $0xf4] sm:$0xf]
    %v88 = vld [vmem:[%s1 + $0xf8] sm:$0xf]
    %v89 = vld [vmem:[%s1 + $0xfc] sm:$0xf]
    %v90 = vld [vmem:[%s1 + $0x100] sm:$0xf]
    %v91 = vld [vmem:[%s1 + $0x104] sm:$0xf]
    %v92 = vld [vmem:[%s1 + $0x108] sm:$0xf]
    %v93 = vld [vmem:[%s1 + $0x10c] sm:$0xf]
    %v94 = vld [vmem:[%s1 + $0x110] sm:$0xf]
    %v95 = vld [vmem:[%s1 + $0x114] sm:$0xf]
    %v96 = vld [vmem:[%s1 + $0x118] sm:$0xf]
    %v97 = vld [vmem:[%s1 + $0x11c] sm:$0xf]
    %v98 = vld [vmem:[%s1 + $0x120] sm:$0xf]
    %v99 = vld [vmem:[%s1 + $0x124] sm:$0xf]
    %v100 = vld [vmem:[%s1 + $0x128] sm:$0xf]
    %v101 = vld [vmem:[%s1 + $0x12c] sm:$0xf]
    %v102 = vld [vmem:[%s1 + $0x130] sm:$0xf]
    %v103 = vld [vmem:[%s1 + $0x134] sm:$0xf]
    %v104 = vld [vmem:[%s1 + $0x138] sm:$0xf]
    %v105 = vld [vmem:[%s1 + $0x13c] sm:$0xf]
    %v106 = vld [vmem:[%s1 + $0x140] sm:$0xf]
    %v107 = vld [vmem:[%s1 + $0x144] sm:$0xf]
    %v108 = vld [vmem:[%s1 + $0x148] sm:$0xf]
    %v109 = vld [vmem:[%s1 + $0x14c] sm:$0xf]
    %v110 = vld [vmem:[%s1 + $0x150] sm:$0xf]
    %v111 = vld [vmem:[%s1 + $0x154] sm:$0xf]
    %v112 = vld [vmem:[%s1 + $0x158] sm:$0xf]
    %v113 = vld [vmem:[%s1 + $0x15c] sm:$0xf]
    %v114 = vld [vmem:[%s1 + $0x160] sm:$0xf]
    %v115 = vld [vmem:[%s1 + $0x164] sm:$0xf]
    %v116 = vld [vmem:[%s1 + $0x168] sm:$0xf]
    %v117 = vld [vmem:[%s1 + $0x16c] sm:$0xf]
    %v118 = vld [vmem:[%s1 + $0x170] sm:$0xf]
    %v119 = vld [vmem:[%s1 + $0x174] sm:$0xf]
    %v120 = vld [vmem:[%s1 + $0x178] sm:$0xf]
    %v121 = vld [vmem:[%s1 + $0x17c] sm:$0xf]
    %v122 = vld [vmem:[%s1 + $0x180] sm:$0xf]
    %v123 = vld [vmem:[%s1 + $0x184] sm:$0xf]
    %v124 = vld [vmem:[%s1 + $0x188] sm:$0xf]
    %v125 = vld [vmem:[%s1 + $0x18c] sm:$0xf]
    %v126 = vld [vmem:[%s1 + $0x190] sm:$0xf]
    %v127 = vld [vmem:[%s1 + $0x194] sm:$0xf]
    %v128 = vld [vmem:[%s1 + $0x198] sm:$0xf]
    %v129 = vld [vmem:[%s1 + $0x19c] sm:$0xf]
    %v130 = vld [vmem:[%s1 + $0x1a0] sm:$0xf]
    %v131 = vld [vmem:[%s1 + $0x1a4] sm:$0xf]
    %v132 = vld [vmem:[%s1 + $0x1a8] sm:$0xf]
    %v133 = vld [vmem:[%s1 + $0x1ac] sm:$0xf]
    %v134 = vld [vmem:[%s1 + $0x1b0] sm:$0xf]
    %v135 = vld [vmem:[%s1 + $0x1b4] sm:$0xf]
    %v136 = vld [vmem:[%s1 + $0x1b8] sm:$0xf]
    %v137 = vld [vmem:[%s1 + $0x1bc] sm:$0xf]
    %v138 = vld [vmem:[%s1 + $0x1c0] sm:$0xf]
    %v139 = vld [vmem:[%s1 + $0x1c4] sm:$0xf]
    %v140 = vld [vmem:[%s1 + $0x1c8] sm:$0xf]
    %v141 = vld [vmem:[%s1 + $0x1cc] sm:$0xf]
    %v142 = vld [vmem:[%s1 + $0x1d0] sm:$0xf]
    %v143 = vld [vmem:[%s1 + $0x1d4] sm:$0xf]
    %v144 = vld [vmem:[%s1 + $0x1d8] sm:$0xf]
    %v145 = vld [vmem:[%s1 + $0x1dc] sm:$0xf]
    %v146 = vld [vmem:[%s1 + $0x1e0] sm:$0xf]
    %v147 = vld [vmem:[%s1 + $0x1e4] sm:$0xf]
    %v148 = vld [vmem:[%s1 + $0x1e8] sm:$0xf]
    %v149 = vld [vmem:[%s1 + $0x1ec] sm:$0xf]
    %v150 = vld [vmem:[%s1 + $0x1f0] sm:$0xf]
    %v151 = vld [vmem:[%s1 + $0x1f4] sm:$0xf]
    %v152 = vld [vmem:[%s1 + $0x1f8] sm:$0xf]
    %v153 = vld [vmem:[%s1 + $0x1fc] sm:$0xf]
    %v154 = vld [vmem:[%s1 + $0x200] sm:$0xf]
    %v155 = vld [vmem:[%s1 + $0x204] sm:$0xf]
    %v156 = vld [vmem:[%s1 + $0x208] sm:$0xf]
    %v157 = vld [vmem:[%s1 + $0x20c] sm:$0xf]
    %v158 = vld [vmem:[%s1 + $0x210] sm:$0xf]
    %v159 = vld [vmem:[%s1 + $0x214] sm:$0xf]
    %v160 = vld [vmem:[%s1 + $0x218] sm:$0xf]
    %v161 = vld [vmem:[%s1 + $0x21c] sm:$0xf]
    %v162 = vld [vmem:[%s1 + $0x220] sm:$0xf]
    %v163 = vld [vmem:[%s1 + $0x224] sm:$0xf]
    %v164 = vld [vmem:[%s1 + $0x228] sm:$0xf]
    %v165 = vld [vmem:[%s1 + $0x22c] sm:$0xf]
    %v166 = vld [vmem:[%s1 + $0x230] sm:$0xf]
    %v167 = vld [vmem:[%s1 + $0x234] sm:$0xf]
    %v168 = vld [vmem:[%s1 + $0x238] sm:$0xf]
    %v169 = vld [vmem:[%s1 + $0x23c] sm:$0xf]
    %v175 = vunpack.c.l.b16 %v21
    %v176 = vunpack.c.h.b16 %v21
    %v177 = vunpack.c.l.b16 %v22
    %v178 = vunpack.c.h.b16 %v22
    %v179 = vunpack.c.l.b16 %v23
    %v180 = vunpack.c.h.b16 %v23
    %v181 = vunpack.c.l.b16 %v24
    %v182 = vunpack.c.h.b16 %v24
    %v183 = vunpack.c.l.b16 %v25
    %v184 = vpack.c.b16 %v175, %v175
    %v185 = vpack.c.b16 %v176, %v176
    %v186 = vpack.c.b16 %v177, %v177
    %v187 = vpack.c.b16 %v178, %v178
    %v188 = vpack.c.b16 %v179, %v179
    %v189 = vpack.c.b16 %v180, %v180
    %v190 = vpack.c.b16 %v181, %v181
    %v191 = vpack.c.b16 %v182, %v182
    %v192 = vpack.c.b16 %v183, %v183
    %v346 = vunpack.c.l.b16 %v26
    %v347 = vunpack.c.l.b16 %v27
    %v348 = vunpack.c.l.b16 %v28
    %v349 = vunpack.c.l.b16 %v29
    %v350 = vunpack.c.l.b16 %v30
    %v351 = vunpack.c.l.b16 %v31
    %v352 = vunpack.c.l.b16 %v32
    %v353 = vunpack.c.l.b16 %v33
    %v354 = vunpack.c.l.b16 %v34
    %v355 = vunpack.c.l.b16 %v35
    %v356 = vunpack.c.l.b16 %v36
    %v357 = vunpack.c.l.b16 %v37
    %v358 = vunpack.c.l.b16 %v38
    %v359 = vunpack.c.l.b16 %v39
    %v360 = vunpack.c.l.b16 %v40
    %v361 = vunpack.c.l.b16 %v41
    %v362 = vunpack.c.l.b16 %v42
    %v363 = vunpack.c.l.b16 %v43
    %v364 = vunpack.c.l.b16 %v44
    %v365 = vunpack.c.l.b16 %v45
    %v366 = vunpack.c.l.b16 %v46
    %v367 = vunpack.c.l.b16 %v47
    %v368 = vunpack.c.l.b16 %v48
    %v369 = vunpack.c.l.b16 %v49
    %v370 = vunpack.c.l.b16 %v50
    %v371 = vunpack.c.l.b16 %v51
    %v372 = vunpack.c.l.b16 %v52
    %v373 = vunpack.c.l.b16 %v53
    %v374 = vunpack.c.l.b16 %v54
    %v375 = vunpack.c.l.b16 %v55
    %v376 = vunpack.c.l.b16 %v56
    %v377 = vunpack.c.l.b16 %v57
    %v378 = vunpack.c.l.b16 %v58
    %v379 = vunpack.c.l.b16 %v59
    %v380 = vunpack.c.l.b16 %v60
    %v381 = vunpack.c.l.b16 %v61
    %v382 = vunpack.c.l.b16 %v62
    %v383 = vunpack.c.l.b16 %v63
    %v384 = vunpack.c.l.b16 %v64
    %v385 = vunpack.c.l.b16 %v65
    %v386 = vunpack.c.l.b16 %v66
    %v387 = vunpack.c.l.b16 %v67
    %v388 = vunpack.c.l.b16 %v68
    %v389 = vunpack.c.l.b16 %v69
    %v390 = vunpack.c.l.b16 %v70
    %v391 = vunpack.c.l.b16 %v71
    %v392 = vunpack.c.l.b16 %v72
    %v393 = vunpack.c.l.b16 %v73
    %v394 = vunpack.c.l.b16 %v74
    %v395 = vunpack.c.l.b16 %v75
    %v396 = vunpack.c.l.b16 %v76
    %v397 = vunpack.c.l.b16 %v77
    %v398 = vunpack.c.l.b16 %v78
    %v399 = vunpack.c.l.b16 %v79
    %v400 = vunpack.c.l.b16 %v80
    %v401 = vunpack.c.l.b16 %v81
    %v402 = vunpack.c.l.b16 %v82
    %v403 = vunpack.c.l.b16 %v83
    %v404 = vunpack.c.l.b16 %v84
    %v405 = vunpack.c.l.b16 %v85
    %v406 = vunpack.c.l.b16 %v86
    %v407 = vunpack.c.l.b16 %v87
    %v408 = vunpack.c.l.b16 %v88
    %v409 = vunpack.c.l.b16 %v89
    %v410 = vunpack.c.l.b16 %v90
    %v411 = vunpack.c.l.b16 %v91
    %v412 = vunpack.c.l.b16 %v92
    %v413 = vunpack.c.l.b16 %v93
    %v414 = vunpack.c.l.b16 %v94
    %v415 = vunpack.c.l.b16 %v95
    %v416 = vunpack.c.l.b16 %v96
    %v417 = vunpack.c.l.b16 %v97
    %v418 = vunpack.c.l.b16 %v98
    %v419 = vunpack.c.l.b16 %v99
    %v420 = vunpack.c.l.b16 %v100
    %v421 = vunpack.c.l.b16 %v101
    %v422 = vunpack.c.l.b16 %v102
    %v423 = vunpack.c.l.b16 %v103
    %v424 = vunpack.c.l.b16 %v104
    %v425 = vunpack.c.l.b16 %v105
    %v426 = vunpack.c.l.b16 %v106
    %v427 = vunpack.c.l.b16 %v107
    %v428 = vunpack.c.l.b16 %v108
    %v429 = vunpack.c.l.b16 %v109
    %v430 = vunpack.c.l.b16 %v110
    %v431 = vunpack.c.l.b16 %v111
    %v432 = vunpack.c.l.b16 %v112
    %v433 = vunpack.c.l.b16 %v113
    %v434 = vunpack.c.l.b16 %v114
    %v435 = vunpack.c.l.b16 %v115
    %v436 = vunpack.c.l.b16 %v116
    %v437 = vunpack.c.l.b16 %v117
    %v438 = vunpack.c.l.b16 %v118
    %v439 = vunpack.c.l.b16 %v119
    %v440 = vunpack.c.l.b16 %v120
    %v441 = vunpack.c.l.b16 %v121
    %v442 = vunpack.c.l.b16 %v122
    %v443 = vunpack.c.l.b16 %v123
    %v444 = vunpack.c.l.b16 %v124
    %v445 = vunpack.c.l.b16 %v125
    %v446 = vunpack.c.l.b16 %v126
    %v447 = vunpack.c.l.b16 %v127
    %v448 = vunpack.c.l.b16 %v128
    %v449 = vunpack.c.l.b16 %v129
    %v450 = vunpack.c.l.b16 %v130
    %v451 = vunpack.c.l.b16 %v131
    %v452 = vunpack.c.l.b16 %v132
    %v453 = vunpack.c.l.b16 %v133
    %v454 = vunpack.c.l.b16 %v134
    %v455 = vunpack.c.l.b16 %v135
    %v456 = vunpack.c.l.b16 %v136
    %v457 = vunpack.c.l.b16 %v137
    %v458 = vunpack.c.l.b16 %v138
    %v459 = vunpack.c.l.b16 %v139
    %v460 = vunpack.c.l.b16 %v140
    %v461 = vunpack.c.l.b16 %v141
    %v462 = vunpack.c.l.b16 %v142
    %v463 = vunpack.c.l.b16 %v143
    %v464 = vunpack.c.l.b16 %v144
    %v465 = vunpack.c.l.b16 %v145
    %v466 = vunpack.c.l.b16 %v146
    %v467 = vunpack.c.l.b16 %v147
    %v468 = vunpack.c.l.b16 %v148
    %v469 = vunpack.c.l.b16 %v149
    %v470 = vunpack.c.l.b16 %v150
    %v471 = vunpack.c.l.b16 %v151
    %v472 = vunpack.c.l.b16 %v152
    %v473 = vunpack.c.l.b16 %v153
    %v474 = vunpack.c.l.b16 %v154
    %v475 = vunpack.c.l.b16 %v155
    %v476 = vunpack.c.l.b16 %v156
    %v477 = vunpack.c.l.b16 %v157
    %v478 = vunpack.c.l.b16 %v158
    %v479 = vunpack.c.l.b16 %v159
    %v480 = vunpack.c.l.b16 %v160
    %v481 = vunpack.c.l.b16 %v161
    %v482 = vunpack.c.l.b16 %v162
    %v483 = vunpack.c.l.b16 %v163
    %v484 = vunpack.c.l.b16 %v164
    %v485 = vunpack.c.l.b16 %v165
    %v486 = vunpack.c.l.b16 %v166
    %v487 = vunpack.c.l.b16 %v167
    %v488 = vunpack.c.l.b16 %v168
    %v489 = vunpack.c.l.b16 %v169
    %v490 = vpack.c.b16 %v347, %v346
    %v491 = vpack.c.b16 %v349, %v348
    %v492 = vpack.c.b16 %v351, %v350
    %v493 = vpack.c.b16 %v353, %v352
    %v494 = vpack.c.b16 %v355, %v354
    %v495 = vpack.c.b16 %v357, %v356
    %v496 = vpack.c.b16 %v359, %v358
    %v497 = vpack.c.b16 %v361, %v360
    %v498 = vpack.c.b16 %v363, %v362
    %v499 = vpack.c.b16 %v365, %v364
    %v500 = vpack.c.b16 %v367, %v366
    %v501 = vpack.c.b16 %v369, %v368
    %v502 = vpack.c.b16 %v371, %v370
    %v503 = vpack.c.b16 %v373, %v372
    %v504 = vpack.c.b16 %v375, %v374
    %v505 = vpack.c.b16 %v377, %v376
    %v506 = vpack.c.b16 %v379, %v378
    %v507 = vpack.c.b16 %v381, %v380
    %v508 = vpack.c.b16 %v383, %v382
    %v509 = vpack.c.b16 %v385, %v384
    %v510 = vpack.c.b16 %v387, %v386
    %v511 = vpack.c.b16 %v389, %v388
    %v512 = vpack.c.b16 %v391, %v390
    %v513 = vpack.c.b16 %v393, %v392
    %v514 = vpack.c.b16 %v395, %v394
    %v515 = vpack.c.b16 %v397, %v396
    %v516 = vpack.c.b16 %v399, %v398
    %v517 = vpack.c.b16 %v401, %v400
    %v518 = vpack.c.b16 %v403, %v402
    %v519 = vpack.c.b16 %v405, %v404
    %v520 = vpack.c.b16 %v407, %v406
    %v521 = vpack.c.b16 %v409, %v408
    %v522 = vpack.c.b16 %v411, %v410
    %v523 = vpack.c.b16 %v413, %v412
    %v524 = vpack.c.b16 %v415, %v414
    %v525 = vpack.c.b16 %v417, %v416
    %v526 = vpack.c.b16 %v419, %v418
    %v527 = vpack.c.b16 %v421, %v420
    %v528 = vpack.c.b16 %v423, %v422
    %v529 = vpack.c.b16 %v425, %v424
    %v530 = vpack.c.b16 %v427, %v426
    %v531 = vpack.c.b16 %v429, %v428
    %v532 = vpack.c.b16 %v431, %v430
    %v533 = vpack.c.b16 %v433, %v432
    %v534 = vpack.c.b16 %v435, %v434
    %v535 = vpack.c.b16 %v437, %v436
    %v536 = vpack.c.b16 %v439, %v438
    %v537 = vpack.c.b16 %v441, %v440
    %v538 = vpack.c.b16 %v443, %v442
    %v539 = vpack.c.b16 %v445, %v444
    %v540 = vpack.c.b16 %v447, %v446
    %v541 = vpack.c.b16 %v449, %v448
    %v542 = vpack.c.b16 %v451, %v450
    %v543 = vpack.c.b16 %v453, %v452
    %v544 = vpack.c.b16 %v455, %v454
    %v545 = vpack.c.b16 %v457, %v456
    %v546 = vpack.c.b16 %v459, %v458
    %v547 = vpack.c.b16 %v461, %v460
    %v548 = vpack.c.b16 %v463, %v462
    %v549 = vpack.c.b16 %v465, %v464
    %v550 = vpack.c.b16 %v467, %v466
    %v551 = vpack.c.b16 %v469, %v468
    %v552 = vpack.c.b16 %v471, %v470
    %v553 = vpack.c.b16 %v473, %v472
    %v554 = vpack.c.b16 %v475, %v474
    %v555 = vpack.c.b16 %v477, %v476
    %v556 = vpack.c.b16 %v479, %v478
    %v557 = vpack.c.b16 %v481, %v480
    %v558 = vpack.c.b16 %v483, %v482
    %v559 = vpack.c.b16 %v485, %v484
    %v560 = vpack.c.b16 %v487, %v486
    %v561 = vpack.c.b16 %v489, %v488
    %634 = vmatpush.bf16.msra.mxu0 %v497
    %635 = vmatpush.bf16.msra.mxu0 %v496
    %636 = vmatpush.bf16.msra.mxu0 %v495
    %637 = vmatpush.bf16.msra.mxu0 %v494
    %638 = vmatpush.bf16.msra.mxu0 %v493
    %639 = vmatpush.bf16.msra.mxu0 %v492
    %640 = vmatpush.bf16.msra.mxu0 %v491
    %641 = vmatpush.bf16.msra.mxu0 %v490
    %642 = vmatmul.bf16.gmra.mxu0 %v184
    %v643 = vpop.f32.mrf.mxu0
    %v644 = vadd.f32 0.0, %v643
    %v645 = vpop.f32.mrf.mxu0
    %646 = vdwg.mxu0
    %647 = vmatpush.bf16.msra.mxu0 %v505
    %648 = vmatpush.bf16.msra.mxu0 %v504
    %649 = vmatpush.bf16.msra.mxu0 %v503
    %650 = vmatpush.bf16.msra.mxu0 %v502
    %651 = vmatpush.bf16.msra.mxu0 %v501
    %652 = vmatpush.bf16.msra.mxu0 %v500
    %653 = vmatpush.bf16.msra.mxu0 %v499
    %654 = vmatpush.bf16.msra.mxu0 %v498
    %655 = vmatmul.bf16.gmra.mxu0 %v185
    %v656 = vpop.f32.mrf.mxu0
    %v657 = vadd.f32 %v644, %v656
    %v658 = vpop.f32.mrf.mxu0
    %659 = vdwg.mxu0
    %660 = vmatpush.bf16.msra.mxu0 %v513
    %661 = vmatpush.bf16.msra.mxu0 %v512
    %662 = vmatpush.bf16.msra.mxu0 %v511
    %663 = vmatpush.bf16.msra.mxu0 %v510
    %664 = vmatpush.bf16.msra.mxu0 %v509
    %665 = vmatpush.bf16.msra.mxu0 %v508
    %666 = vmatpush.bf16.msra.mxu0 %v507
    %667 = vmatpush.bf16.msra.mxu0 %v506
    %668 = vmatmul.bf16.gmra.mxu0 %v186
    %v669 = vpop.f32.mrf.mxu0
    %v670 = vadd.f32 %v657, %v669
    %v671 = vpop.f32.mrf.mxu0
    %672 = vdwg.mxu0
    %673 = vmatpush.bf16.msra.mxu0 %v521
    %674 = vmatpush.bf16.msra.mxu0 %v520
    %675 = vmatpush.bf16.msra.mxu0 %v519
    %676 = vmatpush.bf16.msra.mxu0 %v518
    %677 = vmatpush.bf16.msra.mxu0 %v517
    %678 = vmatpush.bf16.msra.mxu0 %v516
    %679 = vmatpush.bf16.msra.mxu0 %v515
    %680 = vmatpush.bf16.msra.mxu0 %v514
    %681 = vmatmul.bf16.gmra.mxu0 %v187
    %v682 = vpop.f32.mrf.mxu0
    %v683 = vadd.f32 %v670, %v682
    %v684 = vpop.f32.mrf.mxu0
    %685 = vdwg.mxu0
    %686 = vmatpush.bf16.msra.mxu0 %v529
    %687 = vmatpush.bf16.msra.mxu0 %v528
    %688 = vmatpush.bf16.msra.mxu0 %v527
    %689 = vmatpush.bf16.msra.mxu0 %v526
    %690 = vmatpush.bf16.msra.mxu0 %v525
    %691 = vmatpush.bf16.msra.mxu0 %v524
    %692 = vmatpush.bf16.msra.mxu0 %v523
    %693 = vmatpush.bf16.msra.mxu0 %v522
    %694 = vmatmul.bf16.gmra.mxu0 %v188
    %v695 = vpop.f32.mrf.mxu0
    %v696 = vadd.f32 %v683, %v695
    %v697 = vpop.f32.mrf.mxu0
    %698 = vdwg.mxu0
    %699 = vmatpush.bf16.msra.mxu0 %v537
    %700 = vmatpush.bf16.msra.mxu0 %v536
    %701 = vmatpush.bf16.msra.mxu0 %v535
    %702 = vmatpush.bf16.msra.mxu0 %v534
    %703 = vmatpush.bf16.msra.mxu0 %v533
    %704 = vmatpush.bf16.msra.mxu0 %v532
    %705 = vmatpush.bf16.msra.mxu0 %v531
    %706 = vmatpush.bf16.msra.mxu0 %v530
    %707 = vmatmul.bf16.gmra.mxu0 %v189
    %v708 = vpop.f32.mrf.mxu0
    %v709 = vadd.f32 %v696, %v708
    %v710 = vpop.f32.mrf.mxu0
    %711 = vdwg.mxu0
    %712 = vmatpush.bf16.msra.mxu0 %v545
    %713 = vmatpush.bf16.msra.mxu0 %v544
    %714 = vmatpush.bf16.msra.mxu0 %v543
    %715 = vmatpush.bf16.msra.mxu0 %v542
    %716 = vmatpush.bf16.msra.mxu0 %v541
    %717 = vmatpush.bf16.msra.mxu0 %v540
    %718 = vmatpush.bf16.msra.mxu0 %v539
    %719 = vmatpush.bf16.msra.mxu0 %v538
    %720 = vmatmul.bf16.gmra.mxu0 %v190
    %v721 = vpop.f32.mrf.mxu0
    %v722 = vadd.f32 %v709, %v721
    %v723 = vpop.f32.mrf.mxu0
    %724 = vdwg.mxu0
    %725 = vmatpush.bf16.msra.mxu0 %v553
    %726 = vmatpush.bf16.msra.mxu0 %v552
    %727 = vmatpush.bf16.msra.mxu0 %v551
    %728 = vmatpush.bf16.msra.mxu0 %v550
    %729 = vmatpush.bf16.msra.mxu0 %v549
    %730 = vmatpush.bf16.msra.mxu0 %v548
    %731 = vmatpush.bf16.msra.mxu0 %v547
    %732 = vmatpush.bf16.msra.mxu0 %v546
    %733 = vmatmul.bf16.gmra.mxu0 %v191
    %v734 = vpop.f32.mrf.mxu0
    %v735 = vadd.f32 %v722, %v734
    %v736 = vpop.f32.mrf.mxu0
    %737 = vdwg.mxu0
    %738 = vmatpush.bf16.msra.mxu0 %v561
    %739 = vmatpush.bf16.msra.mxu0 %v560
    %740 = vmatpush.bf16.msra.mxu0 %v559
    %741 = vmatpush.bf16.msra.mxu0 %v558
    %742 = vmatpush.bf16.msra.mxu0 %v557
    %743 = vmatpush.bf16.msra.mxu0 %v556
    %744 = vmatpush.bf16.msra.mxu0 %v555
    %745 = vmatpush.bf16.msra.mxu0 %v554
    %746 = vmatmul.bf16.gmra.mxu0 %v192
    %v747 = vpop.f32.mrf.mxu0
    %v748 = vadd.f32 %v735, %v747
    %v749 = vpop.f32.mrf.mxu0
    %750 = vdwg.mxu0
    %v751 = vld [vmem:[%s2] sm:$0x1]
    %v752 = vld [vmem:[%s3] sm:$0x1]
    %v753 = vrot.slane %v748, 4
    %v754 = vadd.f32 %v748, %v753
    %v755 = vrot.slane %v754, 2
    %v756 = vadd.f32 %v754, %v755
    %v757 = vrot.slane %v756, 1
    %v758 = vadd.f32 %v756, %v757
    %v759 = vrcp.pop 8.0
    %v760 = vmul.f32 8.0, %v759
    %v761 = vsub.f32 1.0, %v760
    %v762 = vmul.f32 %v759, %v761
    %v763 = vadd.f32 %v759, %v762
    %vm764 = vweird.f32 %v759
    %v765 = vsel %vm764, %v759, %v763
    %v766 = vmul.f32 %v758, %v765
    %v767 = vsub.f32 %v748, %v766
    %v768 = vmul.f32 %v767, %v767
    %v769 = vrot.slane %v768, 4
    %v770 = vadd.f32 %v768, %v769
    %v771 = vrot.slane %v770, 2
    %v772 = vadd.f32 %v770, %v771
    %v773 = vrot.slane %v772, 1
    %v774 = vadd.f32 %v772, %v773
    %v775 = vmul.f32 %v774, %v765
    %v776 = vadd.f32 %v775, 1e-05
    %v777 = vrsqrt.pop %v776
    %v778 = vmul.f32 %v777, %v776
    %v779 = vmul.f32 %v778, %v777
    %v780 = vmul.f32 0.5, %v779
    %v781 = vsub.f32 1.5, %v780
    %v782 = vmul.f32 %v777, %v781
    %vm783 = vweird.f32 %v776
    %vm784 = vweird.f32 %v777
    %vm785 = vmor %vm783, %vm784
    %v786 = vsel %vm785, %v777, %v782
    %v787 = vmul.f32 %v767, %v786
    %v789 = vperm.slane %v751, 0
    %v791 = vmul.f32 %v787, %v789
    %v793 = vperm.slane %v752, 0
    %v795 = vadd.f32 %v791, %v793
    %v796 = vld [vmem:[%s4] sm:$0xff]
    %v797 = vadd.f32 %v795, %v796
    %v798 = vmax.f32 %v797, 0.0
    %799 = vst [vmem:[#allocation2] sm:$0xff] %v798
    // Predicated region
    $region22: #{res_encoder_forward.19} parent=1 // pred_check
      _
    $region23: #{res_encoder_forward.19} parent=1 // pred_check_branch
      %801 = sbr.rel (0) target = $region25
    $region24: #{res_encoder_forward.19} parent=1 // pred_region
      %803 = vsyncadd [#allocation3], 0
      %s805 = sshll.u32 [#allocation2], 4
      %s806 = int_to_ptr.vmem [resolvable:$true] %s805
      %s807 = sshll.u32 %s5, 4
      %s808 = int_to_ptr.hbm [resolvable:$true] %s807
      %810 = dma.vmem_to_hbm [thread:$0]  %s806, 128, %s808, [#allocation3]
    $region25: #{res_encoder_forward.19} parent=1 // pred_fallthru
      _
    // Predicated region
    $region26: #{res_encoder_forward.19} parent=1 // pred_check
      _
    $region27: #{res_encoder_forward.19} parent=1 // pred_check_branch
      %812 = sbr.rel (0) target = $region29
    $region28: #{res_encoder_forward.19} parent=1 // pred_region
      %814 = dma.done [#allocation3], 128
    $region29: #{res_encoder_forward.19} parent=1 // pred_fallthru
      _
    %815 = vsyncpa [#allocation3], 1

</llo_original>
